<compile_context>
chip_gen: v7x
topology: tpu7x:2x2x1
jax: 0.10.0
libtpu: 0.0.40
codegen_flags: <defaults>
</compile_context>

<pallas_src>
import functools
import math

import jax
import jax.numpy as jnp
from jax.experimental import pallas as pl
from jax.experimental.pallas import tpu as pltpu

LAYER_NORM_EPS = 1e-12
LANES = 128

# row order of the packed per-layer vector block (must match prepare_params)
_VEC_ROWS = ('qkv_b', 'ao_b', 'aln_g', 'aln_b', 'fi_b', 'fo_b', 'fln_g', 'fln_b')


# ---------------------------------------------------------------------------
# small helpers
# ---------------------------------------------------------------------------
def _round_up(n, m):
    return (n + m - 1) // m * m


def _pad_cols(a, target):
    pad = target - a.shape[-1]
    return jnp.pad(a, [(0, 0)] * (a.ndim - 1) + [(0, pad)])


def _const_index_map(rank):
    return lambda l: (0,) * rank


def _layer_index_map(rank):
    return lambda l: (l,) + (0,) * (rank - 1)


@functools.lru_cache(maxsize=1)
def _physical_vmem_bytes():
    """Physical per-core VMEM of the local chip (falls back to v7x's 64 MiB)."""
    try:
        return int(pltpu.get_tpu_info().vmem_capacity_bytes)
    except Exception:
        return 64 * 1024 * 1024


@functools.lru_cache(maxsize=1)
def _bf16_gelu_default():
    """bf16 VPU/EUP exists on v6e/v7x; keep GELU in f32 on older generations."""
    try:
        kind = jax.devices()[0].device_kind.lower()
    except Exception:
        return False
    return not any(tag in kind for tag in ('v2', 'v3', 'v4', 'v5'))


# ---------------------------------------------------------------------------
# in-kernel helpers (traced inside the Pallas kernel bodies)
# ---------------------------------------------------------------------------
def _layernorm(x, g, b, eps=LAYER_NORM_EPS):
    # statistics in f32 (bf16 LN with eps=1e-12 is numerically unsafe)
    x = x.astype(jnp.float32)
    mu = jnp.mean(x, axis=-1, keepdims=True)
    var = jnp.mean(jnp.square(x - mu), axis=-1, keepdims=True)
    return (x - mu) * jax.lax.rsqrt(var + eps) * g + b


def _matmul(x, w_bf16, b_f32):
    # bf16 MXU matmul with f32 accumulation; f32 bias broadcast-add.
    y = jnp.dot(x.astype(jnp.bfloat16), w_bf16,
                preferred_element_type=jnp.float32)
    return y + b_f32


# ---------------------------------------------------------------------------
# encoder kernel (grid over layers): embeddings + BERT encoder, emits [CLS]
# ---------------------------------------------------------------------------
def deepdraft_encoder_kernel(
    # runtime inputs
    states_ref, role_ref, combo_ref,
    # input embedding linears + BertEmbeddings extras (constant across grid)
    es_w_ref, es_b_ref, er_w_ref, er_b_ref, ec_w_ref, ec_b_ref,
    pos_tok_ref, eln_g_ref, eln_b_ref,
    # per-layer encoder weights (streamed: block = one layer)
    qkv_w_ref, ao_w_ref, fi_w_ref, fo_w_ref, vec_ref,
    # output
    cls_ref,
    # scratch
    x_sc, ctx_sc,
    *, num_layers, num_heads, batch, seq_role, seq_combo, bf16_gelu):

    l = pl.program_id(0)
    B, Sr, Sc = batch, seq_role, seq_combo
    S = 1 + Sr + Sc
    H = qkv_w_ref.shape[1]
    I = fi_w_ref.shape[2]
    dh = H // num_heads

    # ---- input embeddings + BertEmbeddings (first grid step only) ----------
    @pl.when(l == 0)
    def _():
        se = _matmul(states_ref[...], es_w_ref[...], es_b_ref[...])          # (B, H)
        re = _matmul(role_ref[...].reshape(B * Sr, -1),
                     er_w_ref[...], er_b_ref[...])                           # (B*Sr, H)
        ce = _matmul(combo_ref[...].reshape(B * Sc, -1),
                     ec_w_ref[...], ec_b_ref[...])                           # (B*Sc, H)
        x3 = jnp.concatenate(
            [se[:, None, :],
             re.reshape(B, Sr, H),
             ce.reshape(B, Sc, H)], axis=1)                                  # (B, S, H)
        # position + token-type-0 embeddings pre-summed on the host; dropout
        # is identity in eval mode.
        x3 = x3 + pos_tok_ref[...][None, :, :]
        x3 = _layernorm(x3, eln_g_ref[...], eln_b_ref[...])
        x_sc[...] = x3.reshape(B * S, H)

    # ---- per-layer small vectors: one packed (8, W) block, one DMA ---------
    vecs = vec_ref[0]                                                        # (8, W) f32
    qkv_b = vecs[0:1, :3 * H]
    ao_b = vecs[1:2, :H]
    aln_g = vecs[2:3, :H]
    aln_b = vecs[3:4, :H]
    fi_b = vecs[4:5, :I]
    fo_b = vecs[5:6, :H]
    fln_g = vecs[6:7, :H]
    fln_b = vecs[7:8, :H]

    x = x_sc[...]                                                            # (B*S, H) f32

    # ---- attention ----------------------------------------------------------
    # fused Q/K/V projection: one (H, 3H) matmul; 1/sqrt(dh) folded into W_q/b_q
    qkv = _matmul(x, qkv_w_ref[0], qkv_b)                                    # (B*S, 3H)
    q = qkv[:, 0 * H:1 * H].reshape(B, S, H)
    k = qkv[:, 1 * H:2 * H].reshape(B, S, H)
    v = qkv[:, 2 * H:3 * H].reshape(B, S, H)

    # Per-head scores / softmax / PV (contraction is inherently dh-wide); each
    # head's context is stored straight into a VMEM buffer (ends its vreg live
    # range), then a single full-width (K=H) output projection follows.
    for h in range(num_heads):
        sl = slice(h * dh, (h + 1) * dh)
        s = jnp.einsum('bqd,bkd->bqk',
                       q[:, :, sl].astype(jnp.bfloat16),
                       k[:, :, sl].astype(jnp.bfloat16),
                       preferred_element_type=jnp.float32)                   # (B, S, S)
        # softmax (attention_mask=None -> full attention), f32, EUP reciprocal
        m = jnp.max(s, axis=-1, keepdims=True)
        e = jnp.exp(s - m)
        p = e * pl.reciprocal(jnp.sum(e, axis=-1, keepdims=True), approx=True)
        ctx = jnp.einsum('bqk,bkd->bqd', p.astype(jnp.bfloat16),
                         v[:, :, sl].astype(jnp.bfloat16),
                         preferred_element_type=jnp.float32)                 # (B, S, dh)
        ctx_sc[:, sl] = ctx.reshape(B * S, dh).astype(jnp.bfloat16)

    attn = jnp.dot(ctx_sc[...], ao_w_ref[0],
                   preferred_element_type=jnp.float32) + ao_b                # (B*S, H)
    x = _layernorm(x + attn, aln_g, aln_b)

    # ---- feed-forward -------------------------------------------------------
    ff = _matmul(x, fi_w_ref[0], fi_b)                                       # (B*S, I) f32
    if bf16_gelu:
        ff = ff.astype(jnp.bfloat16)     # v6e/v7x: bf16 VPU/EUP halves GELU work
    # TODO(synk): HF BERT default activation is exact (erf) GELU; tanh approx used.
    ff = jax.nn.gelu(ff, approximate=True)
    ff = _matmul(ff, fo_w_ref[0], fo_b)
    x = _layernorm(x + ff, fln_g, fln_b)
    x_sc[...] = x

    # ---- emit the [CLS] row on the last step --------------------------------
    @pl.when(l == num_layers - 1)
    def _():
        # LayerNorm over the last dim commutes with taking token 0, so only the
        # [CLS] row leaves the kernel; final LN + heads run in a second call.
        cls_ref[...] = x.reshape(B, S, H)[:, 0, :]


# ---------------------------------------------------------------------------
# heads kernel (no grid): final LayerNorm + policy / value MLP heads
# ---------------------------------------------------------------------------
def deepdraft_heads_kernel(cls_ref, ln_g_ref, ln_b_ref,
                           p1_w_ref, p1_b_ref, p2_w_ref, p2_b_ref,
                           v1_w_ref, v1_b_ref, v2_w_ref, v2_b_ref,
                           v3_w_ref, v3_b_ref,
                           policy_ref, value_ref):
    cls = _layernorm(cls_ref[...], ln_g_ref[...], ln_b_ref[...])             # (B, H)

    ph = jnp.tanh(_matmul(cls, p1_w_ref[...], p1_b_ref[...]))
    policy_ref[...] = _matmul(ph, p2_w_ref[...], p2_b_ref[...])              # (B, Cpad)

    vh = jnp.maximum(_matmul(cls, v1_w_ref[...], v1_b_ref[...]), 0.0)
    vh = jnp.maximum(_matmul(vh, v2_w_ref[...], v2_b_ref[...]), 0.0)
    value_ref[...] = _matmul(vh, v3_w_ref[...], v3_b_ref[...])               # (B, Vpad)


# ---------------------------------------------------------------------------
# host-side parameter init (deterministic, PyTorch weight conventions)
# ---------------------------------------------------------------------------
def init_params(key, *, state_dim, role_r_dim, combo_r_dim, num_champs,
                hidden_size, num_layers, intermediate_size, max_seq_len):
    H, I, L = hidden_size, intermediate_size, num_layers
    keys = iter(jax.random.split(key, 64))

    def w(shape, scale=0.02):
        return (scale * jax.random.normal(next(keys), shape)).astype(jnp.float32)

    zeros = lambda s: jnp.zeros(s, jnp.float32)
    ones = lambda s: jnp.ones(s, jnp.float32)

    return dict(
        embed_state_w=w((H, state_dim)), embed_state_b=zeros((H,)),
        embed_role_w=w((H, role_r_dim)), embed_role_b=zeros((H,)),
        embed_combo_w=w((H, combo_r_dim)), embed_combo_b=zeros((H,)),
        pos_emb=w((max_seq_len, H)), tok_emb=w((2, H)),
        emb_ln_g=ones((H,)), emb_ln_b=zeros((H,)),
        q_w=w((L, H, H)), q_b=zeros((L, H)),
        k_w=w((L, H, H)), k_b=zeros((L, H)),
        v_w=w((L, H, H)), v_b=zeros((L, H)),
        ao_w=w((L, H, H)), ao_b=zeros((L, H)),
        aln_g=ones((L, H)), aln_b=zeros((L, H)),
        fi_w=w((L, I, H)), fi_b=zeros((L, I)),
        fo_w=w((L, H, I)), fo_b=zeros((L, H)),
        fln_g=ones((L, H)), fln_b=zeros((L, H)),
        final_ln_g=ones((H,)), final_ln_b=zeros((H,)),
        p1_w=w((H, H)), p1_b=zeros((H,)),
        p2_w=w((num_champs, H)), p2_b=zeros((num_champs,)),
        v1_w=w((H, H)), v1_b=zeros((H,)),
        v2_w=w((256, H)), v2_b=zeros((256,)),
        v3_w=w((1, 256)), v3_b=zeros((1,)),
    )


# ---------------------------------------------------------------------------
# one-time host-side weight preparation
# ---------------------------------------------------------------------------
def prepare_params(params, *, seq_len, num_heads):
    """Transpose to (in,out), fuse QKV (scale folded into Q), pack all per-layer
    vectors into one (L,8,W) block, cast matmul weights to bf16, pad head outputs
    to lane width, and pre-sum position + token-type-0 embeddings."""
    f32, bf16 = jnp.float32, jnp.bfloat16
    t2 = lambda a: jnp.asarray(a, f32).T                      # (out,in)   -> (in,out)
    t3 = lambda a: jnp.transpose(jnp.asarray(a, f32), (0, 2, 1))  # (L,out,in) -> (L,in,out)
    row = lambda a: jnp.asarray(a, f32)[None, :]              # (out,)     -> (1,out)

    L, _, H = params['q_w'].shape
    I = params['fi_w'].shape[1]
    dh = H // num_heads
    scale = 1.0 / math.sqrt(dh)

    num_champs = params['p2_w'].shape[0]
    c_pad = _round_up(num_champs, LANES)
    v_pad = LANES

    # fused QKV weight (in,out) with 1/sqrt(dh) folded into the Q third
    qkv_w = jnp.concatenate(
        [t3(params['q_w']) * scale, t3(params['k_w']), t3(params['v_w'])],
        axis=-1).astype(bf16)                                                # (L, H, 3H)
    qkv_b = jnp.concatenate(
        [params['q_b'] * scale, params['k_b'], params['v_b']], axis=-1)      # (L, 3H)

    # pack per-layer vectors: rows follow _VEC_ROWS, padded to common width W
    W = max(3 * H, I)

    def vec_row(a):
        a = jnp.asarray(a, f32)
        return jnp.pad(a, ((0, 0), (0, W - a.shape[-1])))[:, None, :]        # (L,1,W)

    layer_vecs = jnp.concatenate(
        [vec_row(qkv_b), vec_row(params['ao_b']),
         vec_row(params['aln_g']), vec_row(params['aln_b']),
         vec_row(params['fi_b']), vec_row(params['fo_b']),
         vec_row(params['fln_g']), vec_row(params['fln_b'])], axis=1)        # (L,8,W)

    prep = dict(
        es_w=t2(params['embed_state_w']).astype(bf16), es_b=row(params['embed_state_b']),
        er_w=t2(params['embed_role_w']).astype(bf16), er_b=row(params['embed_role_b']),
        ec_w=t2(params['embed_combo_w']).astype(bf16), ec_b=row(params['embed_combo_b']),
        pos_tok=(params['pos_emb'][:seq_len] + params['tok_emb'][0:1]).astype(f32),
        eln_g=row(params['emb_ln_g']), eln_b=row(params['emb_ln_b']),
        qkv_w=qkv_w,
        ao_w=t3(params['ao_w']).astype(bf16),
        fi_w=t3(params['fi_w']).astype(bf16),
        fo_w=t3(params['fo_w']).astype(bf16),
        layer_vecs=layer_vecs,
        ln_g=row(params['final_ln_g']), ln_b=row(params['final_ln_b']),
        p1_w=t2(params['p1_w']).astype(bf16), p1_b=row(params['p1_b']),
        p2_w=_pad_cols(t2(params['p2_w']), c_pad).astype(bf16),
        p2_b=_pad_cols(row(params['p2_b']), c_pad),
        v1_w=t2(params['v1_w']).astype(bf16), v1_b=row(params['v1_b']),
        v2_w=t2(params['v2_w']).astype(bf16), v2_b=row(params['v2_b']),
        v3_w=_pad_cols(t2(params['v3_w']), v_pad).astype(bf16),
        v3_b=_pad_cols(row(params['v3_b']), v_pad),
    )
    return prep, num_champs


# ---------------------------------------------------------------------------
# jitted wrapper
# ---------------------------------------------------------------------------
_PER_LAYER = frozenset({'qkv_w', 'ao_w', 'fi_w', 'fo_w', 'layer_vecs'})
_ENC_ARG_ORDER = ('states', 'role_rs', 'combo_rs',
                  'es_w', 'es_b', 'er_w', 'er_b', 'ec_w', 'ec_b',
                  'pos_tok', 'eln_g', 'eln_b',
                  'qkv_w', 'ao_w', 'fi_w', 'fo_w', 'layer_vecs')
_HEAD_ARG_ORDER = ('ln_g', 'ln_b', 'p1_w', 'p1_b', 'p2_w', 'p2_b',
                   'v1_w', 'v1_b', 'v2_w', 'v2_b', 'v3_w', 'v3_b')


@functools.partial(jax.jit, static_argnames=('num_heads', 'num_champs'))
def deepdraft_forward(prep, states, role_rs, combo_rs, *, num_heads, num_champs):
    B = states.shape[0]
    Sr, Sc = role_rs.shape[1], combo_rs.shape[1]
    S = 1 + Sr + Sc
    L, H = prep['qkv_w'].shape[0], prep['qkv_w'].shape[1]
    c_pad = prep['p2_w'].shape[1]
    v_pad = prep['v3_w'].shape[1]
    assert prep['pos_tok'].shape[0] == S, "prepare_params seq_len mismatch"
    assert H % num_heads == 0

    operands = dict(prep)
    operands['states'] = states.astype(jnp.float32)
    operands['role_rs'] = role_rs.astype(jnp.float32)
    operands['combo_rs'] = combo_rs.astype(jnp.float32)

    enc_args, in_specs = [], []
    const_bytes = 0
    layer_block_bytes = 0
    for name in _ENC_ARG_ORDER:
        a = operands[name]
        enc_args.append(a)
        nbytes = int(a.size) * a.dtype.itemsize
        if name in _PER_LAYER:
            in_specs.append(pl.BlockSpec((1,) + a.shape[1:], _layer_index_map(a.ndim)))
            layer_block_bytes += nbytes // L
        else:
            in_specs.append(pl.BlockSpec(a.shape, _const_index_map(a.ndim)))
            const_bytes += nbytes

    # real VMEM working set: resident constants + double-buffered per-layer
    # blocks + residual/context scratch + (double-buffered) output block.
    scratch_bytes = B * S * H * 4 + B * S * H * 2
    out_bytes = B * H * 4
    working_set = const_bytes + 2 * layer_block_bytes + 2 * out_bytes + scratch_bytes
    phys = _physical_vmem_bytes()
    cap = int(phys * 0.85)          # headroom for Mosaic internal scratch (esp. v7x)
    vmem_limit = int(min(max(2 * working_set, 16 * 1024 * 1024), cap))

    kernel = functools.partial(
        deepdraft_encoder_kernel, num_layers=L, num_heads=num_heads,
        batch=B, seq_role=Sr, seq_combo=Sc, bf16_gelu=_bf16_gelu_default())

    cls = pl.pallas_call(
        kernel,
        out_shape=jax.ShapeDtypeStruct((B, H), jnp.float32),
        grid_spec=pltpu.PrefetchScalarGridSpec(
            num_scalar_prefetch=0,
            grid=(L,),
            in_specs=in_specs,
            out_specs=pl.BlockSpec((B, H), _const_index_map(2)),
            scratch_shapes=[pltpu.VMEM((B * S, H), jnp.float32),    # residual stream
                            pltpu.VMEM((B * S, H), jnp.bfloat16)]),  # attn context buffer
        compiler_params=pltpu.CompilerParams(
            dimension_semantics=("arbitrary",),
            vmem_limit_bytes=vmem_limit),
    )(*enc_args)

    head_args = [operands[name] for name in _HEAD_ARG_ORDER]
    policy_pad, value_pad = pl.pallas_call(
        deepdraft_heads_kernel,
        out_shape=(jax.ShapeDtypeStruct((B, c_pad), jnp.float32),
                   jax.ShapeDtypeStruct((B, v_pad), jnp.float32)),
    )(cls, *head_args)

    return policy_pad[:, :num_champs], value_pad[:, :1]


# ---------------------------------------------------------------------------
if __name__ == "__main__":
    B = 2
    STATE_DIM, ROLE_DIM, COMBO_DIM = 16, 8, 12
    S_ROLE, S_COMBO = 5, 3
    HIDDEN, LAYERS, HEADS, INTER = 32, 2, 4, 64
    NUM_CHAMPS = 10

    key = jax.random.PRNGKey(0)
    kp, k1, k2, k3 = jax.random.split(key, 4)

    params = init_params(
        kp, state_dim=STATE_DIM, role_r_dim=ROLE_DIM, combo_r_dim=COMBO_DIM,
        num_champs=NUM_CHAMPS, hidden_size=HIDDEN, num_layers=LAYERS,
        intermediate_size=INTER, max_seq_len=16)

    S_TOTAL = 1 + S_ROLE + S_COMBO
    prep, num_champs = prepare_params(params, seq_len=S_TOTAL, num_heads=HEADS)

    states = jax.random.normal(k1, (B, STATE_DIM), jnp.float32)
    role_rs = jax.random.normal(k2, (B, S_ROLE, ROLE_DIM), jnp.float32)
    combo_rs = jax.random.normal(k3, (B, S_COMBO, COMBO_DIM), jnp.float32)

    policy_logits, values = deepdraft_forward(
        prep, states, role_rs, combo_rs, num_heads=HEADS, num_champs=num_champs)
    jax.block_until_ready((policy_logits, values))

    assert policy_logits.shape == (B, NUM_CHAMPS), policy_logits.shape
    assert values.shape == (B, 1), values.shape
    assert bool(jnp.all(jnp.isfinite(policy_logits))) and bool(jnp.all(jnp.isfinite(values)))
    print("KERNEL_OK")
</pallas_src>

<mosaic_0001>
module attributes {stable_mosaic.version = 11 : i64} {
  func.func @deepdraft_encoder_kernel(%arg0: i32, %arg1: memref<2x16xf32, #tpu.memory_space<vmem>>, %arg2: memref<2x5x8xf32, #tpu.memory_space<vmem>>, %arg3: memref<2x3x12xf32, #tpu.memory_space<vmem>>, %arg4: memref<16x32xbf16, #tpu.memory_space<vmem>>, %arg5: memref<1x32xf32, #tpu.memory_space<vmem>>, %arg6: memref<8x32xbf16, #tpu.memory_space<vmem>>, %arg7: memref<1x32xf32, #tpu.memory_space<vmem>>, %arg8: memref<12x32xbf16, #tpu.memory_space<vmem>>, %arg9: memref<1x32xf32, #tpu.memory_space<vmem>>, %arg10: memref<9x32xf32, #tpu.memory_space<vmem>>, %arg11: memref<1x32xf32, #tpu.memory_space<vmem>>, %arg12: memref<1x32xf32, #tpu.memory_space<vmem>>, %arg13: memref<1x32x96xbf16, #tpu.memory_space<vmem>>, %arg14: memref<1x32x32xbf16, #tpu.memory_space<vmem>>, %arg15: memref<1x32x64xbf16, #tpu.memory_space<vmem>>, %arg16: memref<1x64x32xbf16, #tpu.memory_space<vmem>>, %arg17: memref<1x8x96xf32, #tpu.memory_space<vmem>>, %arg18: memref<2x32xf32, #tpu.memory_space<vmem>>, %arg19: memref<18x32xf32, #tpu.memory_space<vmem>>, %arg20: memref<18x32xbf16, #tpu.memory_space<vmem>>) attributes {dimension_semantics = [#tpu.dimension_semantics<arbitrary>], iteration_bounds = array<i64: 2>, scalar_prefetch = 0 : i64, scratch_operands = 2 : i64, tpu.core_type = #tpu.core_type<tc>, window_params = [{pipeline_mode = #tpu.pipeline_mode<synchronous>, transform_indices = @transform_0, window_bounds = array<i64: 2, 16>}, {pipeline_mode = #tpu.pipeline_mode<synchronous>, transform_indices = @transform_1, window_bounds = array<i64: 2, 5, 8>}, {pipeline_mode = #tpu.pipeline_mode<synchronous>, transform_indices = @transform_2, window_bounds = array<i64: 2, 3, 12>}, {pipeline_mode = #tpu.pipeline_mode<synchronous>, transform_indices = @transform_3, window_bounds = array<i64: 16, 32>}, {pipeline_mode = #tpu.pipeline_mode<synchronous>, transform_indices = @transform_4, window_bounds = array<i64: 1, 32>}, {pipeline_mode = #tpu.pipeline_mode<synchronous>, transform_indices = @transform_5, window_bounds = array<i64: 8, 32>}, {pipeline_mode = #tpu.pipeline_mode<synchronous>, transform_indices = @transform_6, window_bounds = array<i64: 1, 32>}, {pipeline_mode = #tpu.pipeline_mode<synchronous>, transform_indices = @transform_7, window_bounds = array<i64: 12, 32>}, {pipeline_mode = #tpu.pipeline_mode<synchronous>, transform_indices = @transform_8, window_bounds = array<i64: 1, 32>}, {pipeline_mode = #tpu.pipeline_mode<synchronous>, transform_indices = @transform_9, window_bounds = array<i64: 9, 32>}, {pipeline_mode = #tpu.pipeline_mode<synchronous>, transform_indices = @transform_10, window_bounds = array<i64: 1, 32>}, {pipeline_mode = #tpu.pipeline_mode<synchronous>, transform_indices = @transform_11, window_bounds = array<i64: 1, 32>}, {transform_indices = @transform_12, window_bounds = array<i64: 1, 32, 96>}, {transform_indices = @transform_13, window_bounds = array<i64: 1, 32, 32>}, {transform_indices = @transform_14, window_bounds = array<i64: 1, 32, 64>}, {transform_indices = @transform_15, window_bounds = array<i64: 1, 64, 32>}, {transform_indices = @transform_16, window_bounds = array<i64: 1, 8, 96>}, {pipeline_mode = #tpu.pipeline_mode<synchronous>, transform_indices = @transform_17, window_bounds = array<i64: 2, 32>}]} {
    %c0_i32 = arith.constant 0 : i32
    %0 = arith.cmpi eq, %arg0, %c0_i32 : i32
    %1 = arith.extui %0 : i1 to i32
    %c0_i32_0 = arith.constant 0 : i32
    %2 = arith.cmpi ne, %1, %c0_i32_0 : i32
    scf.if %2 {
      %c0_60 = arith.constant 0 : index
      %c0_61 = arith.constant 0 : index
      %195 = vector.load %arg1[%c0_60, %c0_61] : memref<2x16xf32, #tpu.memory_space<vmem>>, vector<2x16xf32>
      %c0_62 = arith.constant 0 : index
      %c0_63 = arith.constant 0 : index
      %196 = vector.load %arg4[%c0_62, %c0_63] : memref<16x32xbf16, #tpu.memory_space<vmem>>, vector<16x32xbf16>
      %c0_64 = arith.constant 0 : index
      %c0_65 = arith.constant 0 : index
      %197 = vector.load %arg5[%c0_64, %c0_65] : memref<1x32xf32, #tpu.memory_space<vmem>>, vector<1x32xf32>
      %198 = arith.truncf %195 : vector<2x16xf32> to vector<2x16xbf16>
      %cst_66 = arith.constant dense<0.000000e+00> : vector<2x32xf32>
      %199 = tpu.matmul %198, %196, %cst_66 {dimension_numbers = #tpu.dot_dimension_numbers<[1], [0], [0], [1], [0, 0, 1, 1], [], []>} : vector<2x16xbf16>, vector<16x32xbf16>, vector<2x32xf32> -> vector<2x32xf32>
      %200 = vector.broadcast %197 : vector<1x32xf32> to vector<2x32xf32>
      %201 = arith.addf %199, %200 : vector<2x32xf32>
      %c0_67 = arith.constant 0 : index
      %c0_68 = arith.constant 0 : index
      %c0_69 = arith.constant 0 : index
      %202 = vector.load %arg2[%c0_67, %c0_68, %c0_69] : memref<2x5x8xf32, #tpu.memory_space<vmem>>, vector<2x5x8xf32>
      %203 = vector.shape_cast %202 : vector<2x5x8xf32> to vector<10x8xf32>
      %c0_70 = arith.constant 0 : index
      %c0_71 = arith.constant 0 : index
      %204 = vector.load %arg6[%c0_70, %c0_71] : memref<8x32xbf16, #tpu.memory_space<vmem>>, vector<8x32xbf16>
      %c0_72 = arith.constant 0 : index
      %c0_73 = arith.constant 0 : index
      %205 = vector.load %arg7[%c0_72, %c0_73] : memref<1x32xf32, #tpu.memory_space<vmem>>, vector<1x32xf32>
      %206 = arith.truncf %203 : vector<10x8xf32> to vector<10x8xbf16>
      %cst_74 = arith.constant dense<0.000000e+00> : vector<10x32xf32>
      %207 = tpu.matmul %206, %204, %cst_74 {dimension_numbers = #tpu.dot_dimension_numbers<[1], [0], [0], [1], [0, 0, 1, 1], [], []>} : vector<10x8xbf16>, vector<8x32xbf16>, vector<10x32xf32> -> vector<10x32xf32>
      %208 = vector.broadcast %205 : vector<1x32xf32> to vector<10x32xf32>
      %209 = arith.addf %207, %208 : vector<10x32xf32>
      %c0_75 = arith.constant 0 : index
      %c0_76 = arith.constant 0 : index
      %c0_77 = arith.constant 0 : index
      %210 = vector.load %arg3[%c0_75, %c0_76, %c0_77] : memref<2x3x12xf32, #tpu.memory_space<vmem>>, vector<2x3x12xf32>
      %211 = vector.shape_cast %210 : vector<2x3x12xf32> to vector<6x12xf32>
      %c0_78 = arith.constant 0 : index
      %c0_79 = arith.constant 0 : index
      %212 = vector.load %arg8[%c0_78, %c0_79] : memref<12x32xbf16, #tpu.memory_space<vmem>>, vector<12x32xbf16>
      %c0_80 = arith.constant 0 : index
      %c0_81 = arith.constant 0 : index
      %213 = vector.load %arg9[%c0_80, %c0_81] : memref<1x32xf32, #tpu.memory_space<vmem>>, vector<1x32xf32>
      %214 = arith.truncf %211 : vector<6x12xf32> to vector<6x12xbf16>
      %cst_82 = arith.constant dense<0.000000e+00> : vector<6x32xf32>
      %215 = tpu.matmul %214, %212, %cst_82 {dimension_numbers = #tpu.dot_dimension_numbers<[1], [0], [0], [1], [0, 0, 1, 1], [], []>} : vector<6x12xbf16>, vector<12x32xbf16>, vector<6x32xf32> -> vector<6x32xf32>
      %216 = vector.broadcast %213 : vector<1x32xf32> to vector<6x32xf32>
      %217 = arith.addf %215, %216 : vector<6x32xf32>
      %218 = vector.shape_cast %201 : vector<2x32xf32> to vector<2x1x32xf32>
      %219 = vector.shape_cast %209 : vector<10x32xf32> to vector<2x5x32xf32>
      %220 = vector.shape_cast %217 : vector<6x32xf32> to vector<2x3x32xf32>
      %221 = tpu.concatenate %218, %219, %220 in 1 : vector<2x1x32xf32>, vector<2x5x32xf32>, vector<2x3x32xf32> -> vector<2x9x32xf32>
      %c0_83 = arith.constant 0 : index
      %c0_84 = arith.constant 0 : index
      %222 = vector.load %arg10[%c0_83, %c0_84] : memref<9x32xf32, #tpu.memory_space<vmem>>, vector<9x32xf32>
      %223 = vector.shape_cast %222 : vector<9x32xf32> to vector<1x9x32xf32>
      %224 = vector.broadcast %223 : vector<1x9x32xf32> to vector<2x9x32xf32>
      %225 = arith.addf %221, %224 : vector<2x9x32xf32>
      %c0_85 = arith.constant 0 : index
      %c0_86 = arith.constant 0 : index
      %226 = vector.load %arg11[%c0_85, %c0_86] : memref<1x32xf32, #tpu.memory_space<vmem>>, vector<1x32xf32>
      %c0_87 = arith.constant 0 : index
      %c0_88 = arith.constant 0 : index
      %227 = vector.load %arg12[%c0_87, %c0_88] : memref<1x32xf32, #tpu.memory_space<vmem>>, vector<1x32xf32>
      %cst_89 = arith.constant dense<0.000000e+00> : vector<2x9xf32>
      %228 = vector.multi_reduction <add>, %225, %cst_89 [2] : vector<2x9x32xf32> to vector<2x9xf32>
      %229 = vector.shape_cast %228 : vector<2x9xf32> to vector<2x9x1xf32>
      %cst_90 = arith.constant 3.200000e+01 : f32
      %230 = vector.broadcast %cst_90 : f32 to vector<2x9x1xf32>
      %231 = arith.divf %229, %230 : vector<2x9x1xf32>
      %232 = vector.broadcast %231 : vector<2x9x1xf32> to vector<2x9x32xf32>
      %233 = arith.subf %225, %232 : vector<2x9x32xf32>
      %234 = arith.mulf %233, %233 : vector<2x9x32xf32>
      %cst_91 = arith.constant dense<0.000000e+00> : vector<2x9xf32>
      %235 = vector.multi_reduction <add>, %234, %cst_91 [2] : vector<2x9x32xf32> to vector<2x9xf32>
      %236 = vector.shape_cast %235 : vector<2x9xf32> to vector<2x9x1xf32>
      %cst_92 = arith.constant 3.200000e+01 : f32
      %237 = vector.broadcast %cst_92 : f32 to vector<2x9x1xf32>
      %238 = arith.divf %236, %237 : vector<2x9x1xf32>
      %239 = vector.broadcast %231 : vector<2x9x1xf32> to vector<2x9x32xf32>
      %240 = arith.subf %225, %239 : vector<2x9x32xf32>
      %cst_93 = arith.constant 9.99999996E-13 : f32
      %241 = vector.broadcast %cst_93 : f32 to vector<2x9x1xf32>
      %242 = arith.addf %238, %241 : vector<2x9x1xf32>
      %243 = math.rsqrt %242 : vector<2x9x1xf32>
      %244 = vector.broadcast %243 : vector<2x9x1xf32> to vector<2x9x32xf32>
      %245 = arith.mulf %240, %244 : vector<2x9x32xf32>
      %246 = vector.shape_cast %226 : vector<1x32xf32> to vector<1x1x32xf32>
      %247 = vector.broadcast %246 : vector<1x1x32xf32> to vector<2x9x32xf32>
      %248 = arith.mulf %245, %247 : vector<2x9x32xf32>
      %249 = vector.shape_cast %227 : vector<1x32xf32> to vector<1x1x32xf32>
      %250 = vector.broadcast %249 : vector<1x1x32xf32> to vector<2x9x32xf32>
      %251 = arith.addf %248, %250 : vector<2x9x32xf32>
      %252 = vector.shape_cast %251 : vector<2x9x32xf32> to vector<18x32xf32>
      %c0_94 = arith.constant 0 : index
      %c0_95 = arith.constant 0 : index
      %253 = vector.load %arg19[%c0_94, %c0_95] : memref<18x32xf32, #tpu.memory_space<vmem>>, vector<18x32xf32>
      tpu.vector_store %arg19[%c0_94, %c0_95], %252 {strides = array<i32>} : memref<18x32xf32, #tpu.memory_space<vmem>>, vector<18x32xf32>,
    } else {
    }
    %c0 = arith.constant 0 : index
    %c0_1 = arith.constant 0 : index
    %c0_2 = arith.constant 0 : index
    %3 = vector.load %arg17[%c0, %c0_1, %c0_2] : memref<1x8x96xf32, #tpu.memory_space<vmem>>, vector<1x8x96xf32>
    %4 = vector.shape_cast %3 : vector<1x8x96xf32> to vector<8x96xf32>
    %5 = vector.extract_strided_slice %4 {offsets = [0, 0], sizes = [1, 96], strides = [1, 1]} : vector<8x96xf32> to vector<1x96xf32>
    %6 = vector.extract_strided_slice %4 {offsets = [1, 0], sizes = [1, 32], strides = [1, 1]} : vector<8x96xf32> to vector<1x32xf32>
    %7 = vector.extract_strided_slice %4 {offsets = [2, 0], sizes = [1, 32], strides = [1, 1]} : vector<8x96xf32> to vector<1x32xf32>
    %8 = vector.extract_strided_slice %4 {offsets = [3, 0], sizes = [1, 32], strides = [1, 1]} : vector<8x96xf32> to vector<1x32xf32>
    %9 = vector.extract_strided_slice %4 {offsets = [4, 0], sizes = [1, 64], strides = [1, 1]} : vector<8x96xf32> to vector<1x64xf32>
    %10 = vector.extract_strided_slice %4 {offsets = [5, 0], sizes = [1, 32], strides = [1, 1]} : vector<8x96xf32> to vector<1x32xf32>
    %11 = vector.extract_strided_slice %4 {offsets = [6, 0], sizes = [1, 32], strides = [1, 1]} : vector<8x96xf32> to vector<1x32xf32>
    %12 = vector.extract_strided_slice %4 {offsets = [7, 0], sizes = [1, 32], strides = [1, 1]} : vector<8x96xf32> to vector<1x32xf32>
    %c0_3 = arith.constant 0 : index
    %c0_4 = arith.constant 0 : index
    %13 = vector.load %arg19[%c0_3, %c0_4] : memref<18x32xf32, #tpu.memory_space<vmem>>, vector<18x32xf32>
    %c0_5 = arith.constant 0 : index
    %c0_6 = arith.constant 0 : index
    %c0_7 = arith.constant 0 : index
    %14 = vector.load %arg13[%c0_5, %c0_6, %c0_7] : memref<1x32x96xbf16, #tpu.memory_space<vmem>>, vector<1x32x96xbf16>
    %15 = vector.shape_cast %14 : vector<1x32x96xbf16> to vector<32x96xbf16>
    %16 = arith.truncf %13 : vector<18x32xf32> to vector<18x32xbf16>
    %cst = arith.constant dense<0.000000e+00> : vector<18x96xf32>
    %17 = tpu.matmul %16, %15, %cst {dimension_numbers = #tpu.dot_dimension_numbers<[1], [0], [0], [1], [0, 0, 1, 1], [], []>} : vector<18x32xbf16>, vector<32x96xbf16>, vector<18x96xf32> -> vector<18x96xf32>
    %18 = vector.broadcast %5 : vector<1x96xf32> to vector<18x96xf32>
    %19 = arith.addf %17, %18 : vector<18x96xf32>
    %20 = vector.extract_strided_slice %19 {offsets = [0, 0], sizes = [18, 32], strides = [1, 1]} : vector<18x96xf32> to vector<18x32xf32>
    %21 = vector.shape_cast %20 : vector<18x32xf32> to vector<2x9x32xf32>
    %22 = vector.extract_strided_slice %19 {offsets = [0, 32], sizes = [18, 32], strides = [1, 1]} : vector<18x96xf32> to vector<18x32xf32>
    %23 = vector.shape_cast %22 : vector<18x32xf32> to vector<2x9x32xf32>
    %24 = vector.extract_strided_slice %19 {offsets = [0, 64], sizes = [18, 32], strides = [1, 1]} : vector<18x96xf32> to vector<18x32xf32>
    %25 = vector.shape_cast %24 : vector<18x32xf32> to vector<2x9x32xf32>
    %26 = vector.extract_strided_slice %21 {offsets = [0, 0, 0], sizes = [2, 9, 8], strides = [1, 1, 1]} : vector<2x9x32xf32> to vector<2x9x8xf32>
    %27 = arith.truncf %26 : vector<2x9x8xf32> to vector<2x9x8xbf16>
    %28 = vector.extract_strided_slice %23 {offsets = [0, 0, 0], sizes = [2, 9, 8], strides = [1, 1, 1]} : vector<2x9x32xf32> to vector<2x9x8xf32>
    %29 = arith.truncf %28 : vector<2x9x8xf32> to vector<2x9x8xbf16>
    "tpu.trace_start"() <{level = 10 : i32, message = "bqd,bkd->bqk"}> : () -> ()
    %cst_8 = arith.constant dense<0.000000e+00> : vector<2x9x9xf32>
    %30 = tpu.matmul %27, %29, %cst_8 {dimension_numbers = #tpu.dot_dimension_numbers<[2], [2], [1], [1], [0, 0, 0, 1, 1, 1], [0], [0]>} : vector<2x9x8xbf16>, vector<2x9x8xbf16>, vector<2x9x9xf32> -> vector<2x9x9xf32>
    "tpu.trace_stop"() : () -> ()
    %cst_9 = arith.constant dense<0xFF800000> : vector<2x9xf32>
    %31 = vector.multi_reduction <maximumf>, %30, %cst_9 [2] : vector<2x9x9xf32> to vector<2x9xf32>
    %32 = vector.shape_cast %31 : vector<2x9xf32> to vector<2x9x1xf32>
    %33 = vector.broadcast %32 : vector<2x9x1xf32> to vector<2x9x9xf32>
    %34 = arith.subf %30, %33 : vector<2x9x9xf32>
    %35 = math.exp %34 : vector<2x9x9xf32>
    %cst_10 = arith.constant dense<0.000000e+00> : vector<2x9xf32>
    %36 = vector.multi_reduction <add>, %35, %cst_10 [2] : vector<2x9x9xf32> to vector<2x9xf32>
    %37 = vector.shape_cast %36 : vector<2x9xf32> to vector<2x9x1xf32>
    %38 = tpu.reciprocal %37 {approx = true} : vector<2x9x1xf32> -> vector<2x9x1xf32>
    %39 = vector.broadcast %38 : vector<2x9x1xf32> to vector<2x9x9xf32>
    %40 = arith.mulf %35, %39 : vector<2x9x9xf32>
    %41 = arith.truncf %40 : vector<2x9x9xf32> to vector<2x9x9xbf16>
    %42 = vector.extract_strided_slice %25 {offsets = [0, 0, 0], sizes = [2, 9, 8], strides = [1, 1, 1]} : vector<2x9x32xf32> to vector<2x9x8xf32>
    %43 = arith.truncf %42 : vector<2x9x8xf32> to vector<2x9x8xbf16>
    "tpu.trace_start"() <{level = 10 : i32, message = "bqk,bkd->bqd"}> : () -> ()
    %cst_11 = arith.constant dense<0.000000e+00> : vector<2x9x8xf32>
    %44 = tpu.matmul %41, %43, %cst_11 {dimension_numbers = #tpu.dot_dimension_numbers<[2], [1], [1], [2], [0, 0, 0, 1, 1, 2], [0], [0]>} : vector<2x9x9xbf16>, vector<2x9x8xbf16>, vector<2x9x8xf32> -> vector<2x9x8xf32>
    "tpu.trace_stop"() : () -> ()
    %45 = vector.shape_cast %44 : vector<2x9x8xf32> to vector<18x8xf32>
    %46 = arith.truncf %45 : vector<18x8xf32> to vector<18x8xbf16>
    %c0_12 = arith.constant 0 : index
    %c0_13 = arith.constant 0 : index
    %47 = vector.load %arg20[%c0_12, %c0_13] : memref<18x32xbf16, #tpu.memory_space<vmem>>, vector<18x8xbf16>
    tpu.vector_store %arg20[%c0_12, %c0_13], %46 {strides = array<i32>} : memref<18x32xbf16, #tpu.memory_space<vmem>>, vector<18x8xbf16>,
    %48 = vector.extract_strided_slice %21 {offsets = [0, 0, 8], sizes = [2, 9, 8], strides = [1, 1, 1]} : vector<2x9x32xf32> to vector<2x9x8xf32>
    %49 = arith.truncf %48 : vector<2x9x8xf32> to vector<2x9x8xbf16>
    %50 = vector.extract_strided_slice %23 {offsets = [0, 0, 8], sizes = [2, 9, 8], strides = [1, 1, 1]} : vector<2x9x32xf32> to vector<2x9x8xf32>
    %51 = arith.truncf %50 : vector<2x9x8xf32> to vector<2x9x8xbf16>
    "tpu.trace_start"() <{level = 10 : i32, message = "bqd,bkd->bqk"}> : () -> ()
    %cst_14 = arith.constant dense<0.000000e+00> : vector<2x9x9xf32>
    %52 = tpu.matmul %49, %51, %cst_14 {dimension_numbers = #tpu.dot_dimension_numbers<[2], [2], [1], [1], [0, 0, 0, 1, 1, 1], [0], [0]>} : vector<2x9x8xbf16>, vector<2x9x8xbf16>, vector<2x9x9xf32> -> vector<2x9x9xf32>
    "tpu.trace_stop"() : () -> ()
    %cst_15 = arith.constant dense<0xFF800000> : vector<2x9xf32>
    %53 = vector.multi_reduction <maximumf>, %52, %cst_15 [2] : vector<2x9x9xf32> to vector<2x9xf32>
    %54 = vector.shape_cast %53 : vector<2x9xf32> to vector<2x9x1xf32>
    %55 = vector.broadcast %54 : vector<2x9x1xf32> to vector<2x9x9xf32>
    %56 = arith.subf %52, %55 : vector<2x9x9xf32>
    %57 = math.exp %56 : vector<2x9x9xf32>
    %cst_16 = arith.constant dense<0.000000e+00> : vector<2x9xf32>
    %58 = vector.multi_reduction <add>, %57, %cst_16 [2] : vector<2x9x9xf32> to vector<2x9xf32>
    %59 = vector.shape_cast %58 : vector<2x9xf32> to vector<2x9x1xf32>
    %60 = tpu.reciprocal %59 {approx = true} : vector<2x9x1xf32> -> vector<2x9x1xf32>
    %61 = vector.broadcast %60 : vector<2x9x1xf32> to vector<2x9x9xf32>
    %62 = arith.mulf %57, %61 : vector<2x9x9xf32>
    %63 = arith.truncf %62 : vector<2x9x9xf32> to vector<2x9x9xbf16>
    %64 = vector.extract_strided_slice %25 {offsets = [0, 0, 8], sizes = [2, 9, 8], strides = [1, 1, 1]} : vector<2x9x32xf32> to vector<2x9x8xf32>
    %65 = arith.truncf %64 : vector<2x9x8xf32> to vector<2x9x8xbf16>
    "tpu.trace_start"() <{level = 10 : i32, message = "bqk,bkd->bqd"}> : () -> ()
    %cst_17 = arith.constant dense<0.000000e+00> : vector<2x9x8xf32>
    %66 = tpu.matmul %63, %65, %cst_17 {dimension_numbers = #tpu.dot_dimension_numbers<[2], [1], [1], [2], [0, 0, 0, 1, 1, 2], [0], [0]>} : vector<2x9x9xbf16>, vector<2x9x8xbf16>, vector<2x9x8xf32> -> vector<2x9x8xf32>
    "tpu.trace_stop"() : () -> ()
    %67 = vector.shape_cast %66 : vector<2x9x8xf32> to vector<18x8xf32>
    %68 = arith.truncf %67 : vector<18x8xf32> to vector<18x8xbf16>
    %c0_18 = arith.constant 0 : index
    %c8 = arith.constant 8 : index
    %69 = vector.load %arg20[%c0_18, %c8] : memref<18x32xbf16, #tpu.memory_space<vmem>>, vector<18x8xbf16>
    tpu.vector_store %arg20[%c0_18, %c8], %68 {strides = array<i32>} : memref<18x32xbf16, #tpu.memory_space<vmem>>, vector<18x8xbf16>,
    %70 = vector.extract_strided_slice %21 {offsets = [0, 0, 16], sizes = [2, 9, 8], strides = [1, 1, 1]} : vector<2x9x32xf32> to vector<2x9x8xf32>
    %71 = arith.truncf %70 : vector<2x9x8xf32> to vector<2x9x8xbf16>
    %72 = vector.extract_strided_slice %23 {offsets = [0, 0, 16], sizes = [2, 9, 8], strides = [1, 1, 1]} : vector<2x9x32xf32> to vector<2x9x8xf32>
    %73 = arith.truncf %72 : vector<2x9x8xf32> to vector<2x9x8xbf16>
    "tpu.trace_start"() <{level = 10 : i32, message = "bqd,bkd->bqk"}> : () -> ()
    %cst_19 = arith.constant dense<0.000000e+00> : vector<2x9x9xf32>
    %74 = tpu.matmul %71, %73, %cst_19 {dimension_numbers = #tpu.dot_dimension_numbers<[2], [2], [1], [1], [0, 0, 0, 1, 1, 1], [0], [0]>} : vector<2x9x8xbf16>, vector<2x9x8xbf16>, vector<2x9x9xf32> -> vector<2x9x9xf32>
    "tpu.trace_stop"() : () -> ()
    %cst_20 = arith.constant dense<0xFF800000> : vector<2x9xf32>
    %75 = vector.multi_reduction <maximumf>, %74, %cst_20 [2] : vector<2x9x9xf32> to vector<2x9xf32>
    %76 = vector.shape_cast %75 : vector<2x9xf32> to vector<2x9x1xf32>
    %77 = vector.broadcast %76 : vector<2x9x1xf32> to vector<2x9x9xf32>
    %78 = arith.subf %74, %77 : vector<2x9x9xf32>
    %79 = math.exp %78 : vector<2x9x9xf32>
    %cst_21 = arith.constant dense<0.000000e+00> : vector<2x9xf32>
    %80 = vector.multi_reduction <add>, %79, %cst_21 [2] : vector<2x9x9xf32> to vector<2x9xf32>
    %81 = vector.shape_cast %80 : vector<2x9xf32> to vector<2x9x1xf32>
    %82 = tpu.reciprocal %81 {approx = true} : vector<2x9x1xf32> -> vector<2x9x1xf32>
    %83 = vector.broadcast %82 : vector<2x9x1xf32> to vector<2x9x9xf32>
    %84 = arith.mulf %79, %83 : vector<2x9x9xf32>
    %85 = arith.truncf %84 : vector<2x9x9xf32> to vector<2x9x9xbf16>
    %86 = vector.extract_strided_slice %25 {offsets = [0, 0, 16], sizes = [2, 9, 8], strides = [1, 1, 1]} : vector<2x9x32xf32> to vector<2x9x8xf32>
    %87 = arith.truncf %86 : vector<2x9x8xf32> to vector<2x9x8xbf16>
    "tpu.trace_start"() <{level = 10 : i32, message = "bqk,bkd->bqd"}> : () -> ()
    %cst_22 = arith.constant dense<0.000000e+00> : vector<2x9x8xf32>
    %88 = tpu.matmul %85, %87, %cst_22 {dimension_numbers = #tpu.dot_dimension_numbers<[2], [1], [1], [2], [0, 0, 0, 1, 1, 2], [0], [0]>} : vector<2x9x9xbf16>, vector<2x9x8xbf16>, vector<2x9x8xf32> -> vector<2x9x8xf32>
    "tpu.trace_stop"() : () -> ()
    %89 = vector.shape_cast %88 : vector<2x9x8xf32> to vector<18x8xf32>
    %90 = arith.truncf %89 : vector<18x8xf32> to vector<18x8xbf16>
    %c0_23 = arith.constant 0 : index
    %c16 = arith.constant 16 : index
    %91 = vector.load %arg20[%c0_23, %c16] : memref<18x32xbf16, #tpu.memory_space<vmem>>, vector<18x8xbf16>
    tpu.vector_store %arg20[%c0_23, %c16], %90 {strides = array<i32>} : memref<18x32xbf16, #tpu.memory_space<vmem>>, vector<18x8xbf16>,
    %92 = vector.extract_strided_slice %21 {offsets = [0, 0, 24], sizes = [2, 9, 8], strides = [1, 1, 1]} : vector<2x9x32xf32> to vector<2x9x8xf32>
    %93 = arith.truncf %92 : vector<2x9x8xf32> to vector<2x9x8xbf16>
    %94 = vector.extract_strided_slice %23 {offsets = [0, 0, 24], sizes = [2, 9, 8], strides = [1, 1, 1]} : vector<2x9x32xf32> to vector<2x9x8xf32>
    %95 = arith.truncf %94 : vector<2x9x8xf32> to vector<2x9x8xbf16>
    "tpu.trace_start"() <{level = 10 : i32, message = "bqd,bkd->bqk"}> : () -> ()
    %cst_24 = arith.constant dense<0.000000e+00> : vector<2x9x9xf32>
    %96 = tpu.matmul %93, %95, %cst_24 {dimension_numbers = #tpu.dot_dimension_numbers<[2], [2], [1], [1], [0, 0, 0, 1, 1, 1], [0], [0]>} : vector<2x9x8xbf16>, vector<2x9x8xbf16>, vector<2x9x9xf32> -> vector<2x9x9xf32>
    "tpu.trace_stop"() : () -> ()
    %cst_25 = arith.constant dense<0xFF800000> : vector<2x9xf32>
    %97 = vector.multi_reduction <maximumf>, %96, %cst_25 [2] : vector<2x9x9xf32> to vector<2x9xf32>
    %98 = vector.shape_cast %97 : vector<2x9xf32> to vector<2x9x1xf32>
    %99 = vector.broadcast %98 : vector<2x9x1xf32> to vector<2x9x9xf32>
    %100 = arith.subf %96, %99 : vector<2x9x9xf32>
    %101 = math.exp %100 : vector<2x9x9xf32>
    %cst_26 = arith.constant dense<0.000000e+00> : vector<2x9xf32>
    %102 = vector.multi_reduction <add>, %101, %cst_26 [2] : vector<2x9x9xf32> to vector<2x9xf32>
    %103 = vector.shape_cast %102 : vector<2x9xf32> to vector<2x9x1xf32>
    %104 = tpu.reciprocal %103 {approx = true} : vector<2x9x1xf32> -> vector<2x9x1xf32>
    %105 = vector.broadcast %104 : vector<2x9x1xf32> to vector<2x9x9xf32>
    %106 = arith.mulf %101, %105 : vector<2x9x9xf32>
    %107 = arith.truncf %106 : vector<2x9x9xf32> to vector<2x9x9xbf16>
    %108 = vector.extract_strided_slice %25 {offsets = [0, 0, 24], sizes = [2, 9, 8], strides = [1, 1, 1]} : vector<2x9x32xf32> to vector<2x9x8xf32>
    %109 = arith.truncf %108 : vector<2x9x8xf32> to vector<2x9x8xbf16>
    "tpu.trace_start"() <{level = 10 : i32, message = "bqk,bkd->bqd"}> : () -> ()
    %cst_27 = arith.constant dense<0.000000e+00> : vector<2x9x8xf32>
    %110 = tpu.matmul %107, %109, %cst_27 {dimension_numbers = #tpu.dot_dimension_numbers<[2], [1], [1], [2], [0, 0, 0, 1, 1, 2], [0], [0]>} : vector<2x9x9xbf16>, vector<2x9x8xbf16>, vector<2x9x8xf32> -> vector<2x9x8xf32>
    "tpu.trace_stop"() : () -> ()
    %111 = vector.shape_cast %110 : vector<2x9x8xf32> to vector<18x8xf32>
    %112 = arith.truncf %111 : vector<18x8xf32> to vector<18x8xbf16>
    %c0_28 = arith.constant 0 : index
    %c24 = arith.constant 24 : index
    %113 = vector.load %arg20[%c0_28, %c24] : memref<18x32xbf16, #tpu.memory_space<vmem>>, vector<18x8xbf16>
    tpu.vector_store %arg20[%c0_28, %c24], %112 {strides = array<i32>} : memref<18x32xbf16, #tpu.memory_space<vmem>>, vector<18x8xbf16>,
    %c0_29 = arith.constant 0 : index
    %c0_30 = arith.constant 0 : index
    %114 = vector.load %arg20[%c0_29, %c0_30] : memref<18x32xbf16, #tpu.memory_space<vmem>>, vector<18x32xbf16>
    %c0_31 = arith.constant 0 : index
    %c0_32 = arith.constant 0 : index
    %c0_33 = arith.constant 0 : index
    %115 = vector.load %arg14[%c0_31, %c0_32, %c0_33] : memref<1x32x32xbf16, #tpu.memory_space<vmem>>, vector<1x32x32xbf16>
    %116 = vector.shape_cast %115 : vector<1x32x32xbf16> to vector<32x32xbf16>
    %cst_34 = arith.constant dense<0.000000e+00> : vector<18x32xf32>
    %117 = tpu.matmul %114, %116, %cst_34 {dimension_numbers = #tpu.dot_dimension_numbers<[1], [0], [0], [1], [0, 0, 1, 1], [], []>} : vector<18x32xbf16>, vector<32x32xbf16>, vector<18x32xf32> -> vector<18x32xf32>
    %118 = vector.broadcast %6 : vector<1x32xf32> to vector<18x32xf32>
    %119 = arith.addf %117, %118 : vector<18x32xf32>
    %120 = arith.addf %13, %119 : vector<18x32xf32>
    %cst_35 = arith.constant dense<0.000000e+00> : vector<18xf32>
    %121 = vector.multi_reduction <add>, %120, %cst_35 [1] : vector<18x32xf32> to vector<18xf32>
    %122 = vector.shape_cast %121 : vector<18xf32> to vector<18x1xf32>
    %cst_36 = arith.constant 3.200000e+01 : f32
    %123 = vector.broadcast %cst_36 : f32 to vector<18x1xf32>
    %124 = arith.divf %122, %123 : vector<18x1xf32>
    %125 = vector.broadcast %124 : vector<18x1xf32> to vector<18x32xf32>
    %126 = arith.subf %120, %125 : vector<18x32xf32>
    %127 = arith.mulf %126, %126 : vector<18x32xf32>
    %cst_37 = arith.constant dense<0.000000e+00> : vector<18xf32>
    %128 = vector.multi_reduction <add>, %127, %cst_37 [1] : vector<18x32xf32> to vector<18xf32>
    %129 = vector.shape_cast %128 : vector<18xf32> to vector<18x1xf32>
    %cst_38 = arith.constant 3.200000e+01 : f32
    %130 = vector.broadcast %cst_38 : f32 to vector<18x1xf32>
    %131 = arith.divf %129, %130 : vector<18x1xf32>
    %132 = vector.broadcast %124 : vector<18x1xf32> to vector<18x32xf32>
    %133 = arith.subf %120, %132 : vector<18x32xf32>
    %cst_39 = arith.constant 9.99999996E-13 : f32
    %134 = vector.broadcast %cst_39 : f32 to vector<18x1xf32>
    %135 = arith.addf %131, %134 : vector<18x1xf32>
    %136 = math.rsqrt %135 : vector<18x1xf32>
    %137 = vector.broadcast %136 : vector<18x1xf32> to vector<18x32xf32>
    %138 = arith.mulf %133, %137 : vector<18x32xf32>
    %139 = vector.broadcast %7 : vector<1x32xf32> to vector<18x32xf32>
    %140 = arith.mulf %138, %139 : vector<18x32xf32>
    %141 = vector.broadcast %8 : vector<1x32xf32> to vector<18x32xf32>
    %142 = arith.addf %140, %141 : vector<18x32xf32>
    %c0_40 = arith.constant 0 : index
    %c0_41 = arith.constant 0 : index
    %c0_42 = arith.constant 0 : index
    %143 = vector.load %arg15[%c0_40, %c0_41, %c0_42] : memref<1x32x64xbf16, #tpu.memory_space<vmem>>, vector<1x32x64xbf16>
    %144 = vector.shape_cast %143 : vector<1x32x64xbf16> to vector<32x64xbf16>
    %145 = arith.truncf %142 : vector<18x32xf32> to vector<18x32xbf16>
    %cst_43 = arith.constant dense<0.000000e+00> : vector<18x64xf32>
    %146 = tpu.matmul %145, %144, %cst_43 {dimension_numbers = #tpu.dot_dimension_numbers<[1], [0], [0], [1], [0, 0, 1, 1], [], []>} : vector<18x32xbf16>, vector<32x64xbf16>, vector<18x64xf32> -> vector<18x64xf32>
    %147 = vector.broadcast %9 : vector<1x64xf32> to vector<18x64xf32>
    %148 = arith.addf %146, %147 : vector<18x64xf32>
    %149 = arith.truncf %148 : vector<18x64xf32> to vector<18x64xbf16>
    %150 = arith.mulf %149, %149 : vector<18x64xbf16>
    %151 = arith.mulf %149, %150 : vector<18x64xbf16>
    %cst_44 = arith.constant 4.467770e-02 : bf16
    %152 = vector.broadcast %cst_44 : bf16 to vector<18x64xbf16>
    %153 = arith.mulf %152, %151 : vector<18x64xbf16>
    %154 = arith.addf %149, %153 : vector<18x64xbf16>
    %cst_45 = arith.constant 7.968750e-01 : bf16
    %155 = vector.broadcast %cst_45 : bf16 to vector<18x64xbf16>
    %156 = arith.mulf %155, %154 : vector<18x64xbf16>
    %157 = math.tanh %156 : vector<18x64xbf16>
    %cst_46 = arith.constant 1.000000e+00 : bf16
    %158 = vector.broadcast %cst_46 : bf16 to vector<18x64xbf16>
    %159 = arith.addf %158, %157 : vector<18x64xbf16>
    %cst_47 = arith.constant 5.000000e-01 : bf16
    %160 = vector.broadcast %cst_47 : bf16 to vector<18x64xbf16>
    %161 = arith.mulf %160, %159 : vector<18x64xbf16>
    %162 = arith.mulf %149, %161 : vector<18x64xbf16>
    %c0_48 = arith.constant 0 : index
    %c0_49 = arith.constant 0 : index
    %c0_50 = arith.constant 0 : index
    %163 = vector.load %arg16[%c0_48, %c0_49, %c0_50] : memref<1x64x32xbf16, #tpu.memory_space<vmem>>, vector<1x64x32xbf16>
    %164 = vector.shape_cast %163 : vector<1x64x32xbf16> to vector<64x32xbf16>
    %cst_51 = arith.constant dense<0.000000e+00> : vector<18x32xf32>
    %165 = tpu.matmul %162, %164, %cst_51 {dimension_numbers = #tpu.dot_dimension_numbers<[1], [0], [0], [1], [0, 0, 1, 1], [], []>} : vector<18x64xbf16>, vector<64x32xbf16>, vector<18x32xf32> -> vector<18x32xf32>
    %166 = vector.broadcast %10 : vector<1x32xf32> to vector<18x32xf32>
    %167 = arith.addf %165, %166 : vector<18x32xf32>
    %168 = arith.addf %142, %167 : vector<18x32xf32>
    %cst_52 = arith.constant dense<0.000000e+00> : vector<18xf32>
    %169 = vector.multi_reduction <add>, %168, %cst_52 [1] : vector<18x32xf32> to vector<18xf32>
    %170 = vector.shape_cast %169 : vector<18xf32> to vector<18x1xf32>
    %cst_53 = arith.constant 3.200000e+01 : f32
    %171 = vector.broadcast %cst_53 : f32 to vector<18x1xf32>
    %172 = arith.divf %170, %171 : vector<18x1xf32>
    %173 = vector.broadcast %172 : vector<18x1xf32> to vector<18x32xf32>
    %174 = arith.subf %168, %173 : vector<18x32xf32>
    %175 = arith.mulf %174, %174 : vector<18x32xf32>
    %cst_54 = arith.constant dense<0.000000e+00> : vector<18xf32>
    %176 = vector.multi_reduction <add>, %175, %cst_54 [1] : vector<18x32xf32> to vector<18xf32>
    %177 = vector.shape_cast %176 : vector<18xf32> to vector<18x1xf32>
    %cst_55 = arith.constant 3.200000e+01 : f32
    %178 = vector.broadcast %cst_55 : f32 to vector<18x1xf32>
    %179 = arith.divf %177, %178 : vector<18x1xf32>
    %180 = vector.broadcast %172 : vector<18x1xf32> to vector<18x32xf32>
    %181 = arith.subf %168, %180 : vector<18x32xf32>
    %cst_56 = arith.constant 9.99999996E-13 : f32
    %182 = vector.broadcast %cst_56 : f32 to vector<18x1xf32>
    %183 = arith.addf %179, %182 : vector<18x1xf32>
    %184 = math.rsqrt %183 : vector<18x1xf32>
    %185 = vector.broadcast %184 : vector<18x1xf32> to vector<18x32xf32>
    %186 = arith.mulf %181, %185 : vector<18x32xf32>
    %187 = vector.broadcast %11 : vector<1x32xf32> to vector<18x32xf32>
    %188 = arith.mulf %186, %187 : vector<18x32xf32>
    %189 = vector.broadcast %12 : vector<1x32xf32> to vector<18x32xf32>
    %190 = arith.addf %188, %189 : vector<18x32xf32>
    %c0_57 = arith.constant 0 : index
    %c0_58 = arith.constant 0 : index
    %191 = vector.load %arg19[%c0_57, %c0_58] : memref<18x32xf32, #tpu.memory_space<vmem>>, vector<18x32xf32>
    tpu.vector_store %arg19[%c0_57, %c0_58], %190 {strides = array<i32>} : memref<18x32xf32, #tpu.memory_space<vmem>>, vector<18x32xf32>,
    %c1_i32 = arith.constant 1 : i32
    %192 = arith.cmpi eq, %arg0, %c1_i32 : i32
    %193 = arith.extui %192 : i1 to i32
    %c0_i32_59 = arith.constant 0 : i32
    %194 = arith.cmpi ne, %193, %c0_i32_59 : i32
    scf.if %194 {
      %195 = vector.shape_cast %190 : vector<18x32xf32> to vector<2x9x32xf32>
      %196 = vector.extract_strided_slice %195 {offsets = [0, 0, 0], sizes = [2, 1, 32], strides = [1, 1, 1]} : vector<2x9x32xf32> to vector<2x1x32xf32>
      %197 = vector.shape_cast %196 : vector<2x1x32xf32> to vector<2x32xf32>
      %c0_60 = arith.constant 0 : index
      %c0_61 = arith.constant 0 : index
      %198 = vector.load %arg18[%c0_60, %c0_61] : memref<2x32xf32, #tpu.memory_space<vmem>>, vector<2x32xf32>
      tpu.vector_store %arg18[%c0_60, %c0_61], %197 {strides = array<i32>} : memref<2x32xf32, #tpu.memory_space<vmem>>, vector<2x32xf32>,
    } else {
    }
    return
  }
  func.func @transform_0(%arg0: i32) -> (i32, i32) {
    %c0_i32 = arith.constant 0 : i32
    %c0_i32_0 = arith.constant 0 : i32
    %c0_i32_1 = arith.constant 0 : i32
    return %c0_i32, %c0_i32_0 : i32, i32
  }
  func.func @transform_1(%arg0: i32) -> (i32, i32, i32) {
    %c0_i32 = arith.constant 0 : i32
    %c0_i32_0 = arith.constant 0 : i32
    %c0_i32_1 = arith.constant 0 : i32
    %c0_i32_2 = arith.constant 0 : i32
    return %c0_i32, %c0_i32_0, %c0_i32_1 : i32, i32, i32
  }
  func.func @transform_2(%arg0: i32) -> (i32, i32, i32) {
    %c0_i32 = arith.constant 0 : i32
    %c0_i32_0 = arith.constant 0 : i32
    %c0_i32_1 = arith.constant 0 : i32
    %c0_i32_2 = arith.constant 0 : i32
    return %c0_i32, %c0_i32_0, %c0_i32_1 : i32, i32, i32
  }
  func.func @transform_3(%arg0: i32) -> (i32, i32) {
    %c0_i32 = arith.constant 0 : i32
    %c0_i32_0 = arith.constant 0 : i32
    %c0_i32_1 = arith.constant 0 : i32
    return %c0_i32, %c0_i32_0 : i32, i32
  }
  func.func @transform_4(%arg0: i32) -> (i32, i32) {
    %c0_i32 = arith.constant 0 : i32
    %c0_i32_0 = arith.constant 0 : i32
    %c0_i32_1 = arith.constant 0 : i32
    return %c0_i32, %c0_i32_0 : i32, i32
  }
  func.func @transform_5(%arg0: i32) -> (i32, i32) {
    %c0_i32 = arith.constant 0 : i32
    %c0_i32_0 = arith.constant 0 : i32
    %c0_i32_1 = arith.constant 0 : i32
    return %c0_i32, %c0_i32_0 : i32, i32
  }
  func.func @transform_6(%arg0: i32) -> (i32, i32) {
    %c0_i32 = arith.constant 0 : i32
    %c0_i32_0 = arith.constant 0 : i32
    %c0_i32_1 = arith.constant 0 : i32
    return %c0_i32, %c0_i32_0 : i32, i32
  }
  func.func @transform_7(%arg0: i32) -> (i32, i32) {
    %c0_i32 = arith.constant 0 : i32
    %c0_i32_0 = arith.constant 0 : i32
    %c0_i32_1 = arith.constant 0 : i32
    return %c0_i32, %c0_i32_0 : i32, i32
  }
  func.func @transform_8(%arg0: i32) -> (i32, i32) {
    %c0_i32 = arith.constant 0 : i32
    %c0_i32_0 = arith.constant 0 : i32
    %c0_i32_1 = arith.constant 0 : i32
    return %c0_i32, %c0_i32_0 : i32, i32
  }
  func.func @transform_9(%arg0: i32) -> (i32, i32) {
    %c0_i32 = arith.constant 0 : i32
    %c0_i32_0 = arith.constant 0 : i32
    %c0_i32_1 = arith.constant 0 : i32
    return %c0_i32, %c0_i32_0 : i32, i32
  }
  func.func @transform_10(%arg0: i32) -> (i32, i32) {
    %c0_i32 = arith.constant 0 : i32
    %c0_i32_0 = arith.constant 0 : i32
    %c0_i32_1 = arith.constant 0 : i32
    return %c0_i32, %c0_i32_0 : i32, i32
  }
  func.func @transform_11(%arg0: i32) -> (i32, i32) {
    %c0_i32 = arith.constant 0 : i32
    %c0_i32_0 = arith.constant 0 : i32
    %c0_i32_1 = arith.constant 0 : i32
    return %c0_i32, %c0_i32_0 : i32, i32
  }
  func.func @transform_12(%arg0: i32) -> (i32, i32, i32) {
    %c0_i32 = arith.constant 0 : i32
    %c0_i32_0 = arith.constant 0 : i32
    %c0_i32_1 = arith.constant 0 : i32
    return %arg0, %c0_i32, %c0_i32_0 : i32, i32, i32
  }
  func.func @transform_13(%arg0: i32) -> (i32, i32, i32) {
    %c0_i32 = arith.constant 0 : i32
    %c0_i32_0 = arith.constant 0 : i32
    %c0_i32_1 = arith.constant 0 : i32
    return %arg0, %c0_i32, %c0_i32_0 : i32, i32, i32
  }
  func.func @transform_14(%arg0: i32) -> (i32, i32, i32) {
    %c0_i32 = arith.constant 0 : i32
    %c0_i32_0 = arith.constant 0 : i32
    %c0_i32_1 = arith.constant 0 : i32
    return %arg0, %c0_i32, %c0_i32_0 : i32, i32, i32
  }
  func.func @transform_15(%arg0: i32) -> (i32, i32, i32) {
    %c0_i32 = arith.constant 0 : i32
    %c0_i32_0 = arith.constant 0 : i32
    %c0_i32_1 = arith.constant 0 : i32
    return %arg0, %c0_i32, %c0_i32_0 : i32, i32, i32
  }
  func.func @transform_16(%arg0: i32) -> (i32, i32, i32) {
    %c0_i32 = arith.constant 0 : i32
    %c0_i32_0 = arith.constant 0 : i32
    %c0_i32_1 = arith.constant 0 : i32
    return %arg0, %c0_i32, %c0_i32_0 : i32, i32, i32
  }
  func.func @transform_17(%arg0: i32) -> (i32, i32) {
    %c0_i32 = arith.constant 0 : i32
    %c0_i32_0 = arith.constant 0 : i32
    %c0_i32_1 = arith.constant 0 : i32
    return %c0_i32, %c0_i32_0 : i32, i32
  }
}

module attributes {stable_mosaic.version = 11 : i64} {
  func.func @deepdraft_heads_kernel(%arg0: memref<2x32xf32, #tpu.memory_space<vmem>>, %arg1: memref<1x32xf32, #tpu.memory_space<vmem>>, %arg2: memref<1x32xf32, #tpu.memory_space<vmem>>, %arg3: memref<32x32xbf16, #tpu.memory_space<vmem>>, %arg4: memref<1x32xf32, #tpu.memory_space<vmem>>, %arg5: memref<32x128xbf16, #tpu.memory_space<vmem>>, %arg6: memref<1x128xf32, #tpu.memory_space<vmem>>, %arg7: memref<32x32xbf16, #tpu.memory_space<vmem>>, %arg8: memref<1x32xf32, #tpu.memory_space<vmem>>, %arg9: memref<32x256xbf16, #tpu.memory_space<vmem>>, %arg10: memref<1x256xf32, #tpu.memory_space<vmem>>, %arg11: memref<256x128xbf16, #tpu.memory_space<vmem>>, %arg12: memref<1x128xf32, #tpu.memory_space<vmem>>, %arg13: memref<2x128xf32, #tpu.memory_space<vmem>>, %arg14: memref<2x128xf32, #tpu.memory_space<vmem>>) attributes {dimension_semantics = [], scalar_prefetch = 0 : i64, scratch_operands = 0 : i64, tpu.core_type = #tpu.core_type<tc>} {
    %c0 = arith.constant 0 : index
    %c0_0 = arith.constant 0 : index
    %0 = vector.load %arg0[%c0, %c0_0] : memref<2x32xf32, #tpu.memory_space<vmem>>, vector<2x32xf32>
    %c0_1 = arith.constant 0 : index
    %c0_2 = arith.constant 0 : index
    %1 = vector.load %arg1[%c0_1, %c0_2] : memref<1x32xf32, #tpu.memory_space<vmem>>, vector<1x32xf32>
    %c0_3 = arith.constant 0 : index
    %c0_4 = arith.constant 0 : index
    %2 = vector.load %arg2[%c0_3, %c0_4] : memref<1x32xf32, #tpu.memory_space<vmem>>, vector<1x32xf32>
    %cst = arith.constant dense<0.000000e+00> : vector<2xf32>
    %3 = vector.multi_reduction <add>, %0, %cst [1] : vector<2x32xf32> to vector<2xf32>
    %4 = vector.shape_cast %3 : vector<2xf32> to vector<2x1xf32>
    %cst_5 = arith.constant 3.200000e+01 : f32
    %5 = vector.broadcast %cst_5 : f32 to vector<2x1xf32>
    %6 = arith.divf %4, %5 : vector<2x1xf32>
    %7 = vector.broadcast %6 : vector<2x1xf32> to vector<2x32xf32>
    %8 = arith.subf %0, %7 : vector<2x32xf32>
    %9 = arith.mulf %8, %8 : vector<2x32xf32>
    %cst_6 = arith.constant dense<0.000000e+00> : vector<2xf32>
    %10 = vector.multi_reduction <add>, %9, %cst_6 [1] : vector<2x32xf32> to vector<2xf32>
    %11 = vector.shape_cast %10 : vector<2xf32> to vector<2x1xf32>
    %cst_7 = arith.constant 3.200000e+01 : f32
    %12 = vector.broadcast %cst_7 : f32 to vector<2x1xf32>
    %13 = arith.divf %11, %12 : vector<2x1xf32>
    %14 = vector.broadcast %6 : vector<2x1xf32> to vector<2x32xf32>
    %15 = arith.subf %0, %14 : vector<2x32xf32>
    %cst_8 = arith.constant 9.99999996E-13 : f32
    %16 = vector.broadcast %cst_8 : f32 to vector<2x1xf32>
    %17 = arith.addf %13, %16 : vector<2x1xf32>
    %18 = math.rsqrt %17 : vector<2x1xf32>
    %19 = vector.broadcast %18 : vector<2x1xf32> to vector<2x32xf32>
    %20 = arith.mulf %15, %19 : vector<2x32xf32>
    %21 = vector.broadcast %1 : vector<1x32xf32> to vector<2x32xf32>
    %22 = arith.mulf %20, %21 : vector<2x32xf32>
    %23 = vector.broadcast %2 : vector<1x32xf32> to vector<2x32xf32>
    %24 = arith.addf %22, %23 : vector<2x32xf32>
    %c0_9 = arith.constant 0 : index
    %c0_10 = arith.constant 0 : index
    %25 = vector.load %arg3[%c0_9, %c0_10] : memref<32x32xbf16, #tpu.memory_space<vmem>>, vector<32x32xbf16>
    %c0_11 = arith.constant 0 : index
    %c0_12 = arith.constant 0 : index
    %26 = vector.load %arg4[%c0_11, %c0_12] : memref<1x32xf32, #tpu.memory_space<vmem>>, vector<1x32xf32>
    %27 = arith.truncf %24 : vector<2x32xf32> to vector<2x32xbf16>
    %cst_13 = arith.constant dense<0.000000e+00> : vector<2x32xf32>
    %28 = tpu.matmul %27, %25, %cst_13 {dimension_numbers = #tpu.dot_dimension_numbers<[1], [0], [0], [1], [0, 0, 1, 1], [], []>} : vector<2x32xbf16>, vector<32x32xbf16>, vector<2x32xf32> -> vector<2x32xf32>
    %29 = vector.broadcast %26 : vector<1x32xf32> to vector<2x32xf32>
    %30 = arith.addf %28, %29 : vector<2x32xf32>
    %31 = math.tanh %30 : vector<2x32xf32>
    %c0_14 = arith.constant 0 : index
    %c0_15 = arith.constant 0 : index
    %32 = vector.load %arg5[%c0_14, %c0_15] : memref<32x128xbf16, #tpu.memory_space<vmem>>, vector<32x128xbf16>
    %c0_16 = arith.constant 0 : index
    %c0_17 = arith.constant 0 : index
    %33 = vector.load %arg6[%c0_16, %c0_17] : memref<1x128xf32, #tpu.memory_space<vmem>>, vector<1x128xf32>
    %34 = arith.truncf %31 : vector<2x32xf32> to vector<2x32xbf16>
    %cst_18 = arith.constant dense<0.000000e+00> : vector<2x128xf32>
    %35 = tpu.matmul %34, %32, %cst_18 {dimension_numbers = #tpu.dot_dimension_numbers<[1], [0], [0], [1], [0, 0, 1, 1], [], []>} : vector<2x32xbf16>, vector<32x128xbf16>, vector<2x128xf32> -> vector<2x128xf32>
    %36 = vector.broadcast %33 : vector<1x128xf32> to vector<2x128xf32>
    %37 = arith.addf %35, %36 : vector<2x128xf32>
    %c0_19 = arith.constant 0 : index
    %c0_20 = arith.constant 0 : index
    %38 = vector.load %arg13[%c0_19, %c0_20] : memref<2x128xf32, #tpu.memory_space<vmem>>, vector<2x128xf32>
    tpu.vector_store %arg13[%c0_19, %c0_20], %37 {strides = array<i32>} : memref<2x128xf32, #tpu.memory_space<vmem>>, vector<2x128xf32>,
    %c0_21 = arith.constant 0 : index
    %c0_22 = arith.constant 0 : index
    %39 = vector.load %arg7[%c0_21, %c0_22] : memref<32x32xbf16, #tpu.memory_space<vmem>>, vector<32x32xbf16>
    %c0_23 = arith.constant 0 : index
    %c0_24 = arith.constant 0 : index
    %40 = vector.load %arg8[%c0_23, %c0_24] : memref<1x32xf32, #tpu.memory_space<vmem>>, vector<1x32xf32>
    %41 = arith.truncf %24 : vector<2x32xf32> to vector<2x32xbf16>
    %cst_25 = arith.constant dense<0.000000e+00> : vector<2x32xf32>
    %42 = tpu.matmul %41, %39, %cst_25 {dimension_numbers = #tpu.dot_dimension_numbers<[1], [0], [0], [1], [0, 0, 1, 1], [], []>} : vector<2x32xbf16>, vector<32x32xbf16>, vector<2x32xf32> -> vector<2x32xf32>
    %43 = vector.broadcast %40 : vector<1x32xf32> to vector<2x32xf32>
    %44 = arith.addf %42, %43 : vector<2x32xf32>
    %cst_26 = arith.constant 0.000000e+00 : f32
    %45 = vector.broadcast %cst_26 : f32 to vector<2x32xf32>
    %46 = arith.maximumf %44, %45 : vector<2x32xf32>
    %c0_27 = arith.constant 0 : index
    %c0_28 = arith.constant 0 : index
    %47 = vector.load %arg9[%c0_27, %c0_28] : memref<32x256xbf16, #tpu.memory_space<vmem>>, vector<32x256xbf16>
    %c0_29 = arith.constant 0 : index
    %c0_30 = arith.constant 0 : index
    %48 = vector.load %arg10[%c0_29, %c0_30] : memref<1x256xf32, #tpu.memory_space<vmem>>, vector<1x256xf32>
    %49 = arith.truncf %46 : vector<2x32xf32> to vector<2x32xbf16>
    %cst_31 = arith.constant dense<0.000000e+00> : vector<2x256xf32>
    %50 = tpu.matmul %49, %47, %cst_31 {dimension_numbers = #tpu.dot_dimension_numbers<[1], [0], [0], [1], [0, 0, 1, 1], [], []>} : vector<2x32xbf16>, vector<32x256xbf16>, vector<2x256xf32> -> vector<2x256xf32>
    %51 = vector.broadcast %48 : vector<1x256xf32> to vector<2x256xf32>
    %52 = arith.addf %50, %51 : vector<2x256xf32>
    %cst_32 = arith.constant 0.000000e+00 : f32
    %53 = vector.broadcast %cst_32 : f32 to vector<2x256xf32>
    %54 = arith.maximumf %52, %53 : vector<2x256xf32>
    %c0_33 = arith.constant 0 : index
    %c0_34 = arith.constant 0 : index
    %55 = vector.load %arg11[%c0_33, %c0_34] : memref<256x128xbf16, #tpu.memory_space<vmem>>, vector<256x128xbf16>
    %c0_35 = arith.constant 0 : index
    %c0_36 = arith.constant 0 : index
    %56 = vector.load %arg12[%c0_35, %c0_36] : memref<1x128xf32, #tpu.memory_space<vmem>>, vector<1x128xf32>
    %57 = arith.truncf %54 : vector<2x256xf32> to vector<2x256xbf16>
    %cst_37 = arith.constant dense<0.000000e+00> : vector<2x128xf32>
    %58 = tpu.matmul %57, %55, %cst_37 {dimension_numbers = #tpu.dot_dimension_numbers<[1], [0], [0], [1], [0, 0, 1, 1], [], []>} : vector<2x256xbf16>, vector<256x128xbf16>, vector<2x128xf32> -> vector<2x128xf32>
    %59 = vector.broadcast %56 : vector<1x128xf32> to vector<2x128xf32>
    %60 = arith.addf %58, %59 : vector<2x128xf32>
    %c0_38 = arith.constant 0 : index
    %c0_39 = arith.constant 0 : index
    %61 = vector.load %arg14[%c0_38, %c0_39] : memref<2x128xf32, #tpu.memory_space<vmem>>, vector<2x128xf32>
    tpu.vector_store %arg14[%c0_38, %c0_39], %60 {strides = array<i32>} : memref<2x128xf32, #tpu.memory_space<vmem>>, vector<2x128xf32>,
    return
  }
}

</mosaic_0001>

<llo_original>
// kernel: deepdraft_forward.3
$region0: #{deepdraft_forward.3}
  #allocation0 [shape = 'u32[]', space=smem, size = 0x4, offset = 0x4, fixed_abs, tag = 'smem constant byte address 0x4 - core index']
  #allocation1 [shape = 'u32[144,128]{1,0:T(1,128)}', space=vmem, size = 0x12000, scoped, tag = 'internal scratch']
  %s0 = inlined_call_operand.vmem [shape: f32[2,32], index: 0, kind: input, shape index: {}]
  %s1 = inlined_call_operand.vmem [shape: f32[1,32], index: 1, kind: input, shape index: {}]
  %s2 = inlined_call_operand.vmem [shape: f32[1,32], index: 2, kind: input, shape index: {}]
  %s3 = inlined_call_operand.vmem [shape: bf16[32,32], index: 3, kind: input, shape index: {}]
  %s4 = inlined_call_operand.vmem [shape: f32[1,32], index: 4, kind: input, shape index: {}]
  %s5 = inlined_call_operand.vmem [shape: bf16[32,128], index: 5, kind: input, shape index: {}]
  %s6 = inlined_call_operand.vmem [shape: f32[1,128], index: 6, kind: input, shape index: {}]
  %s7 = inlined_call_operand.vmem [shape: bf16[32,32], index: 7, kind: input, shape index: {}]
  %s8 = inlined_call_operand.vmem [shape: f32[1,32], index: 8, kind: input, shape index: {}]
  %s9 = inlined_call_operand.vmem [shape: bf16[32,256], index: 9, kind: input, shape index: {}]
  %s10 = inlined_call_operand.vmem [shape: f32[1,256], index: 10, kind: input, shape index: {}]
  %s11 = inlined_call_operand.vmem [shape: bf16[256,128], index: 11, kind: input, shape index: {}]
  %s12 = inlined_call_operand.vmem [shape: f32[1,128], index: 12, kind: input, shape index: {}]
  %s13 = inlined_call_operand.hbm [shape: f32[2,128], index: 13, kind: output, shape index: {0}]
  %s14 = inlined_call_operand.vmem [shape: f32[2,128], index: 14, kind: output, shape index: {1}]
  %15 = xla_tuple %s13, %s14
  %s16 = sld [smem:[#allocation0]]
  $region70: #{deepdraft_forward.3} parent=0
    _
  %s18 = ssub.s32 1, %s16
  %s19 = scalar_select 0, %s18, %s16
  $region1: #{deepdraft_forward.3} parent=0
    #allocation2 [shape = 'u8[1024]{0}', space=vmem, size = 0x400, scoped, tag = 'output window, operand 0, single buffered']
    #allocation3 [shape = 's32[1]{0}', space=sflag, size = 0x4, scoped, tag = 'scoped memory for deepdraft_forward.3']
    %20 = vsyncpa [#allocation3], 0
    // Predicated region
    $region2: #{deepdraft_forward.3} parent=1 // pred_check
      _
    $region3: #{deepdraft_forward.3} parent=1 // pred_check_branch
      %22 = sbr.rel (0) target = $region5
    $region4: #{deepdraft_forward.3} parent=1 // pred_region
      _
    $region5: #{deepdraft_forward.3} parent=1 // pred_fallthru
      _
    // Predicated region
    $region6: #{deepdraft_forward.3} parent=1 // pred_check
      _
    $region7: #{deepdraft_forward.3} parent=1 // pred_check_branch
      %24 = sbr.rel (0) target = $region9
    $region8: #{deepdraft_forward.3} parent=1 // pred_region
      _
    $region9: #{deepdraft_forward.3} parent=1 // pred_fallthru
      _
    // Predicated region
    $region10: #{deepdraft_forward.3} parent=1 // pred_check
      _
    $region11: #{deepdraft_forward.3} parent=1 // pred_check_branch
      %26 = sbr.rel (0) target = $region13
    $region12: #{deepdraft_forward.3} parent=1 // pred_region
      _
    $region13: #{deepdraft_forward.3} parent=1 // pred_fallthru
      _
    // Predicated region
    $region14: #{deepdraft_forward.3} parent=1 // pred_check
      _
    $region15: #{deepdraft_forward.3} parent=1 // pred_check_branch
      %28 = sbr.rel (0) target = $region17
    $region16: #{deepdraft_forward.3} parent=1 // pred_region
      _
    $region17: #{deepdraft_forward.3} parent=1 // pred_fallthru
      _
    // Predicated region
    $region18: #{deepdraft_forward.3} parent=1 // pred_check
      _
    $region19: #{deepdraft_forward.3} parent=1 // pred_check_branch
      %30 = sbr.rel (0) target = $region21
    $region20: #{deepdraft_forward.3} parent=1 // pred_region
      _
    $region21: #{deepdraft_forward.3} parent=1 // pred_fallthru
      _
    // Predicated region
    $region22: #{deepdraft_forward.3} parent=1 // pred_check
      _
    $region23: #{deepdraft_forward.3} parent=1 // pred_check_branch
      %32 = sbr.rel (0) target = $region25
    $region24: #{deepdraft_forward.3} parent=1 // pred_region
      _
    $region25: #{deepdraft_forward.3} parent=1 // pred_fallthru
      _
    // Predicated region
    $region26: #{deepdraft_forward.3} parent=1 // pred_check
      _
    $region27: #{deepdraft_forward.3} parent=1 // pred_check_branch
      %34 = sbr.rel (0) target = $region29
    $region28: #{deepdraft_forward.3} parent=1 // pred_region
      _
    $region29: #{deepdraft_forward.3} parent=1 // pred_fallthru
      _
    // Predicated region
    $region30: #{deepdraft_forward.3} parent=1 // pred_check
      _
    $region31: #{deepdraft_forward.3} parent=1 // pred_check_branch
      %36 = sbr.rel (0) target = $region33
    $region32: #{deepdraft_forward.3} parent=1 // pred_region
      _
    $region33: #{deepdraft_forward.3} parent=1 // pred_fallthru
      _
    // Predicated region
    $region34: #{deepdraft_forward.3} parent=1 // pred_check
      _
    $region35: #{deepdraft_forward.3} parent=1 // pred_check_branch
      %38 = sbr.rel (0) target = $region37
    $region36: #{deepdraft_forward.3} parent=1 // pred_region
      _
    $region37: #{deepdraft_forward.3} parent=1 // pred_fallthru
      _
    // Predicated region
    $region38: #{deepdraft_forward.3} parent=1 // pred_check
      _
    $region39: #{deepdraft_forward.3} parent=1 // pred_check_branch
      %40 = sbr.rel (0) target = $region41
    $region40: #{deepdraft_forward.3} parent=1 // pred_region
      _
    $region41: #{deepdraft_forward.3} parent=1 // pred_fallthru
      _
    // Predicated region
    $region42: #{deepdraft_forward.3} parent=1 // pred_check
      _
    $region43: #{deepdraft_forward.3} parent=1 // pred_check_branch
      %42 = sbr.rel (0) target = $region45
    $region44: #{deepdraft_forward.3} parent=1 // pred_region
      _
    $region45: #{deepdraft_forward.3} parent=1 // pred_fallthru
      _
    // Predicated region
    $region46: #{deepdraft_forward.3} parent=1 // pred_check
      _
    $region47: #{deepdraft_forward.3} parent=1 // pred_check_branch
      %44 = sbr.rel (0) target = $region49
    $region48: #{deepdraft_forward.3} parent=1 // pred_region
      _
    $region49: #{deepdraft_forward.3} parent=1 // pred_fallthru
      _
    // Predicated region
    $region50: #{deepdraft_forward.3} parent=1 // pred_check
      _
    $region51: #{deepdraft_forward.3} parent=1 // pred_check_branch
      %46 = sbr.rel (0) target = $region53
    $region52: #{deepdraft_forward.3} parent=1 // pred_region
      _
    $region53: #{deepdraft_forward.3} parent=1 // pred_fallthru
      _
    %v48 = vld [vmem:[%s0] sm:$0x3]
    %v49 = vld [vmem:[%s1] sm:$0x1]
    %v50 = vld [vmem:[%s2] sm:$0x1]
    %vm51 = vcmask 254976
    %v52 = vsel %vm51, %v48, 0.0
    %53 = vadd.xlane.f32.xlu0 %v52
    %v54 = vpop.xlane.xlu0 %53
    %v55 = vrcp.pop 32.0
    %v56 = vmul.f32 %v54, %v55
    %v57 = vsub.f32 %v48, %v56
    %v58 = vmul.f32 %v57, %v57
    %v59 = vsel %vm51, %v58, 0.0
    %60 = vadd.xlane.f32.xlu0 %v59
    %v61 = vpop.xlane.xlu0 %60
    %v62 = vmul.f32 %v61, %v55
    %v63 = vadd.f32 %v62, 1e-12
    %v64 = vrsqrt.pop %v63
    %v65 = vmul.f32 %v57, %v64
    %v67 = vlaneseq
    %v68 = vshrl.u32 %v67, 7
    %v69 = vsub.s32 0, %v68
    %v70 = vrot.slane %v49, %v69
    %v72 = vmul.f32 %v65, %v70
    %v74 = vlaneseq
    %v75 = vshrl.u32 %v74, 7
    %v76 = vsub.s32 0, %v75
    %v77 = vrot.slane %v50, %v76
    %v79 = vadd.f32 %v72, %v77
    %v80 = vld [vmem:[%s3] sm:$0xf]
    %v81 = vld [vmem:[%s3 + $0x4] sm:$0xf]
    %v82 = vld [vmem:[%s3 + $0x8] sm:$0xf]
    %v83 = vld [vmem:[%s3 + $0xc] sm:$0xf]
    %v84 = vld [vmem:[%s4] sm:$0x1]
    %v85 = vpack.c.bf16 %v79, %v79
    %v87 = vlaneseq
    %v88 = vshrl.u32 %v87, 7
    %v89 = vsub.s32 0, %v88
    %v90 = vrot.slane %v84, %v89
    %v96 = vunpack.c.l.b16 %v80
    %v97 = vunpack.c.l.b16 %v81
    %v98 = vunpack.c.l.b16 %v82
    %v99 = vunpack.c.l.b16 %v83
    %v100 = vpack.c.b16 %v97, %v96
    %v101 = vpack.c.b16 %v99, %v98
    %vm104 = vcmask 261120
    %v106 = vsel %vm104, %v85, 0
    %108 = vmatprep.subr.bf16.mxu0 0
    %109 = vmatpush1.bf16.msra.mxu0 %v100
    %110 = vmatprep.subr.bf16.mxu0 0
    %111 = vmatpush1.bf16.msra.mxu0 %v101
    %112 = vmatprep.subr.bf16.mxu0 0
    %113 = vmatpush1.bf16.msra.mxu0 0
    %114 = vmatprep.subr.bf16.mxu0 0
    %115 = vmatpush1.bf16.msra.mxu0 0
    %116 = vmatprep.subr.bf16.mxu0 0
    %117 = vmatpush1.bf16.msra.mxu0 0
    %118 = vmatprep.subr.bf16.mxu0 0
    %119 = vmatpush1.bf16.msra.mxu0 0
    %120 = vmatprep.subr.bf16.mxu0 0
    %121 = vmatpush1.bf16.msra.mxu0 0
    %122 = vmatprep.subr.bf16.mxu0 0
    %123 = vmatpush1.bf16.msra.mxu0 0
    %124 = vmatprep.subr.bf16.mxu0 0
    %125 = vmatpush1.bf16.msra.mxu0 0
    %126 = vmatprep.subr.bf16.mxu0 0
    %127 = vmatpush1.bf16.msra.mxu0 0
    %128 = vmatprep.subr.bf16.mxu0 0
    %129 = vmatpush1.bf16.msra.mxu0 0
    %130 = vmatprep.subr.bf16.mxu0 0
    %131 = vmatpush1.bf16.msra.mxu0 0
    %132 = vmatprep.subr.bf16.mxu0 0
    %133 = vmatpush1.bf16.msra.mxu0 0
    %134 = vmatprep.subr.bf16.mxu0 0
    %135 = vmatpush1.bf16.msra.mxu0 0
    %136 = vmatprep.subr.bf16.mxu0 0
    %137 = vmatpush1.bf16.msra.mxu0 0
    %138 = vmatprep.subr.bf16.mxu0 0
    %139 = vmatpush1.bf16.msra.mxu0 0
    %140 = vmatprep.mubr.bf16.mxu0 0
    %141 = vmatmul.mubr.bf16.gmra.mrb[0].mxu0 %v106
    %v142 = vpop.f32.mrb[0].mxu0
    %v143 = vadd.f32 %v90, %v142
    %v144 = vpop.f32.mrb[0].mxu0
    %v145 = vpop.f32.mrb[0].mxu0
    %v146 = vpop.f32.mrb[0].mxu0
    %147 = vdwg.mxu0
    %v148 = vtanh.pop %v143
    %v149 = vld [vmem:[%s5] sm:$0xf]
    %v150 = vld [vmem:[%s5 + $0x4] sm:$0xf]
    %v151 = vld [vmem:[%s5 + $0x8] sm:$0xf]
    %v152 = vld [vmem:[%s5 + $0xc] sm:$0xf]
    %v153 = vld [vmem:[%s6] sm:$0x1]
    %v154 = vpack.c.bf16 %v148, %v148
    %v156 = vlaneseq
    %v157 = vshrl.u32 %v156, 7
    %v158 = vsub.s32 0, %v157
    %v159 = vrot.slane %v153, %v158
    %v165 = vunpack.c.l.b16 %v149
    %v166 = vunpack.c.l.b16 %v150
    %v167 = vunpack.c.l.b16 %v151
    %v168 = vunpack.c.l.b16 %v152
    %v169 = vpack.c.b16 %v166, %v165
    %v170 = vpack.c.b16 %v168, %v167
    %v174 = vsel %vm104, %v154, 0
    %176 = vmatprep.subr.bf16.mxu0 0
    %177 = vmatpush1.bf16.msra.mxu0 %v169
    %178 = vmatprep.subr.bf16.mxu0 0
    %179 = vmatpush1.bf16.msra.mxu0 %v170
    %180 = vmatprep.subr.bf16.mxu0 0
    %181 = vmatpush1.bf16.msra.mxu0 0
    %182 = vmatprep.subr.bf16.mxu0 0
    %183 = vmatpush1.bf16.msra.mxu0 0
    %184 = vmatprep.subr.bf16.mxu0 0
    %185 = vmatpush1.bf16.msra.mxu0 0
    %186 = vmatprep.subr.bf16.mxu0 0
    %187 = vmatpush1.bf16.msra.mxu0 0
    %188 = vmatprep.subr.bf16.mxu0 0
    %189 = vmatpush1.bf16.msra.mxu0 0
    %190 = vmatprep.subr.bf16.mxu0 0
    %191 = vmatpush1.bf16.msra.mxu0 0
    %192 = vmatprep.subr.bf16.mxu0 0
    %193 = vmatpush1.bf16.msra.mxu0 0
    %194 = vmatprep.subr.bf16.mxu0 0
    %195 = vmatpush1.bf16.msra.mxu0 0
    %196 = vmatprep.subr.bf16.mxu0 0
    %197 = vmatpush1.bf16.msra.mxu0 0
    %198 = vmatprep.subr.bf16.mxu0 0
    %199 = vmatpush1.bf16.msra.mxu0 0
    %200 = vmatprep.subr.bf16.mxu0 0
    %201 = vmatpush1.bf16.msra.mxu0 0
    %202 = vmatprep.subr.bf16.mxu0 0
    %203 = vmatpush1.bf16.msra.mxu0 0
    %204 = vmatprep.subr.bf16.mxu0 0
    %205 = vmatpush1.bf16.msra.mxu0 0
    %206 = vmatprep.subr.bf16.mxu0 0
    %207 = vmatpush1.bf16.msra.mxu0 0
    %208 = vmatprep.mubr.bf16.mxu0 0
    %209 = vmatmul.mubr.bf16.gmra.mrb[0].mxu0 %v174
    %v210 = vpop.f32.mrb[0].mxu0
    %v211 = vadd.f32 %v159, %v210
    %v212 = vpop.f32.mrb[0].mxu0
    %v213 = vpop.f32.mrb[0].mxu0
    %v214 = vpop.f32.mrb[0].mxu0
    %215 = vdwg.mxu0
    %216 = vst [vmem:[#allocation2] sm:$0x3] %v211
    %v217 = vld [vmem:[%s7] sm:$0xf]
    %v218 = vld [vmem:[%s7 + $0x4] sm:$0xf]
    %v219 = vld [vmem:[%s7 + $0x8] sm:$0xf]
    %v220 = vld [vmem:[%s7 + $0xc] sm:$0xf]
    %v221 = vld [vmem:[%s8] sm:$0x1]
    %v223 = vlaneseq
    %v224 = vshrl.u32 %v223, 7
    %v225 = vsub.s32 0, %v224
    %v226 = vrot.slane %v221, %v225
    %v232 = vunpack.c.l.b16 %v217
    %v233 = vunpack.c.l.b16 %v218
    %v234 = vunpack.c.l.b16 %v219
    %v235 = vunpack.c.l.b16 %v220
    %v236 = vpack.c.b16 %v233, %v232
    %v237 = vpack.c.b16 %v235, %v234
    %240 = vmatprep.subr.bf16.mxu0 0
    %241 = vmatpush1.bf16.msra.mxu0 %v236
    %242 = vmatprep.subr.bf16.mxu0 0
    %243 = vmatpush1.bf16.msra.mxu0 %v237
    %244 = vmatprep.subr.bf16.mxu0 0
    %245 = vmatpush1.bf16.msra.mxu0 0
    %246 = vmatprep.subr.bf16.mxu0 0
    %247 = vmatpush1.bf16.msra.mxu0 0
    %248 = vmatprep.subr.bf16.mxu0 0
    %249 = vmatpush1.bf16.msra.mxu0 0
    %250 = vmatprep.subr.bf16.mxu0 0
    %251 = vmatpush1.bf16.msra.mxu0 0
    %252 = vmatprep.subr.bf16.mxu0 0
    %253 = vmatpush1.bf16.msra.mxu0 0
    %254 = vmatprep.subr.bf16.mxu0 0
    %255 = vmatpush1.bf16.msra.mxu0 0
    %256 = vmatprep.subr.bf16.mxu0 0
    %257 = vmatpush1.bf16.msra.mxu0 0
    %258 = vmatprep.subr.bf16.mxu0 0
    %259 = vmatpush1.bf16.msra.mxu0 0
    %260 = vmatprep.subr.bf16.mxu0 0
    %261 = vmatpush1.bf16.msra.mxu0 0
    %262 = vmatprep.subr.bf16.mxu0 0
    %263 = vmatpush1.bf16.msra.mxu0 0
    %264 = vmatprep.subr.bf16.mxu0 0
    %265 = vmatpush1.bf16.msra.mxu0 0
    %266 = vmatprep.subr.bf16.mxu0 0
    %267 = vmatpush1.bf16.msra.mxu0 0
    %268 = vmatprep.subr.bf16.mxu0 0
    %269 = vmatpush1.bf16.msra.mxu0 0
    %270 = vmatprep.subr.bf16.mxu0 0
    %271 = vmatpush1.bf16.msra.mxu0 0
    %272 = vmatprep.mubr.bf16.mxu0 0
    %273 = vmatmul.mubr.bf16.gmra.mrb[0].mxu0 %v106
    %v274 = vpop.f32.mrb[0].mxu0
    %v275 = vadd.f32 %v226, %v274
    %v276 = vpop.f32.mrb[0].mxu0
    %v277 = vpop.f32.mrb[0].mxu0
    %v278 = vpop.f32.mrb[0].mxu0
    %279 = vdwg.mxu0
    %v280 = vmax.f32 %v275, 0.0
    %v281 = vld [vmem:[%s9] sm:$0xff]
    %v282 = vld [vmem:[%s9 + $0x8] sm:$0xff]
    %v283 = vld [vmem:[%s9 + $0x10] sm:$0xff]
    %v284 = vld [vmem:[%s9 + $0x18] sm:$0xff]
    %v285 = vld [vmem:[%s10] sm:$0x3]
    %v286 = vpack.c.bf16 %v280, %v280
    %v288 = vlaneseq
    %v289 = vshrl.u32 %v288, 7
    %v290 = vsub.s32 0, %v289
    %v291 = vrot.slane %v285, %v290
    %v292 = vlaneseq
    %v293 = vshrl.u32 %v292, 7
    %v294 = vsub.s32 1, %v293
    %v295 = vrot.slane %v285, %v294
    %v302 = vunpack.c.l.b16 %v281
    %v303 = vunpack.c.h.b16 %v281
    %v304 = vunpack.c.l.b16 %v282
    %v305 = vunpack.c.h.b16 %v282
    %v306 = vunpack.c.l.b16 %v283
    %v307 = vunpack.c.h.b16 %v283
    %v308 = vunpack.c.l.b16 %v284
    %v309 = vunpack.c.h.b16 %v284
    %v310 = vpack.c.b16 %v304, %v302
    %v311 = vpack.c.b16 %v305, %v303
    %v312 = vpack.c.b16 %v308, %v306
    %v313 = vpack.c.b16 %v309, %v307
    %v319 = vsel %vm104, %v286, 0
    %321 = vmatprep.subr.bf16.mxu0 %v311
    %322 = vmatpush1.bf16.msra.mxu0 %v310
    %323 = vmatprep.subr.bf16.mxu0 %v313
    %324 = vmatpush1.bf16.msra.mxu0 %v312
    %325 = vmatprep.subr.bf16.mxu0 0
    %326 = vmatpush1.bf16.msra.mxu0 0
    %327 = vmatprep.subr.bf16.mxu0 0
    %328 = vmatpush1.bf16.msra.mxu0 0
    %329 = vmatprep.subr.bf16.mxu0 0
    %330 = vmatpush1.bf16.msra.mxu0 0
    %331 = vmatprep.subr.bf16.mxu0 0
    %332 = vmatpush1.bf16.msra.mxu0 0
    %333 = vmatprep.subr.bf16.mxu0 0
    %334 = vmatpush1.bf16.msra.mxu0 0
    %335 = vmatprep.subr.bf16.mxu0 0
    %336 = vmatpush1.bf16.msra.mxu0 0
    %337 = vmatprep.subr.bf16.mxu0 0
    %338 = vmatpush1.bf16.msra.mxu0 0
    %339 = vmatprep.subr.bf16.mxu0 0
    %340 = vmatpush1.bf16.msra.mxu0 0
    %341 = vmatprep.subr.bf16.mxu0 0
    %342 = vmatpush1.bf16.msra.mxu0 0
    %343 = vmatprep.subr.bf16.mxu0 0
    %344 = vmatpush1.bf16.msra.mxu0 0
    %345 = vmatprep.subr.bf16.mxu0 0
    %346 = vmatpush1.bf16.msra.mxu0 0
    %347 = vmatprep.subr.bf16.mxu0 0
    %348 = vmatpush1.bf16.msra.mxu0 0
    %349 = vmatprep.subr.bf16.mxu0 0
    %350 = vmatpush1.bf16.msra.mxu0 0
    %351 = vmatprep.subr.bf16.mxu0 0
    %352 = vmatpush1.bf16.msra.mxu0 0
    %353 = vmatprep.mubr.bf16.mxu0 0
    %354 = vmatmul.mubr.bf16.gmra.mrb[0].mxu0 %v319
    %v355 = vpop.f32.mrb[0].mxu0
    %v356 = vadd.f32 %v291, %v355
    %v357 = vpop.f32.mrb[0].mxu0
    %v358 = vadd.f32 %v295, %v357
    %v359 = vpop.f32.mrb[0].mxu0
    %v360 = vpop.f32.mrb[0].mxu0
    %361 = vdwg.mxu0
    %v362 = vmax.f32 %v356, 0.0
    %v363 = vmax.f32 %v358, 0.0
    %v364 = vld [vmem:[%s11] sm:$0xf]
    %v365 = vld [vmem:[%s11 + $0x4] sm:$0xf]
    %v366 = vld [vmem:[%s11 + $0x8] sm:$0xf]
    %v367 = vld [vmem:[%s11 + $0xc] sm:$0xf]
    %v368 = vld [vmem:[%s11 + $0x10] sm:$0xf]
    %v369 = vld [vmem:[%s11 + $0x14] sm:$0xf]
    %v370 = vld [vmem:[%s11 + $0x18] sm:$0xf]
    %v371 = vld [vmem:[%s11 + $0x1c] sm:$0xf]
    %v372 = vld [vmem:[%s11 + $0x20] sm:$0xf]
    %v373 = vld [vmem:[%s11 + $0x24] sm:$0xf]
    %v374 = vld [vmem:[%s11 + $0x28] sm:$0xf]
    %v375 = vld [vmem:[%s11 + $0x2c] sm:$0xf]
    %v376 = vld [vmem:[%s11 + $0x30] sm:$0xf]
    %v377 = vld [vmem:[%s11 + $0x34] sm:$0xf]
    %v378 = vld [vmem:[%s11 + $0x38] sm:$0xf]
    %v379 = vld [vmem:[%s11 + $0x3c] sm:$0xf]
    %v380 = vld [vmem:[%s11 + $0x40] sm:$0xf]
    %v381 = vld [vmem:[%s11 + $0x44] sm:$0xf]
    %v382 = vld [vmem:[%s11 + $0x48] sm:$0xf]
    %v383 = vld [vmem:[%s11 + $0x4c] sm:$0xf]
    %v384 = vld [vmem:[%s11 + $0x50] sm:$0xf]
    %v385 = vld [vmem:[%s11 + $0x54] sm:$0xf]
    %v386 = vld [vmem:[%s11 + $0x58] sm:$0xf]
    %v387 = vld [vmem:[%s11 + $0x5c] sm:$0xf]
    %v388 = vld [vmem:[%s11 + $0x60] sm:$0xf]
    %v389 = vld [vmem:[%s11 + $0x64] sm:$0xf]
    %v390 = vld [vmem:[%s11 + $0x68] sm:$0xf]
    %v391 = vld [vmem:[%s11 + $0x6c] sm:$0xf]
    %v392 = vld [vmem:[%s11 + $0x70] sm:$0xf]
    %v393 = vld [vmem:[%s11 + $0x74] sm:$0xf]
    %v394 = vld [vmem:[%s11 + $0x78] sm:$0xf]
    %v395 = vld [vmem:[%s11 + $0x7c] sm:$0xf]
    %v396 = vld [vmem:[%s12] sm:$0x1]
    %v397 = vpack.c.bf16 %v362, %v362
    %v398 = vpack.c.bf16 %v363, %v363
    %v400 = vlaneseq
    %v401 = vshrl.u32 %v400, 7
    %v402 = vsub.s32 0, %v401
    %v403 = vrot.slane %v396, %v402
    %v437 = vunpack.c.l.b16 %v364
    %v438 = vunpack.c.l.b16 %v365
    %v439 = vunpack.c.l.b16 %v366
    %v440 = vunpack.c.l.b16 %v367
    %v441 = vunpack.c.l.b16 %v368
    %v442 = vunpack.c.l.b16 %v369
    %v443 = vunpack.c.l.b16 %v370
    %v444 = vunpack.c.l.b16 %v371
    %v445 = vunpack.c.l.b16 %v372
    %v446 = vunpack.c.l.b16 %v373
    %v447 = vunpack.c.l.b16 %v374
    %v448 = vunpack.c.l.b16 %v375
    %v449 = vunpack.c.l.b16 %v376
    %v450 = vunpack.c.l.b16 %v377
    %v451 = vunpack.c.l.b16 %v378
    %v452 = vunpack.c.l.b16 %v379
    %v453 = vunpack.c.l.b16 %v380
    %v454 = vunpack.c.l.b16 %v381
    %v455 = vunpack.c.l.b16 %v382
    %v456 = vunpack.c.l.b16 %v383
    %v457 = vunpack.c.l.b16 %v384
    %v458 = vunpack.c.l.b16 %v385
    %v459 = vunpack.c.l.b16 %v386
    %v460 = vunpack.c.l.b16 %v387
    %v461 = vunpack.c.l.b16 %v388
    %v462 = vunpack.c.l.b16 %v389
    %v463 = vunpack.c.l.b16 %v390
    %v464 = vunpack.c.l.b16 %v391
    %v465 = vunpack.c.l.b16 %v392
    %v466 = vunpack.c.l.b16 %v393
    %v467 = vunpack.c.l.b16 %v394
    %v468 = vunpack.c.l.b16 %v395
    %v469 = vpack.c.b16 %v438, %v437
    %v470 = vpack.c.b16 %v440, %v439
    %v471 = vpack.c.b16 %v442, %v441
    %v472 = vpack.c.b16 %v444, %v443
    %v473 = vpack.c.b16 %v446, %v445
    %v474 = vpack.c.b16 %v448, %v447
    %v475 = vpack.c.b16 %v450, %v449
    %v476 = vpack.c.b16 %v452, %v451
    %v477 = vpack.c.b16 %v454, %v453
    %v478 = vpack.c.b16 %v456, %v455
    %v479 = vpack.c.b16 %v458, %v457
    %v480 = vpack.c.b16 %v460, %v459
    %v481 = vpack.c.b16 %v462, %v461
    %v482 = vpack.c.b16 %v464, %v463
    %v483 = vpack.c.b16 %v466, %v465
    %v484 = vpack.c.b16 %v468, %v467
    %501 = vmatprep.subr.bf16.mxu0 0
    %502 = vmatpush1.bf16.msra.mxu0 %v469
    %503 = vmatprep.subr.bf16.mxu0 0
    %504 = vmatpush1.bf16.msra.mxu0 %v470
    %505 = vmatprep.subr.bf16.mxu0 0
    %506 = vmatpush1.bf16.msra.mxu0 %v471
    %507 = vmatprep.subr.bf16.mxu0 0
    %508 = vmatpush1.bf16.msra.mxu0 %v472
    %509 = vmatprep.subr.bf16.mxu0 0
    %510 = vmatpush1.bf16.msra.mxu0 %v473
    %511 = vmatprep.subr.bf16.mxu0 0
    %512 = vmatpush1.bf16.msra.mxu0 %v474
    %513 = vmatprep.subr.bf16.mxu0 0
    %514 = vmatpush1.bf16.msra.mxu0 %v475
    %515 = vmatprep.subr.bf16.mxu0 0
    %516 = vmatpush1.bf16.msra.mxu0 %v476
    %517 = vmatprep.subr.bf16.mxu0 0
    %518 = vmatpush1.bf16.msra.mxu0 %v477
    %519 = vmatprep.subr.bf16.mxu0 0
    %520 = vmatpush1.bf16.msra.mxu0 %v478
    %521 = vmatprep.subr.bf16.mxu0 0
    %522 = vmatpush1.bf16.msra.mxu0 %v479
    %523 = vmatprep.subr.bf16.mxu0 0
    %524 = vmatpush1.bf16.msra.mxu0 %v480
    %525 = vmatprep.subr.bf16.mxu0 0
    %526 = vmatpush1.bf16.msra.mxu0 %v481
    %527 = vmatprep.subr.bf16.mxu0 0
    %528 = vmatpush1.bf16.msra.mxu0 %v482
    %529 = vmatprep.subr.bf16.mxu0 0
    %530 = vmatpush1.bf16.msra.mxu0 %v483
    %531 = vmatprep.subr.bf16.mxu0 0
    %532 = vmatpush1.bf16.msra.mxu0 %v484
    %533 = vmatprep.mubr.bf16.mxu0 %v398
    %534 = vmatmul.mubr.bf16.gmra.mrb[0].mxu0 %v397
    %v535 = vpop.f32.mrb[0].mxu0
    %v536 = vadd.f32 %v403, %v535
    %v537 = vpop.f32.mrb[0].mxu0
    %v538 = vpop.f32.mrb[0].mxu0
    %v539 = vpop.f32.mrb[0].mxu0
    %540 = vdwg.mxu0
    %541 = vst [vmem:[%s14] sm:$0x3] %v536
    // Predicated region
    $region54: #{deepdraft_forward.3} parent=1 // pred_check
      _
    $region55: #{deepdraft_forward.3} parent=1 // pred_check_branch
      %543 = sbr.rel (0) target = $region57
    $region56: #{deepdraft_forward.3} parent=1 // pred_region
      %s545 = ssub.s32 32, 32
      %546 = vsyncadd [#allocation3], %s545
      %s548 = sshll.u32 [#allocation2], 4
      %s549 = int_to_ptr.vmem [resolvable:$true] %s548
      %551 = dma.vmem_to_hbm [thread:$0]  %s549, 32, %s13, [#allocation3]
    $region57: #{deepdraft_forward.3} parent=1 // pred_fallthru
      _
    // Predicated region
    $region58: #{deepdraft_forward.3} parent=1 // pred_check
      _
    $region59: #{deepdraft_forward.3} parent=1 // pred_check_branch
      %553 = sbr.rel (0) target = $region61
    $region60: #{deepdraft_forward.3} parent=1 // pred_region
      _
    $region61: #{deepdraft_forward.3} parent=1 // pred_fallthru
      _
    // Predicated region
    $region62: #{deepdraft_forward.3} parent=1 // pred_check
      _
    $region63: #{deepdraft_forward.3} parent=1 // pred_check_branch
      %555 = sbr.rel (0) target = $region65
    $region64: #{deepdraft_forward.3} parent=1 // pred_region
      %556 = dma.done [#allocation3], 32
    $region65: #{deepdraft_forward.3} parent=1 // pred_fallthru
      _
    // Predicated region
    $region66: #{deepdraft_forward.3} parent=1 // pred_check
      _
    $region67: #{deepdraft_forward.3} parent=1 // pred_check_branch
      %558 = sbr.rel (0) target = $region69
    $region68: #{deepdraft_forward.3} parent=1 // pred_region
      _
    $region69: #{deepdraft_forward.3} parent=1 // pred_fallthru
      _
    %559 = vsyncpa [#allocation3], 1

// kernel: deepdraft_forward.2
$region0: #{deepdraft_forward.2}
  #allocation0 [shape = 'u32[]', space=smem, size = 0x4, offset = 0x4, fixed_abs, tag = 'smem constant byte address 0x4 - core index']
  #allocation1 [shape = 'u32[144,128]{1,0:T(1,128)}', space=vmem, size = 0x12000, scoped, tag = 'internal scratch']
  #allocation2 [shape = 'f32[18,32]{1,0:T(8,128)}', space=vmem, size = 0x3000, scoped, tag = 'scratch operand']
  #allocation3 [shape = 'bf16[18,32]{1,0:T(8,128)(2,1)}', space=vmem, size = 0x1800, scoped, tag = 'scratch operand']
  %s0 = inlined_call_operand.vmem [shape: f32[2,16], index: 0, kind: input, shape index: {}]
  %s1 = inlined_call_operand.vmem [shape: f32[2,5,8], index: 1, kind: input, shape index: {}]
  %s2 = inlined_call_operand.vmem [shape: f32[2,3,12], index: 2, kind: input, shape index: {}]
  %s3 = inlined_call_operand.hbm [shape: bf16[16,32], index: 3, kind: input, shape index: {}]
  %s4 = inlined_call_operand.hbm [shape: f32[1,32], index: 4, kind: input, shape index: {}]
  %s5 = inlined_call_operand.hbm [shape: bf16[8,32], index: 5, kind: input, shape index: {}]
  %s6 = inlined_call_operand.hbm [shape: f32[1,32], index: 6, kind: input, shape index: {}]
  %s7 = inlined_call_operand.hbm [shape: bf16[12,32], index: 7, kind: input, shape index: {}]
  %s8 = inlined_call_operand.hbm [shape: f32[1,32], index: 8, kind: input, shape index: {}]
  %s9 = inlined_call_operand.vmem [shape: f32[9,32], index: 9, kind: input, shape index: {}]
  %s10 = inlined_call_operand.hbm [shape: f32[1,32], index: 10, kind: input, shape index: {}]
  %s11 = inlined_call_operand.hbm [shape: f32[1,32], index: 11, kind: input, shape index: {}]
  %s12 = inlined_call_operand.vmem [shape: bf16[2,32,96], index: 12, kind: input, shape index: {}]
  %s13 = inlined_call_operand.vmem [shape: bf16[2,32,32], index: 13, kind: input, shape index: {}]
  %s14 = inlined_call_operand.vmem [shape: bf16[2,32,64], index: 14, kind: input, shape index: {}]
  %s15 = inlined_call_operand.vmem [shape: bf16[2,64,32], index: 15, kind: input, shape index: {}]
  %s16 = inlined_call_operand.vmem [shape: f32[2,8,96], index: 16, kind: input, shape index: {}]
  %s17 = inlined_call_operand.vmem [shape: f32[2,32], index: 17, kind: output, shape index: {}]
  %s18 = sld [smem:[#allocation0]]
  $region141: #{deepdraft_forward.2} parent=0
    _
  %s20 = ssub.s32 1, %s18
  %s21 = scalar_select 0, %s20, %s18
  $region1: #{deepdraft_forward.2} parent=0
    #allocation4 [shape = 'u8[4096]{0}', space=vmem, size = 0x1000, scoped, tag = 'input window, operand 3, single buffered']
    #allocation5 [shape = 's32[2]{0}', space=sflag, size = 0x8, scoped, tag = 'scoped memory for deepdraft_forward.2']
    #allocation6 [shape = 'u8[512]{0}', space=vmem, size = 0x400, scoped, tag = 'input window, operand 4, single buffered']
    #allocation7 [shape = 's32[1]{0}', space=sflag, size = 0x4, scoped, tag = 'scoped memory for deepdraft_forward.2']
    #allocation8 [shape = 'u8[2048]{0}', space=vmem, size = 0x800, scoped, tag = 'input window, operand 5, single buffered']
    #allocation9 [shape = 'u8[512]{0}', space=vmem, size = 0x400, scoped, tag = 'input window, operand 6, single buffered']
    #allocation10 [shape = 's32[1]{0}', space=sflag, size = 0x4, scoped, tag = 'scoped memory for deepdraft_forward.2']
    #allocation11 [shape = 'u8[4096]{0}', space=vmem, size = 0x1000, scoped, tag = 'input window, operand 7, single buffered']
    #allocation12 [shape = 'u8[512]{0}', space=vmem, size = 0x400, scoped, tag = 'input window, operand 8, single buffered']
    #allocation13 [shape = 's32[1]{0}', space=sflag, size = 0x4, scoped, tag = 'scoped memory for deepdraft_forward.2']
    #allocation14 [shape = 'u8[512]{0}', space=vmem, size = 0x400, scoped, tag = 'input window, operand 10, single buffered']
    #allocation15 [shape = 'u8[512]{0}', space=vmem, size = 0x400, scoped, tag = 'input window, operand 11, single buffered']
    #allocation16 [shape = 's32[1]{0}', space=sflag, size = 0x4, scoped, tag = 'scoped memory for deepdraft_forward.2']
    %22 = vsyncpa [#allocation5], 0
    %23 = vsyncpa [#allocation7], 0
    %24 = vsyncpa [#allocation10], 0
    %25 = vsyncpa [#allocation13], 0
    %26 = vsyncpa [#allocation16], 0
    loop: start=0, step=1, limit=4
    $region2: #{deepdraft_forward.2} parent=1 // loop_pre_header
      _
    $region3: #{deepdraft_forward.2} parent=1 // loop_header
      %s28 = sphi 0, %s32
      %p29 = scmp.ge.s32.totalorder %s28, 4
      %s36 = sphi 0, %s36
      %s38 = sphi 0, %s36
      %s39 = sphi 0, %s38
      %s53 = sphi 0, %s39
      %s57 = sphi 0, %s57
      %s59 = sphi 0, %s57
      %s60 = sphi 0, %s59
      %s74 = sphi 0, %s60
      %s78 = sphi 0, %s78
      %s80 = sphi 0, %s78
      %s81 = sphi 0, %s80
      %s95 = sphi 0, %s81
      %s99 = sphi 0, %s99
      %s101 = sphi 0, %s99
      %s102 = sphi 0, %s101
      %s116 = sphi 0, %s102
      %s120 = sphi 0, %s120
      %s122 = sphi 0, %s120
      %s123 = sphi 0, %s122
      %s137 = sphi 0, %s123
      %s141 = sphi 0, %s141
      %s143 = sphi 0, %s141
      %s144 = sphi 0, %s143
      %s158 = sphi 0, %s144
      %s162 = sphi 0, %s162
      %s164 = sphi 0, %s162
      %s165 = sphi 0, %s164
      %s179 = sphi 0, %s165
      %s183 = sphi 0, %s183
      %s185 = sphi 0, %s183
      %s186 = sphi 0, %s185
      %s200 = sphi 0, %s186
      %s204 = sphi 0, %s204
      %s206 = sphi 0, %s204
      %s207 = sphi 0, %s206
      %s221 = sphi 0, %s207
      %s225 = sphi 0, %s225
      %s227 = sphi 0, %s225
      %s228 = sphi 0, %s227
      %s242 = sphi 0, %s228
      %s246 = sphi 0, %s246
      %s248 = sphi 0, %s246
      %s249 = sphi 0, %s248
      %s263 = sphi 0, %s249
      %s267 = sphi 0, %s267
      %s269 = sphi 0, %s267
      %s270 = sphi 0, %s269
      %s284 = sphi 0, %s270
      %s290 = sphi 0, %s292
      %s293 = sphi 0, %s290
      %s294 = sphi 0, %s293
      %s310 = sphi 0, %s294
      %s316 = sphi 0, %s318
      %s319 = sphi 0, %s316
      %s320 = sphi 0, %s319
      %s336 = sphi 0, %s320
      %s342 = sphi 0, %s344
      %s345 = sphi 0, %s342
      %s346 = sphi 0, %s345
      %s362 = sphi 0, %s346
      %s368 = sphi 0, %s370
      %s371 = sphi 0, %s368
      %s372 = sphi 0, %s371
      %s388 = sphi 0, %s372
      %s394 = sphi 0, %s396
      %s397 = sphi 0, %s394
      %s398 = sphi 0, %s397
      %s414 = sphi 0, %s398
      %s418 = sphi 0, %s418
      %s420 = sphi 0, %s418
      %s421 = sphi 0, %s420
      %s435 = sphi 0, %s421
    $region4: #{deepdraft_forward.2} parent=1 // loop_header_branch
      %31 = sbr.rel (%p29) target = $region8
    $region5: #{deepdraft_forward.2} parent=1 // loop_body
      %s33 = ssub.s32 %s28, 1
      %s34 = ssub.s32 %s28, 2
      %s35 = sadd.s32 %s28, 1
      %s37 = sadd.s32 %s36, 1
      %p40 = scmp.eq.s32.totalorder %s28, 1
      %p41 = scmp.ne.s32.totalorder %s36, %s38
      %p42 = scmp.eq.s32.totalorder %s28, 0
      %p43 = por %p41, %p42
      %p44 = scmp.ne.s32.totalorder %s36, %s38
      %p45 = scmp.eq.s32.totalorder %s33, 1
      %p46 = por %p44, %p45
      %p47 = scmp.ne.s32.totalorder %s38, %s39
      %p48 = scmp.eq.s32.totalorder %s33, 0
      %p49 = por %p47, %p48
      %p50 = scmp.ne.s32.totalorder %s38, %s39
      %p51 = scmp.eq.s32.totalorder %s34, 1
      %p52 = por %p50, %p51
      %p54 = scmp.ne.s32.totalorder %s39, %s53
      %p55 = scmp.eq.s32.totalorder %s34, 0
      %p56 = por %p54, %p55
      %s58 = sadd.s32 %s57, 1
      %p61 = scmp.eq.s32.totalorder %s28, 1
      %p62 = scmp.ne.s32.totalorder %s57, %s59
      %p63 = scmp.eq.s32.totalorder %s28, 0
      %p64 = por %p62, %p63
      %p65 = scmp.ne.s32.totalorder %s57, %s59
      %p66 = scmp.eq.s32.totalorder %s33, 1
      %p67 = por %p65, %p66
      %p68 = scmp.ne.s32.totalorder %s59, %s60
      %p69 = scmp.eq.s32.totalorder %s33, 0
      %p70 = por %p68, %p69
      %p71 = scmp.ne.s32.totalorder %s59, %s60
      %p72 = scmp.eq.s32.totalorder %s34, 1
      %p73 = por %p71, %p72
      %p75 = scmp.ne.s32.totalorder %s60, %s74
      %p76 = scmp.eq.s32.totalorder %s34, 0
      %p77 = por %p75, %p76
      %s79 = sadd.s32 %s78, 1
      %p82 = scmp.eq.s32.totalorder %s28, 1
      %p83 = scmp.ne.s32.totalorder %s78, %s80
      %p84 = scmp.eq.s32.totalorder %s28, 0
      %p85 = por %p83, %p84
      %p86 = scmp.ne.s32.totalorder %s78, %s80
      %p87 = scmp.eq.s32.totalorder %s33, 1
      %p88 = por %p86, %p87
      %p89 = scmp.ne.s32.totalorder %s80, %s81
      %p90 = scmp.eq.s32.totalorder %s33, 0
      %p91 = por %p89, %p90
      %p92 = scmp.ne.s32.totalorder %s80, %s81
      %p93 = scmp.eq.s32.totalorder %s34, 1
      %p94 = por %p92, %p93
      %p96 = scmp.ne.s32.totalorder %s81, %s95
      %p97 = scmp.eq.s32.totalorder %s34, 0
      %p98 = por %p96, %p97
      %s100 = sadd.s32 %s99, 1
      %p103 = scmp.eq.s32.totalorder %s28, 1
      %p104 = scmp.ne.s32.totalorder %s99, %s101
      %p105 = scmp.eq.s32.totalorder %s28, 0
      %p106 = por %p104, %p105
      %p107 = scmp.ne.s32.totalorder %s99, %s101
      %p108 = scmp.eq.s32.totalorder %s33, 1
      %p109 = por %p107, %p108
      %p110 = scmp.ne.s32.totalorder %s101, %s102
      %p111 = scmp.eq.s32.totalorder %s33, 0
      %p112 = por %p110, %p111
      %p113 = scmp.ne.s32.totalorder %s101, %s102
      %p114 = scmp.eq.s32.totalorder %s34, 1
      %p115 = por %p113, %p114
      %p117 = scmp.ne.s32.totalorder %s102, %s116
      %p118 = scmp.eq.s32.totalorder %s34, 0
      %p119 = por %p117, %p118
      %s121 = sadd.s32 %s120, 1
      %p124 = scmp.eq.s32.totalorder %s28, 1
      %p125 = scmp.ne.s32.totalorder %s120, %s122
      %p126 = scmp.eq.s32.totalorder %s28, 0
      %p127 = por %p125, %p126
      %p128 = scmp.ne.s32.totalorder %s120, %s122
      %p129 = scmp.eq.s32.totalorder %s33, 1
      %p130 = por %p128, %p129
      %p131 = scmp.ne.s32.totalorder %s122, %s123
      %p132 = scmp.eq.s32.totalorder %s33, 0
      %p133 = por %p131, %p132
      %p134 = scmp.ne.s32.totalorder %s122, %s123
      %p135 = scmp.eq.s32.totalorder %s34, 1
      %p136 = por %p134, %p135
      %p138 = scmp.ne.s32.totalorder %s123, %s137
      %p139 = scmp.eq.s32.totalorder %s34, 0
      %p140 = por %p138, %p139
      %s142 = sadd.s32 %s141, 1
      %p145 = scmp.eq.s32.totalorder %s28, 1
      %p146 = scmp.ne.s32.totalorder %s141, %s143
      %p147 = scmp.eq.s32.totalorder %s28, 0
      %p148 = por %p146, %p147
      %p149 = scmp.ne.s32.totalorder %s141, %s143
      %p150 = scmp.eq.s32.totalorder %s33, 1
      %p151 = por %p149, %p150
      %p152 = scmp.ne.s32.totalorder %s143, %s144
      %p153 = scmp.eq.s32.totalorder %s33, 0
      %p154 = por %p152, %p153
      %p155 = scmp.ne.s32.totalorder %s143, %s144
      %p156 = scmp.eq.s32.totalorder %s34, 1
      %p157 = por %p155, %p156
      %p159 = scmp.ne.s32.totalorder %s144, %s158
      %p160 = scmp.eq.s32.totalorder %s34, 0
      %p161 = por %p159, %p160
      %s163 = sadd.s32 %s162, 1
      %p166 = scmp.eq.s32.totalorder %s28, 1
      %p167 = scmp.ne.s32.totalorder %s162, %s164
      %p168 = scmp.eq.s32.totalorder %s28, 0
      %p169 = por %p167, %p168
      %p170 = scmp.ne.s32.totalorder %s162, %s164
      %p171 = scmp.eq.s32.totalorder %s33, 1
      %p172 = por %p170, %p171
      %p173 = scmp.ne.s32.totalorder %s164, %s165
      %p174 = scmp.eq.s32.totalorder %s33, 0
      %p175 = por %p173, %p174
      %p176 = scmp.ne.s32.totalorder %s164, %s165
      %p177 = scmp.eq.s32.totalorder %s34, 1
      %p178 = por %p176, %p177
      %p180 = scmp.ne.s32.totalorder %s165, %s179
      %p181 = scmp.eq.s32.totalorder %s34, 0
      %p182 = por %p180, %p181
      %s184 = sadd.s32 %s183, 1
      %p187 = scmp.eq.s32.totalorder %s28, 1
      %p188 = scmp.ne.s32.totalorder %s183, %s185
      %p189 = scmp.eq.s32.totalorder %s28, 0
      %p190 = por %p188, %p189
      %p191 = scmp.ne.s32.totalorder %s183, %s185
      %p192 = scmp.eq.s32.totalorder %s33, 1
      %p193 = por %p191, %p192
      %p194 = scmp.ne.s32.totalorder %s185, %s186
      %p195 = scmp.eq.s32.totalorder %s33, 0
      %p196 = por %p194, %p195
      %p197 = scmp.ne.s32.totalorder %s185, %s186
      %p198 = scmp.eq.s32.totalorder %s34, 1
      %p199 = por %p197, %p198
      %p201 = scmp.ne.s32.totalorder %s186, %s200
      %p202 = scmp.eq.s32.totalorder %s34, 0
      %p203 = por %p201, %p202
      %s205 = sadd.s32 %s204, 1
      %p208 = scmp.eq.s32.totalorder %s28, 1
      %p209 = scmp.ne.s32.totalorder %s204, %s206
      %p210 = scmp.eq.s32.totalorder %s28, 0
      %p211 = por %p209, %p210
      %p212 = scmp.ne.s32.totalorder %s204, %s206
      %p213 = scmp.eq.s32.totalorder %s33, 1
      %p214 = por %p212, %p213
      %p215 = scmp.ne.s32.totalorder %s206, %s207
      %p216 = scmp.eq.s32.totalorder %s33, 0
      %p217 = por %p215, %p216
      %p218 = scmp.ne.s32.totalorder %s206, %s207
      %p219 = scmp.eq.s32.totalorder %s34, 1
      %p220 = por %p218, %p219
      %p222 = scmp.ne.s32.totalorder %s207, %s221
      %p223 = scmp.eq.s32.totalorder %s34, 0
      %p224 = por %p222, %p223
      %s226 = sadd.s32 %s225, 1
      %p229 = scmp.eq.s32.totalorder %s28, 1
      %p230 = scmp.ne.s32.totalorder %s225, %s227
      %p231 = scmp.eq.s32.totalorder %s28, 0
      %p232 = por %p230, %p231
      %p233 = scmp.ne.s32.totalorder %s225, %s227
      %p234 = scmp.eq.s32.totalorder %s33, 1
      %p235 = por %p233, %p234
      %p236 = scmp.ne.s32.totalorder %s227, %s228
      %p237 = scmp.eq.s32.totalorder %s33, 0
      %p238 = por %p236, %p237
      %p239 = scmp.ne.s32.totalorder %s227, %s228
      %p240 = scmp.eq.s32.totalorder %s34, 1
      %p241 = por %p239, %p240
      %p243 = scmp.ne.s32.totalorder %s228, %s242
      %p244 = scmp.eq.s32.totalorder %s34, 0
      %p245 = por %p243, %p244
      %s247 = sadd.s32 %s246, 1
      %p250 = scmp.eq.s32.totalorder %s28, 1
      %p251 = scmp.ne.s32.totalorder %s246, %s248
      %p252 = scmp.eq.s32.totalorder %s28, 0
      %p253 = por %p251, %p252
      %p254 = scmp.ne.s32.totalorder %s246, %s248
      %p255 = scmp.eq.s32.totalorder %s33, 1
      %p256 = por %p254, %p255
      %p257 = scmp.ne.s32.totalorder %s248, %s249
      %p258 = scmp.eq.s32.totalorder %s33, 0
      %p259 = por %p257, %p258
      %p260 = scmp.ne.s32.totalorder %s248, %s249
      %p261 = scmp.eq.s32.totalorder %s34, 1
      %p262 = por %p260, %p261
      %p264 = scmp.ne.s32.totalorder %s249, %s263
      %p265 = scmp.eq.s32.totalorder %s34, 0
      %p266 = por %p264, %p265
      %s268 = sadd.s32 %s267, 1
      %p271 = scmp.eq.s32.totalorder %s28, 1
      %p272 = scmp.ne.s32.totalorder %s267, %s269
      %p273 = scmp.eq.s32.totalorder %s28, 0
      %p274 = por %p272, %p273
      %p275 = scmp.ne.s32.totalorder %s267, %s269
      %p276 = scmp.eq.s32.totalorder %s33, 1
      %p277 = por %p275, %p276
      %p278 = scmp.ne.s32.totalorder %s269, %s270
      %p279 = scmp.eq.s32.totalorder %s33, 0
      %p280 = por %p278, %p279
      %p281 = scmp.ne.s32.totalorder %s269, %s270
      %p282 = scmp.eq.s32.totalorder %s34, 1
      %p283 = por %p281, %p282
      %p285 = scmp.ne.s32.totalorder %s270, %s284
      %p286 = scmp.eq.s32.totalorder %s34, 0
      %p287 = por %p285, %p286
      %s288 = ssub.s32 %s28, %s35
      %p289 = scmp.eq.s32.totalorder %s288, 0
      %s291 = sadd.s32 %s290, 1
      %s292 = scalar_select %p289, %s290, %s291
      %p295 = pneg %p289
      %p296 = scmp.eq.s32.totalorder %s28, 1
      %p297 = por %p295, %p296
      %p298 = scmp.ne.s32.totalorder %s290, %s293
      %p299 = scmp.eq.s32.totalorder %s28, 0
      %p300 = por %p298, %p299
      %p301 = scmp.ne.s32.totalorder %s290, %s293
      %p302 = scmp.eq.s32.totalorder %s33, 1
      %p303 = por %p301, %p302
      %p304 = scmp.ne.s32.totalorder %s293, %s294
      %p305 = scmp.eq.s32.totalorder %s33, 0
      %p306 = por %p304, %p305
      %p307 = scmp.ne.s32.totalorder %s293, %s294
      %p308 = scmp.eq.s32.totalorder %s34, 1
      %p309 = por %p307, %p308
      %p311 = scmp.ne.s32.totalorder %s294, %s310
      %p312 = scmp.eq.s32.totalorder %s34, 0
      %p313 = por %p311, %p312
      %s314 = ssub.s32 %s28, %s35
      %p315 = scmp.eq.s32.totalorder %s314, 0
      %s317 = sadd.s32 %s316, 1
      %s318 = scalar_select %p315, %s316, %s317
      %p321 = pneg %p315
      %p322 = scmp.eq.s32.totalorder %s28, 1
      %p323 = por %p321, %p322
      %p324 = scmp.ne.s32.totalorder %s316, %s319
      %p325 = scmp.eq.s32.totalorder %s28, 0
      %p326 = por %p324, %p325
      %p327 = scmp.ne.s32.totalorder %s316, %s319
      %p328 = scmp.eq.s32.totalorder %s33, 1
      %p329 = por %p327, %p328
      %p330 = scmp.ne.s32.totalorder %s319, %s320
      %p331 = scmp.eq.s32.totalorder %s33, 0
      %p332 = por %p330, %p331
      %p333 = scmp.ne.s32.totalorder %s319, %s320
      %p334 = scmp.eq.s32.totalorder %s34, 1
      %p335 = por %p333, %p334
      %p337 = scmp.ne.s32.totalorder %s320, %s336
      %p338 = scmp.eq.s32.totalorder %s34, 0
      %p339 = por %p337, %p338
      %s340 = ssub.s32 %s28, %s35
      %p341 = scmp.eq.s32.totalorder %s340, 0
      %s343 = sadd.s32 %s342, 1
      %s344 = scalar_select %p341, %s342, %s343
      %p347 = pneg %p341
      %p348 = scmp.eq.s32.totalorder %s28, 1
      %p349 = por %p347, %p348
      %p350 = scmp.ne.s32.totalorder %s342, %s345
      %p351 = scmp.eq.s32.totalorder %s28, 0
      %p352 = por %p350, %p351
      %p353 = scmp.ne.s32.totalorder %s342, %s345
      %p354 = scmp.eq.s32.totalorder %s33, 1
      %p355 = por %p353, %p354
      %p356 = scmp.ne.s32.totalorder %s345, %s346
      %p357 = scmp.eq.s32.totalorder %s33, 0
      %p358 = por %p356, %p357
      %p359 = scmp.ne.s32.totalorder %s345, %s346
      %p360 = scmp.eq.s32.totalorder %s34, 1
      %p361 = por %p359, %p360
      %p363 = scmp.ne.s32.totalorder %s346, %s362
      %p364 = scmp.eq.s32.totalorder %s34, 0
      %p365 = por %p363, %p364
      %s366 = ssub.s32 %s28, %s35
      %p367 = scmp.eq.s32.totalorder %s366, 0
      %s369 = sadd.s32 %s368, 1
      %s370 = scalar_select %p367, %s368, %s369
      %p373 = pneg %p367
      %p374 = scmp.eq.s32.totalorder %s28, 1
      %p375 = por %p373, %p374
      %p376 = scmp.ne.s32.totalorder %s368, %s371
      %p377 = scmp.eq.s32.totalorder %s28, 0
      %p378 = por %p376, %p377
      %p379 = scmp.ne.s32.totalorder %s368, %s371
      %p380 = scmp.eq.s32.totalorder %s33, 1
      %p381 = por %p379, %p380
      %p382 = scmp.ne.s32.totalorder %s371, %s372
      %p383 = scmp.eq.s32.totalorder %s33, 0
      %p384 = por %p382, %p383
      %p385 = scmp.ne.s32.totalorder %s371, %s372
      %p386 = scmp.eq.s32.totalorder %s34, 1
      %p387 = por %p385, %p386
      %p389 = scmp.ne.s32.totalorder %s372, %s388
      %p390 = scmp.eq.s32.totalorder %s34, 0
      %p391 = por %p389, %p390
      %s392 = ssub.s32 %s28, %s35
      %p393 = scmp.eq.s32.totalorder %s392, 0
      %s395 = sadd.s32 %s394, 1
      %s396 = scalar_select %p393, %s394, %s395
      %p399 = pneg %p393
      %p400 = scmp.eq.s32.totalorder %s28, 1
      %p401 = por %p399, %p400
      %p402 = scmp.ne.s32.totalorder %s394, %s397
      %p403 = scmp.eq.s32.totalorder %s28, 0
      %p404 = por %p402, %p403
      %p405 = scmp.ne.s32.totalorder %s394, %s397
      %p406 = scmp.eq.s32.totalorder %s33, 1
      %p407 = por %p405, %p406
      %p408 = scmp.ne.s32.totalorder %s397, %s398
      %p409 = scmp.eq.s32.totalorder %s33, 0
      %p410 = por %p408, %p409
      %p411 = scmp.ne.s32.totalorder %s397, %s398
      %p412 = scmp.eq.s32.totalorder %s34, 1
      %p413 = por %p411, %p412
      %p415 = scmp.ne.s32.totalorder %s398, %s414
      %p416 = scmp.eq.s32.totalorder %s34, 0
      %p417 = por %p415, %p416
      %s419 = sadd.s32 %s418, 1
      %p422 = scmp.eq.s32.totalorder %s28, 1
      %p423 = scmp.ne.s32.totalorder %s418, %s420
      %p424 = scmp.eq.s32.totalorder %s28, 0
      %p425 = por %p423, %p424
      %p426 = scmp.ne.s32.totalorder %s418, %s420
      %p427 = scmp.eq.s32.totalorder %s33, 1
      %p428 = por %p426, %p427
      %p429 = scmp.ne.s32.totalorder %s420, %s421
      %p430 = scmp.eq.s32.totalorder %s33, 0
      %p431 = por %p429, %p430
      %p432 = scmp.ne.s32.totalorder %s420, %s421
      %p433 = scmp.eq.s32.totalorder %s34, 1
      %p434 = por %p432, %p433
      %p436 = scmp.ne.s32.totalorder %s421, %s435
      %p437 = scmp.eq.s32.totalorder %s34, 0
      %p438 = por %p436, %p437
      %p439 = scmp.le.s32.totalorder 1, %s28
      %p440 = scmp.lt.s32.totalorder %s28, 3
      %p441 = pnand %p439, %p440
      %p442 = pneg %p441
      // Predicated region
      $region9: #{deepdraft_forward.2} parent=5 // pred_check
        _
      $region10: #{deepdraft_forward.2} parent=5 // pred_check_branch
        %444 = sbr.rel (%p441) target = $region12
      $region11: #{deepdraft_forward.2} parent=5 // pred_region
        %s445 = ssub.s32 %s28, 1
        // Predicated region
        $region13: #{deepdraft_forward.2} parent=11 // pred_check
          %p446 = pneg %p49
        $region14: #{deepdraft_forward.2} parent=11 // pred_check_branch
          %448 = sbr.rel (%p446) target = $region16
        $region15: #{deepdraft_forward.2} parent=11 // pred_region
          _
        $region16: #{deepdraft_forward.2} parent=11 // pred_fallthru
          _
        // Predicated region
        $region17: #{deepdraft_forward.2} parent=11 // pred_check
          %p449 = pneg %p70
        $region18: #{deepdraft_forward.2} parent=11 // pred_check_branch
          %451 = sbr.rel (%p449) target = $region20
        $region19: #{deepdraft_forward.2} parent=11 // pred_region
          _
        $region20: #{deepdraft_forward.2} parent=11 // pred_fallthru
          _
        // Predicated region
        $region21: #{deepdraft_forward.2} parent=11 // pred_check
          %p452 = pneg %p91
        $region22: #{deepdraft_forward.2} parent=11 // pred_check_branch
          %454 = sbr.rel (%p452) target = $region24
        $region23: #{deepdraft_forward.2} parent=11 // pred_region
          _
        $region24: #{deepdraft_forward.2} parent=11 // pred_fallthru
          _
        // Predicated region
        $region25: #{deepdraft_forward.2} parent=11 // pred_check
          %p455 = pneg %p112
        $region26: #{deepdraft_forward.2} parent=11 // pred_check_branch
          %457 = sbr.rel (%p455) target = $region28
        $region27: #{deepdraft_forward.2} parent=11 // pred_region
          %s459 = ssub.s32 128, 128
          %460 = vsyncadd [#allocation5], %s459
          %s461 = sshll.u32 [#allocation4], 4
          %s462 = int_to_ptr.vmem [resolvable:$true] %s461
          %467 = dma.hbm_to_vmem [thread:$0]  %s3, 128, %s462, [#allocation5], 64, 64, 4
        $region28: #{deepdraft_forward.2} parent=11 // pred_fallthru
          _
        // Predicated region
        $region29: #{deepdraft_forward.2} parent=11 // pred_check
          %p468 = pneg %p133
        $region30: #{deepdraft_forward.2} parent=11 // pred_check_branch
          %470 = sbr.rel (%p468) target = $region32
        $region31: #{deepdraft_forward.2} parent=11 // pred_region
          %s472 = ssub.s32 16, 16
          %473 = vsyncadd [#allocation7], %s472
          %s475 = sshll.u32 [#allocation6], 4
          %s476 = int_to_ptr.vmem [resolvable:$true] %s475
          %478 = dma.hbm_to_vmem [thread:$0]  %s4, 16, %s476, [#allocation7]
        $region32: #{deepdraft_forward.2} parent=11 // pred_fallthru
          _
        // Predicated region
        $region33: #{deepdraft_forward.2} parent=11 // pred_check
          %p479 = pneg %p154
        $region34: #{deepdraft_forward.2} parent=11 // pred_check_branch
          %481 = sbr.rel (%p479) target = $region36
        $region35: #{deepdraft_forward.2} parent=11 // pred_region
          %s483 = ssub.s32 64, 64
          %484 = vsyncadd [#allocation7], %s483
          %s486 = sshll.u32 [#allocation8], 4
          %s487 = int_to_ptr.vmem [resolvable:$true] %s486
          %489 = dma.hbm_to_vmem [thread:$0]  %s5, 64, %s487, [#allocation7]
        $region36: #{deepdraft_forward.2} parent=11 // pred_fallthru
          _
        // Predicated region
        $region37: #{deepdraft_forward.2} parent=11 // pred_check
          %p490 = pneg %p175
        $region38: #{deepdraft_forward.2} parent=11 // pred_check_branch
          %492 = sbr.rel (%p490) target = $region40
        $region39: #{deepdraft_forward.2} parent=11 // pred_region
          %s494 = ssub.s32 16, 16
          %495 = vsyncadd [#allocation10], %s494
          %s497 = sshll.u32 [#allocation9], 4
          %s498 = int_to_ptr.vmem [resolvable:$true] %s497
          %500 = dma.hbm_to_vmem [thread:$0]  %s6, 16, %s498, [#allocation10]
        $region40: #{deepdraft_forward.2} parent=11 // pred_fallthru
          _
        // Predicated region
        $region41: #{deepdraft_forward.2} parent=11 // pred_check
          %p501 = pneg %p196
        $region42: #{deepdraft_forward.2} parent=11 // pred_check_branch
          %503 = sbr.rel (%p501) target = $region44
        $region43: #{deepdraft_forward.2} parent=11 // pred_region
          %s505 = ssub.s32 128, 128
          %506 = vsyncadd [#allocation10], %s505
          %s507 = sshll.u32 [#allocation11], 4
          %s508 = int_to_ptr.vmem [resolvable:$true] %s507
          %513 = dma.hbm_to_vmem [thread:$0]  %s7, 128, %s508, [#allocation10], 64, 64, 4
        $region44: #{deepdraft_forward.2} parent=11 // pred_fallthru
          _
        // Predicated region
        $region45: #{deepdraft_forward.2} parent=11 // pred_check
          %p514 = pneg %p217
        $region46: #{deepdraft_forward.2} parent=11 // pred_check_branch
          %516 = sbr.rel (%p514) target = $region48
        $region47: #{deepdraft_forward.2} parent=11 // pred_region
          %s518 = ssub.s32 16, 16
          %519 = vsyncadd [#allocation13], %s518
          %s521 = sshll.u32 [#allocation12], 4
          %s522 = int_to_ptr.vmem [resolvable:$true] %s521
          %524 = dma.hbm_to_vmem [thread:$0]  %s8, 16, %s522, [#allocation13]
        $region48: #{deepdraft_forward.2} parent=11 // pred_fallthru
          _
        // Predicated region
        $region49: #{deepdraft_forward.2} parent=11 // pred_check
          %p525 = pneg %p238
        $region50: #{deepdraft_forward.2} parent=11 // pred_check_branch
          %527 = sbr.rel (%p525) target = $region52
        $region51: #{deepdraft_forward.2} parent=11 // pred_region
          _
        $region52: #{deepdraft_forward.2} parent=11 // pred_fallthru
          _
        // Predicated region
        $region53: #{deepdraft_forward.2} parent=11 // pred_check
          %p528 = pneg %p259
        $region54: #{deepdraft_forward.2} parent=11 // pred_check_branch
          %530 = sbr.rel (%p528) target = $region56
        $region55: #{deepdraft_forward.2} parent=11 // pred_region
          %s532 = ssub.s32 16, 16
          %533 = vsyncadd [#allocation13], %s532
          %s535 = sshll.u32 [#allocation14], 4
          %s536 = int_to_ptr.vmem [resolvable:$true] %s535
          %538 = dma.hbm_to_vmem [thread:$0]  %s10, 16, %s536, [#allocation13]
        $region56: #{deepdraft_forward.2} parent=11 // pred_fallthru
          _
        // Predicated region
        $region57: #{deepdraft_forward.2} parent=11 // pred_check
          %p539 = pneg %p280
        $region58: #{deepdraft_forward.2} parent=11 // pred_check_branch
          %541 = sbr.rel (%p539) target = $region60
        $region59: #{deepdraft_forward.2} parent=11 // pred_region
          %s543 = ssub.s32 16, 16
          %544 = vsyncadd [#allocation16], %s543
          %s546 = sshll.u32 [#allocation15], 4
          %s547 = int_to_ptr.vmem [resolvable:$true] %s546
          %549 = dma.hbm_to_vmem [thread:$0]  %s11, 16, %s547, [#allocation16]
        $region60: #{deepdraft_forward.2} parent=11 // pred_fallthru
          _
      $region12: #{deepdraft_forward.2} parent=5 // pred_fallthru
        _
      %p550 = scmp.lt.s32.totalorder %s28, 2
      // Predicated region
      $region61: #{deepdraft_forward.2} parent=5 // pred_check
        %p551 = pneg %p550
      $region62: #{deepdraft_forward.2} parent=5 // pred_check_branch
        %553 = sbr.rel (%p551) target = $region64
      $region63: #{deepdraft_forward.2} parent=5 // pred_region
        // Predicated region
        $region65: #{deepdraft_forward.2} parent=63 // pred_check
          %p554 = pneg %p300
        $region66: #{deepdraft_forward.2} parent=63 // pred_check_branch
          %556 = sbr.rel (%p554) target = $region68
        $region67: #{deepdraft_forward.2} parent=63 // pred_region
          %p557 = scmp.lt.s32.totalorder %s28, 1
          %s558 = scalar_select %p557, %s28, 1
          %s559 = smul.addr %s558, 4
          %s560 = smul.addr %s559, 4
          %s561 = scalar_lea.vmem %s12, %s560
        $region68: #{deepdraft_forward.2} parent=63 // pred_fallthru
          _
        // Predicated region
        $region69: #{deepdraft_forward.2} parent=63 // pred_check
          %p562 = pneg %p326
        $region70: #{deepdraft_forward.2} parent=63 // pred_check_branch
          %564 = sbr.rel (%p562) target = $region72
        $region71: #{deepdraft_forward.2} parent=63 // pred_region
          %p565 = scmp.lt.s32.totalorder %s28, 1
          %s566 = scalar_select %p565, %s28, 1
          %s567 = smul.addr %s566, 4
          %s568 = smul.addr %s567, 4
          %s569 = scalar_lea.vmem %s13, %s568
        $region72: #{deepdraft_forward.2} parent=63 // pred_fallthru
          _
        // Predicated region
        $region73: #{deepdraft_forward.2} parent=63 // pred_check
          %p570 = pneg %p352
        $region74: #{deepdraft_forward.2} parent=63 // pred_check_branch
          %572 = sbr.rel (%p570) target = $region76
        $region75: #{deepdraft_forward.2} parent=63 // pred_region
          %p573 = scmp.lt.s32.totalorder %s28, 1
          %s574 = scalar_select %p573, %s28, 1
          %s575 = smul.addr %s574, 4
          %s576 = smul.addr %s575, 4
          %s577 = scalar_lea.vmem %s14, %s576
        $region76: #{deepdraft_forward.2} parent=63 // pred_fallthru
          _
        // Predicated region
        $region77: #{deepdraft_forward.2} parent=63 // pred_check
          %p578 = pneg %p378
        $region78: #{deepdraft_forward.2} parent=63 // pred_check_branch
          %580 = sbr.rel (%p578) target = $region80
        $region79: #{deepdraft_forward.2} parent=63 // pred_region
          %p581 = scmp.lt.s32.totalorder %s28, 1
          %s582 = scalar_select %p581, %s28, 1
          %s583 = smul.addr %s582, 8
          %s584 = smul.addr %s583, 4
          %s585 = scalar_lea.vmem %s15, %s584
        $region80: #{deepdraft_forward.2} parent=63 // pred_fallthru
          _
        // Predicated region
        $region81: #{deepdraft_forward.2} parent=63 // pred_check
          %p586 = pneg %p404
        $region82: #{deepdraft_forward.2} parent=63 // pred_check_branch
          %588 = sbr.rel (%p586) target = $region84
        $region83: #{deepdraft_forward.2} parent=63 // pred_region
          %p589 = scmp.lt.s32.totalorder %s28, 1
          %s590 = scalar_select %p589, %s28, 1
          %s591 = smul.addr %s590, 8
          %s592 = scalar_lea.vmem %s16, %s591
        $region84: #{deepdraft_forward.2} parent=63 // pred_fallthru
          _
      $region64: #{deepdraft_forward.2} parent=5 // pred_fallthru
        _
      %p593 = scmp.le.s32.totalorder 1, %s28
      %p594 = scmp.lt.s32.totalorder %s28, 3
      %p595 = pnand %p593, %p594
      %p596 = pneg %p595
      // Predicated region
      $region85: #{deepdraft_forward.2} parent=5 // pred_check
        _
      $region86: #{deepdraft_forward.2} parent=5 // pred_check_branch
        %598 = sbr.rel (%p595) target = $region88
      $region87: #{deepdraft_forward.2} parent=5 // pred_region
        %s599 = ssub.s32 %s28, 1
        // Predicated region
        $region89: #{deepdraft_forward.2} parent=87 // pred_check
          %p600 = pneg %p112
        $region90: #{deepdraft_forward.2} parent=87 // pred_check_branch
          %602 = sbr.rel (%p600) target = $region92
        $region91: #{deepdraft_forward.2} parent=87 // pred_region
          %603 = dma.done [#allocation5], 128
        $region92: #{deepdraft_forward.2} parent=87 // pred_fallthru
          _
        // Predicated region
        $region93: #{deepdraft_forward.2} parent=87 // pred_check
          %p604 = pneg %p133
        $region94: #{deepdraft_forward.2} parent=87 // pred_check_branch
          %606 = sbr.rel (%p604) target = $region96
        $region95: #{deepdraft_forward.2} parent=87 // pred_region
          %607 = dma.done [#allocation7], 16
        $region96: #{deepdraft_forward.2} parent=87 // pred_fallthru
          _
        // Predicated region
        $region97: #{deepdraft_forward.2} parent=87 // pred_check
          %p608 = pneg %p154
        $region98: #{deepdraft_forward.2} parent=87 // pred_check_branch
          %610 = sbr.rel (%p608) target = $region100
        $region99: #{deepdraft_forward.2} parent=87 // pred_region
          %611 = dma.done [#allocation7], 64
        $region100: #{deepdraft_forward.2} parent=87 // pred_fallthru
          _
        // Predicated region
        $region101: #{deepdraft_forward.2} parent=87 // pred_check
          %p612 = pneg %p175
        $region102: #{deepdraft_forward.2} parent=87 // pred_check_branch
          %614 = sbr.rel (%p612) target = $region104
        $region103: #{deepdraft_forward.2} parent=87 // pred_region
          %615 = dma.done [#allocation10], 16
        $region104: #{deepdraft_forward.2} parent=87 // pred_fallthru
          _
        // Predicated region
        $region105: #{deepdraft_forward.2} parent=87 // pred_check
          %p616 = pneg %p196
        $region106: #{deepdraft_forward.2} parent=87 // pred_check_branch
          %618 = sbr.rel (%p616) target = $region108
        $region107: #{deepdraft_forward.2} parent=87 // pred_region
          %619 = dma.done [#allocation10], 128
        $region108: #{deepdraft_forward.2} parent=87 // pred_fallthru
          _
        // Predicated region
        $region109: #{deepdraft_forward.2} parent=87 // pred_check
          %p620 = pneg %p217
        $region110: #{deepdraft_forward.2} parent=87 // pred_check_branch
          %622 = sbr.rel (%p620) target = $region112
        $region111: #{deepdraft_forward.2} parent=87 // pred_region
          %623 = dma.done [#allocation13], 16
        $region112: #{deepdraft_forward.2} parent=87 // pred_fallthru
          _
        // Predicated region
        $region113: #{deepdraft_forward.2} parent=87 // pred_check
          %p624 = pneg %p259
        $region114: #{deepdraft_forward.2} parent=87 // pred_check_branch
          %626 = sbr.rel (%p624) target = $region116
        $region115: #{deepdraft_forward.2} parent=87 // pred_region
          %627 = dma.done [#allocation13], 16
        $region116: #{deepdraft_forward.2} parent=87 // pred_fallthru
          _
        // Predicated region
        $region117: #{deepdraft_forward.2} parent=87 // pred_check
          %p628 = pneg %p280
        $region118: #{deepdraft_forward.2} parent=87 // pred_check_branch
          %630 = sbr.rel (%p628) target = $region120
        $region119: #{deepdraft_forward.2} parent=87 // pred_region
          %631 = dma.done [#allocation16], 16
        $region120: #{deepdraft_forward.2} parent=87 // pred_fallthru
          _
        %p632 = pneg %p49
        %p633 = pneg %p46
        %p634 = pneg %p70
        %p635 = pneg %p67
        %p636 = pneg %p91
        %p637 = pneg %p88
        %p638 = pneg %p112
        %p639 = pneg %p109
        %p640 = pneg %p133
        %p641 = pneg %p130
        %p642 = pneg %p154
        %p643 = pneg %p151
        %p644 = pneg %p175
        %p645 = pneg %p172
        %p646 = pneg %p196
        %p647 = pneg %p193
        %p648 = pneg %p217
        %p649 = pneg %p214
        %p650 = pneg %p238
        %p651 = pneg %p235
        %p652 = pneg %p259
        %p653 = pneg %p256
        %p654 = pneg %p280
        %p655 = pneg %p277
        %p656 = scmp.lt.s32.totalorder %s33, 1
        %s657 = scalar_select %p656, %s33, 1
        %s658 = smul.addr %s657, 4
        %s659 = smul.addr %s658, 4
        %s660 = scalar_lea.vmem %s12, %s659
        %p661 = pneg %p306
        %p662 = pneg %p303
        %p663 = scmp.lt.s32.totalorder %s33, 1
        %s664 = scalar_select %p663, %s33, 1
        %s665 = smul.addr %s664, 4
        %s666 = smul.addr %s665, 4
        %s667 = scalar_lea.vmem %s13, %s666
        %p668 = pneg %p332
        %p669 = pneg %p329
        %p670 = scmp.lt.s32.totalorder %s33, 1
        %s671 = scalar_select %p670, %s33, 1
        %s672 = smul.addr %s671, 4
        %s673 = smul.addr %s672, 4
        %s674 = scalar_lea.vmem %s14, %s673
        %p675 = pneg %p358
        %p676 = pneg %p355
        %p677 = scmp.lt.s32.totalorder %s33, 1
        %s678 = scalar_select %p677, %s33, 1
        %s679 = smul.addr %s678, 8
        %s680 = smul.addr %s679, 4
        %s681 = scalar_lea.vmem %s15, %s680
        %p682 = pneg %p384
        %p683 = pneg %p381
        %p684 = scmp.lt.s32.totalorder %s33, 1
        %s685 = scalar_select %p684, %s33, 1
        %s686 = smul.addr %s685, 8
        %s687 = scalar_lea.vmem %s16, %s686
        %p688 = pneg %p410
        %p689 = pneg %p407
        %p690 = pneg %p431
        %p691 = pneg %p428
        %p692 = scmp.lt.s32.totalorder %s33, 1
        %s693 = scalar_select %p692, %s33, 1
        %s694 = smul.addr %s693, 4
        %s695 = smul.addr %s694, 4
        %s696 = scalar_lea.vmem %s12, %s695
        %p697 = scmp.lt.s32.totalorder %s33, 1
        %s698 = scalar_select %p697, %s33, 1
        %s699 = smul.addr %s698, 4
        %s700 = smul.addr %s699, 4
        %s701 = scalar_lea.vmem %s13, %s700
        %p702 = scmp.lt.s32.totalorder %s33, 1
        %s703 = scalar_select %p702, %s33, 1
        %s704 = smul.addr %s703, 4
        %s705 = smul.addr %s704, 4
        %s706 = scalar_lea.vmem %s14, %s705
        %p707 = scmp.lt.s32.totalorder %s33, 1
        %s708 = scalar_select %p707, %s33, 1
        %s709 = smul.addr %s708, 8
        %s710 = smul.addr %s709, 4
        %s711 = scalar_lea.vmem %s15, %s710
        %p712 = scmp.lt.s32.totalorder %s33, 1
        %s713 = scalar_select %p712, %s33, 1
        %s714 = smul.addr %s713, 8
        %s715 = scalar_lea.vmem %s16, %s714
        %p721 = scmp.eq.s32.totalorder %s33, 0
        // Predicated region
        $region121: #{deepdraft_forward.2} parent=87 // pred_check
          %p722 = pneg %p721
        $region122: #{deepdraft_forward.2} parent=87 // pred_check_branch
          %724 = sbr.rel (%p722) target = $region124
        $region123: #{deepdraft_forward.2} parent=87 // pred_region
          %v725 = vld [vmem:[%s0] sm:$0x3]
          %v726 = vld [vmem:[#allocation4] sm:$0xf]
          %v727 = vld [vmem:[#allocation4 + $0x4] sm:$0xf]
          %v728 = vld [vmem:[#allocation6] sm:$0x1]
          %v729 = vpack.c.bf16 %v725, %v725
          %v731 = vlaneseq
          %v732 = vshrl.u32 %v731, 7
          %v733 = vsub.s32 0, %v732
          %v734 = vrot.slane %v728, %v733
          %v738 = vunpack.c.l.b16 %v726
          %v739 = vunpack.c.l.b16 %v727
          %v740 = vpack.c.b16 %v739, %v738
          %vm742 = vcmask 130048
          %v744 = vsel %vm742, %v729, 0
          %746 = vmatprep.subr.bf16.mxu0 0
          %747 = vmatpush1.bf16.msra.mxu0 %v740
          %748 = vmatprep.subr.bf16.mxu0 0
          %749 = vmatpush1.bf16.msra.mxu0 0
          %750 = vmatprep.subr.bf16.mxu0 0
          %751 = vmatpush1.bf16.msra.mxu0 0
          %752 = vmatprep.subr.bf16.mxu0 0
          %753 = vmatpush1.bf16.msra.mxu0 0
          %754 = vmatprep.subr.bf16.mxu0 0
          %755 = vmatpush1.bf16.msra.mxu0 0
          %756 = vmatprep.subr.bf16.mxu0 0
          %757 = vmatpush1.bf16.msra.mxu0 0
          %758 = vmatprep.subr.bf16.mxu0 0
          %759 = vmatpush1.bf16.msra.mxu0 0
          %760 = vmatprep.subr.bf16.mxu0 0
          %761 = vmatpush1.bf16.msra.mxu0 0
          %762 = vmatprep.subr.bf16.mxu0 0
          %763 = vmatpush1.bf16.msra.mxu0 0
          %764 = vmatprep.subr.bf16.mxu0 0
          %765 = vmatpush1.bf16.msra.mxu0 0
          %766 = vmatprep.subr.bf16.mxu0 0
          %767 = vmatpush1.bf16.msra.mxu0 0
          %768 = vmatprep.subr.bf16.mxu0 0
          %769 = vmatpush1.bf16.msra.mxu0 0
          %770 = vmatprep.subr.bf16.mxu0 0
          %771 = vmatpush1.bf16.msra.mxu0 0
          %772 = vmatprep.subr.bf16.mxu0 0
          %773 = vmatpush1.bf16.msra.mxu0 0
          %774 = vmatprep.subr.bf16.mxu0 0
          %775 = vmatpush1.bf16.msra.mxu0 0
          %776 = vmatprep.subr.bf16.mxu0 0
          %777 = vmatpush1.bf16.msra.mxu0 0
          %778 = vmatprep.mubr.bf16.mxu0 0
          %779 = vmatmul.mubr.bf16.gmra.mrb[0].mxu0 %v744
          %v780 = vpop.f32.mrb[0].mxu0
          %v781 = vadd.f32 %v734, %v780
          %v782 = vpop.f32.mrb[0].mxu0
          %v783 = vpop.f32.mrb[0].mxu0
          %v784 = vpop.f32.mrb[0].mxu0
          %785 = vdwg.mxu0
          %v786 = vld [vmem:[%s1] sm:$0x1f]
          %v787 = vld [vmem:[%s1 + $0x8] sm:$0x1f]
          %v790 = vcombine.high %v786, %v786
          %v792 = vunpack.c.l.s4 1966171168
          %v793 = vunpack.c.0.s8 %v792
          %v794 = vlaneseq
          %v795 = vshrl.u32 %v794, 7
          %v796 = vsub.s32 %v793, %v795
          %v797 = vrot.slane %v786, %v796
          %v799 = vunpack.c.l.s4 1966171168
          %v800 = vunpack.c.0.s8 %v799
          %v801 = vlaneseq
          %v802 = vshrl.u32 %v801, 7
          %v803 = vsub.s32 %v800, %v802
          %v804 = vrot.slane %v790, %v803
          %v805 = vcombine.high %v797, %v797
          %v807 = vunpack.c.l.s4 1966171168
          %v808 = vunpack.c.0.s8 %v807
          %v809 = vlaneseq
          %v810 = vshrl.u32 %v809, 7
          %v811 = vsub.s32 %v808, %v810
          %v812 = vrot.slane %v797, %v811
          %v814 = vunpack.c.l.s4 1966171168
          %v815 = vunpack.c.0.s8 %v814
          %v816 = vlaneseq
          %v817 = vshrl.u32 %v816, 7
          %v818 = vsub.s32 %v815, %v817
          %v819 = vrot.slane %v804, %v818
          %v821 = vunpack.c.l.s4 1966171168
          %v822 = vunpack.c.0.s8 %v821
          %v823 = vlaneseq
          %v824 = vshrl.u32 %v823, 7
          %v825 = vsub.s32 %v822, %v824
          %v826 = vrot.slane %v805, %v825
          %v827 = vcombine.high %v812, %v812
          %v828 = vcombine.high %v826, %v826
          %v829 = vcombine.high %v787, %v787
          %v831 = vunpack.c.l.s4 1966171168
          %v832 = vunpack.c.0.s8 %v831
          %v833 = vlaneseq
          %v834 = vshrl.u32 %v833, 7
          %v835 = vsub.s32 %v832, %v834
          %v836 = vrot.slane %v787, %v835
          %v838 = vunpack.c.l.s4 1966171168
          %v839 = vunpack.c.0.s8 %v838
          %v840 = vlaneseq
          %v841 = vshrl.u32 %v840, 7
          %v842 = vsub.s32 %v839, %v841
          %v843 = vrot.slane %v829, %v842
          %v844 = vcombine.high %v836, %v836
          %v846 = vunpack.c.l.s4 1966171168
          %v847 = vunpack.c.0.s8 %v846
          %v848 = vlaneseq
          %v849 = vshrl.u32 %v848, 7
          %v850 = vsub.s32 %v847, %v849
          %v851 = vrot.slane %v836, %v850
          %v853 = vunpack.c.l.s4 1966171168
          %v854 = vunpack.c.0.s8 %v853
          %v855 = vlaneseq
          %v856 = vshrl.u32 %v855, 7
          %v857 = vsub.s32 %v854, %v856
          %v858 = vrot.slane %v843, %v857
          %v860 = vunpack.c.l.s4 1966171168
          %v861 = vunpack.c.0.s8 %v860
          %v862 = vlaneseq
          %v863 = vshrl.u32 %v862, 7
          %v864 = vsub.s32 %v861, %v863
          %v865 = vrot.slane %v844, %v864
          %v866 = vcombine.high %v851, %v851
          %v867 = vcombine.high %v865, %v865
          %v868 = vld [vmem:[#allocation8] sm:$0xf]
          %v869 = vld [vmem:[#allocation9] sm:$0x1]
          %v870 = vcombine.low %v812, %v826
          %v871 = vcombine.low %v827, %v828
          %v872 = vcombine.low %v819, %v851
          %v873 = vcombine.low %v865, %v866
          %v875 = vunpack.c.l.s4 1966171168
          %v876 = vunpack.c.0.s8 %v875
          %v877 = vlaneseq
          %v878 = vshrl.u32 %v877, 7
          %v879 = vsub.s32 %v876, %v878
          %v880 = vrot.slane %v870, %v879
          %v882 = vunpack.c.l.s4 1966171168
          %v883 = vunpack.c.0.s8 %v882
          %v884 = vlaneseq
          %v885 = vshrl.u32 %v884, 7
          %v886 = vsub.s32 %v883, %v885
          %v887 = vrot.slane %v871, %v886
          %v889 = vunpack.c.l.s4 1966171168
          %v890 = vunpack.c.0.s8 %v889
          %v891 = vlaneseq
          %v892 = vshrl.u32 %v891, 7
          %v893 = vsub.s32 %v890, %v892
          %v894 = vrot.slane %v872, %v893
          %v896 = vunpack.c.l.s4 1966171168
          %v897 = vunpack.c.0.s8 %v896
          %v898 = vlaneseq
          %v899 = vshrl.u32 %v898, 7
          %v900 = vsub.s32 %v897, %v899
          %v901 = vrot.slane %v873, %v900
          %v902 = vcombine.low %v880, %v887
          %v903 = vcombine.low %v894, %v901
          %v905 = vunpack.c.l.s4 1966171168
          %v906 = vunpack.c.0.s8 %v905
          %v907 = vlaneseq
          %v908 = vshrl.u32 %v907, 7
          %v909 = vsub.s32 %v906, %v908
          %v910 = vrot.slane %v902, %v909
          %v912 = vunpack.c.l.s4 1966171168
          %v913 = vunpack.c.0.s8 %v912
          %v914 = vlaneseq
          %v915 = vshrl.u32 %v914, 7
          %v916 = vsub.s32 %v913, %v915
          %v917 = vrot.slane %v903, %v916
          %v918 = vcombine.low %v910, %v917
          %v919 = vcombine.low %v867, %v858
          %v921 = vunpack.c.l.s4 1966171168
          %v922 = vunpack.c.0.s8 %v921
          %v923 = vlaneseq
          %v924 = vshrl.u32 %v923, 7
          %v925 = vsub.s32 %v922, %v924
          %v926 = vrot.slane %v919, %v925
          %v928 = vunpack.c.l.s4 1966171168
          %v929 = vunpack.c.0.s8 %v928
          %v930 = vlaneseq
          %v931 = vshrl.u32 %v930, 7
          %v932 = vsub.s32 %v929, %v931
          %v933 = vrot.slane %v926, %v932
          %v936 = vpack.c.bf16 %v933, %v918
          %v938 = vlaneseq
          %v939 = vshrl.u32 %v938, 7
          %v940 = vsub.s32 0, %v939
          %v941 = vrot.slane %v869, %v940
          %vm943 = vcmask 64512
          %v945 = vsel %vm943, %v936, 0
          %vm947 = vcmask 1043456
          %v949 = vsel %vm947, %v868, 0
          %951 = vmatprep.subr.bf16.mxu0 0
          %952 = vmatpush1.bf16.msra.mxu0 %v949
          %953 = vmatprep.subr.bf16.mxu0 0
          %954 = vmatpush1.bf16.msra.mxu0 0
          %955 = vmatprep.subr.bf16.mxu0 0
          %956 = vmatpush1.bf16.msra.mxu0 0
          %957 = vmatprep.subr.bf16.mxu0 0
          %958 = vmatpush1.bf16.msra.mxu0 0
          %959 = vmatprep.subr.bf16.mxu0 0
          %960 = vmatpush1.bf16.msra.mxu0 0
          %961 = vmatprep.subr.bf16.mxu0 0
          %962 = vmatpush1.bf16.msra.mxu0 0
          %963 = vmatprep.subr.bf16.mxu0 0
          %964 = vmatpush1.bf16.msra.mxu0 0
          %965 = vmatprep.subr.bf16.mxu0 0
          %966 = vmatpush1.bf16.msra.mxu0 0
          %967 = vmatprep.subr.bf16.mxu0 0
          %968 = vmatpush1.bf16.msra.mxu0 0
          %969 = vmatprep.subr.bf16.mxu0 0
          %970 = vmatpush1.bf16.msra.mxu0 0
          %971 = vmatprep.subr.bf16.mxu0 0
          %972 = vmatpush1.bf16.msra.mxu0 0
          %973 = vmatprep.subr.bf16.mxu0 0
          %974 = vmatpush1.bf16.msra.mxu0 0
          %975 = vmatprep.subr.bf16.mxu0 0
          %976 = vmatpush1.bf16.msra.mxu0 0
          %977 = vmatprep.subr.bf16.mxu0 0
          %978 = vmatpush1.bf16.msra.mxu0 0
          %979 = vmatprep.subr.bf16.mxu0 0
          %980 = vmatpush1.bf16.msra.mxu0 0
          %981 = vmatprep.subr.bf16.mxu0 0
          %982 = vmatpush1.bf16.msra.mxu0 0
          %983 = vmatprep.mubr.bf16.mxu0 0
          %984 = vmatmul.mubr.bf16.gmra.mrb[0].mxu0 %v945
          %v985 = vpop.f32.mrb[0].mxu0
          %v986 = vadd.f32 %v941, %v985
          %v987 = vpop.f32.mrb[0].mxu0
          %v988 = vpop.f32.mrb[0].mxu0
          %v989 = vadd.f32 %v941, %v988
          %v990 = vpop.f32.mrb[0].mxu0
          %991 = vdwg.mxu0
          %v992 = vld [vmem:[%s2] sm:$0x7]
          %v993 = vld [vmem:[%s2 + $0x4] sm:$0x7]
          %v997 = vunpack.c.l.s4 1966171168
          %v998 = vunpack.c.0.s8 %v997
          %v999 = vlaneseq
          %v1000 = vshrl.u32 %v999, 7
          %v1001 = vsub.s32 %v998, %v1000
          %v1002 = vrot.slane %v992, %v1001
          %v1003 = vcombine.high %v1002, %v1002
          %v1005 = vunpack.c.l.s4 1966171168
          %v1006 = vunpack.c.0.s8 %v1005
          %v1007 = vlaneseq
          %v1008 = vshrl.u32 %v1007, 7
          %v1009 = vsub.s32 %v1006, %v1008
          %v1010 = vrot.slane %v1002, %v1009
          %v1012 = vunpack.c.l.s4 1966171168
          %v1013 = vunpack.c.0.s8 %v1012
          %v1014 = vlaneseq
          %v1015 = vshrl.u32 %v1014, 7
          %v1016 = vsub.s32 %v1013, %v1015
          %v1017 = vrot.slane %v1003, %v1016
          %v1018 = vcombine.high %v1010, %v1010
          %v1020 = vunpack.c.l.s4 1966171168
          %v1021 = vunpack.c.0.s8 %v1020
          %v1022 = vlaneseq
          %v1023 = vshrl.u32 %v1022, 7
          %v1024 = vsub.s32 %v1021, %v1023
          %v1025 = vrot.slane %v993, %v1024
          %v1026 = vcombine.high %v1025, %v1025
          %v1028 = vunpack.c.l.s4 1966171168
          %v1029 = vunpack.c.0.s8 %v1028
          %v1030 = vlaneseq
          %v1031 = vshrl.u32 %v1030, 7
          %v1032 = vsub.s32 %v1029, %v1031
          %v1033 = vrot.slane %v1025, %v1032
          %v1035 = vunpack.c.l.s4 1966171168
          %v1036 = vunpack.c.0.s8 %v1035
          %v1037 = vlaneseq
          %v1038 = vshrl.u32 %v1037, 7
          %v1039 = vsub.s32 %v1036, %v1038
          %v1040 = vrot.slane %v1026, %v1039
          %v1041 = vcombine.high %v1033, %v1033
          %v1042 = vld [vmem:[#allocation11] sm:$0xf]
          %v1043 = vld [vmem:[#allocation11 + $0x4] sm:$0x3]
          %v1044 = vld [vmem:[#allocation12] sm:$0x1]
          %v1045 = vcombine.low %v1010, %v1017
          %v1046 = vcombine.low %v1018, %v1033
          %v1047 = vcombine.low %v1040, %v1041
          %v1049 = vunpack.c.l.s4 1966171168
          %v1050 = vunpack.c.0.s8 %v1049
          %v1051 = vlaneseq
          %v1052 = vshrl.u32 %v1051, 7
          %v1053 = vsub.s32 %v1050, %v1052
          %v1054 = vrot.slane %v1045, %v1053
          %v1056 = vunpack.c.l.s4 1966171168
          %v1057 = vunpack.c.0.s8 %v1056
          %v1058 = vlaneseq
          %v1059 = vshrl.u32 %v1058, 7
          %v1060 = vsub.s32 %v1057, %v1059
          %v1061 = vrot.slane %v1046, %v1060
          %v1063 = vunpack.c.l.s4 1966171168
          %v1064 = vunpack.c.0.s8 %v1063
          %v1065 = vlaneseq
          %v1066 = vshrl.u32 %v1065, 7
          %v1067 = vsub.s32 %v1064, %v1066
          %v1068 = vrot.slane %v1047, %v1067
          %v1069 = vcombine.low %v1054, %v1061
          %v1071 = vunpack.c.l.s4 1966171168
          %v1072 = vunpack.c.0.s8 %v1071
          %v1073 = vlaneseq
          %v1074 = vshrl.u32 %v1073, 7
          %v1075 = vsub.s32 %v1072, %v1074
          %v1076 = vrot.slane %v1069, %v1075
          %v1078 = vunpack.c.l.s4 1966171168
          %v1079 = vunpack.c.0.s8 %v1078
          %v1080 = vlaneseq
          %v1081 = vshrl.u32 %v1080, 7
          %v1082 = vsub.s32 %v1079, %v1081
          %v1083 = vrot.slane %v1068, %v1082
          %v1084 = vcombine.low %v1076, %v1083
          %v1086 = vpack.c.bf16 %v1084, %v1084
          %v1088 = vlaneseq
          %v1089 = vshrl.u32 %v1088, 7
          %v1090 = vsub.s32 0, %v1089
          %v1091 = vrot.slane %v1044, %v1090
          %v1095 = vunpack.c.l.b16 %v1042
          %v1096 = vunpack.c.l.b16 %v1043
          %v1097 = vpack.c.b16 %v1096, %v1095
          %vm1098 = vcmask 97280
          %v1100 = vsel %vm1098, %v1086, 0
          %vm1102 = vcmask 1045504
          %v1104 = vsel %vm1102, %v1097, 0
          %1106 = vmatprep.subr.bf16.mxu0 0
          %1107 = vmatpush1.bf16.msra.mxu0 %v1104
          %1108 = vmatprep.subr.bf16.mxu0 0
          %1109 = vmatpush1.bf16.msra.mxu0 0
          %1110 = vmatprep.subr.bf16.mxu0 0
          %1111 = vmatpush1.bf16.msra.mxu0 0
          %1112 = vmatprep.subr.bf16.mxu0 0
          %1113 = vmatpush1.bf16.msra.mxu0 0
          %1114 = vmatprep.subr.bf16.mxu0 0
          %1115 = vmatpush1.bf16.msra.mxu0 0
          %1116 = vmatprep.subr.bf16.mxu0 0
          %1117 = vmatpush1.bf16.msra.mxu0 0
          %1118 = vmatprep.subr.bf16.mxu0 0
          %1119 = vmatpush1.bf16.msra.mxu0 0
          %1120 = vmatprep.subr.bf16.mxu0 0
          %1121 = vmatpush1.bf16.msra.mxu0 0
          %1122 = vmatprep.subr.bf16.mxu0 0
          %1123 = vmatpush1.bf16.msra.mxu0 0
          %1124 = vmatprep.subr.bf16.mxu0 0
          %1125 = vmatpush1.bf16.msra.mxu0 0
          %1126 = vmatprep.subr.bf16.mxu0 0
          %1127 = vmatpush1.bf16.msra.mxu0 0
          %1128 = vmatprep.subr.bf16.mxu0 0
          %1129 = vmatpush1.bf16.msra.mxu0 0
          %1130 = vmatprep.subr.bf16.mxu0 0
          %1131 = vmatpush1.bf16.msra.mxu0 0
          %1132 = vmatprep.subr.bf16.mxu0 0
          %1133 = vmatpush1.bf16.msra.mxu0 0
          %1134 = vmatprep.subr.bf16.mxu0 0
          %1135 = vmatpush1.bf16.msra.mxu0 0
          %1136 = vmatprep.subr.bf16.mxu0 0
          %1137 = vmatpush1.bf16.msra.mxu0 0
          %1138 = vmatprep.mubr.bf16.mxu0 0
          %1139 = vmatmul.mubr.bf16.gmra.mrb[0].mxu0 %v1100
          %v1140 = vpop.f32.mrb[0].mxu0
          %v1141 = vadd.f32 %v1091, %v1140
          %v1142 = vpop.f32.mrb[0].mxu0
          %v1143 = vpop.f32.mrb[0].mxu0
          %v1144 = vpop.f32.mrb[0].mxu0
          %1145 = vdwg.mxu0
          %v1148 = vunpack.c.l.s4 1966171168
          %v1149 = vunpack.c.0.s8 %v1148
          %v1150 = vlaneseq
          %v1151 = vshrl.u32 %v1150, 7
          %v1152 = vsub.s32 %v1149, %v1151
          %v1153 = vrot.slane %v781, %v1152
          %v1154 = vcombine.high %v1153, %v1153
          %v1156 = vunpack.c.l.s4 1966171168
          %v1157 = vunpack.c.0.s8 %v1156
          %v1158 = vlaneseq
          %v1159 = vshrl.u32 %v1158, 7
          %v1160 = vsub.s32 %v1157, %v1159
          %v1161 = vrot.slane %v1153, %v1160
          %v1163 = vunpack.c.l.s4 1966171168
          %v1164 = vunpack.c.0.s8 %v1163
          %v1165 = vlaneseq
          %v1166 = vshrl.u32 %v1165, 7
          %v1167 = vsub.s32 %v1164, %v1166
          %v1168 = vrot.slane %v1154, %v1167
          %v1173 = vcombine.high %v986, %v986
          %v1175 = vunpack.c.l.s4 1966171168
          %v1176 = vunpack.c.0.s8 %v1175
          %v1177 = vlaneseq
          %v1178 = vshrl.u32 %v1177, 7
          %v1179 = vsub.s32 %v1176, %v1178
          %v1180 = vrot.slane %v986, %v1179
          %v1182 = vunpack.c.l.s4 1966171168
          %v1183 = vunpack.c.0.s8 %v1182
          %v1184 = vlaneseq
          %v1185 = vshrl.u32 %v1184, 7
          %v1186 = vsub.s32 %v1183, %v1185
          %v1187 = vrot.slane %v1173, %v1186
          %v1188 = vcombine.high %v1180, %v1180
          %v1189 = vcombine.high %v1187, %v1187
          %v1191 = vunpack.c.l.s4 1966171168
          %v1192 = vunpack.c.0.s8 %v1191
          %v1193 = vlaneseq
          %v1194 = vshrl.u32 %v1193, 7
          %v1195 = vsub.s32 %v1192, %v1194
          %v1196 = vrot.slane %v1180, %v1195
          %v1198 = vunpack.c.l.s4 1966171168
          %v1199 = vunpack.c.0.s8 %v1198
          %v1200 = vlaneseq
          %v1201 = vshrl.u32 %v1200, 7
          %v1202 = vsub.s32 %v1199, %v1201
          %v1203 = vrot.slane %v1187, %v1202
          %v1205 = vunpack.c.l.s4 1966171168
          %v1206 = vunpack.c.0.s8 %v1205
          %v1207 = vlaneseq
          %v1208 = vshrl.u32 %v1207, 7
          %v1209 = vsub.s32 %v1206, %v1208
          %v1210 = vrot.slane %v1188, %v1209
          %v1212 = vunpack.c.l.s4 1966171168
          %v1213 = vunpack.c.0.s8 %v1212
          %v1214 = vlaneseq
          %v1215 = vshrl.u32 %v1214, 7
          %v1216 = vsub.s32 %v1213, %v1215
          %v1217 = vrot.slane %v1189, %v1216
          %v1218 = vcombine.high %v1196, %v1196
          %v1219 = vcombine.high %v1203, %v1203
          %v1220 = vcombine.high %v1210, %v1210
          %v1221 = vcombine.high %v1217, %v1217
          %v1223 = vunpack.c.l.s4 1966171168
          %v1224 = vunpack.c.0.s8 %v1223
          %v1225 = vlaneseq
          %v1226 = vshrl.u32 %v1225, 7
          %v1227 = vsub.s32 %v1224, %v1226
          %v1228 = vrot.slane %v989, %v1227
          %v1229 = vcombine.high %v1228, %v1228
          %v1231 = vunpack.c.l.s4 1966171168
          %v1232 = vunpack.c.0.s8 %v1231
          %v1233 = vlaneseq
          %v1234 = vshrl.u32 %v1233, 7
          %v1235 = vsub.s32 %v1232, %v1234
          %v1236 = vrot.slane %v1228, %v1235
          %v1238 = vunpack.c.l.s4 1966171168
          %v1239 = vunpack.c.0.s8 %v1238
          %v1240 = vlaneseq
          %v1241 = vshrl.u32 %v1240, 7
          %v1242 = vsub.s32 %v1239, %v1241
          %v1243 = vrot.slane %v1229, %v1242
          %v1245 = vcombine.high %v1141, %v1141
          %v1247 = vunpack.c.l.s4 1966171168
          %v1248 = vunpack.c.0.s8 %v1247
          %v1249 = vlaneseq
          %v1250 = vshrl.u32 %v1249, 7
          %v1251 = vsub.s32 %v1248, %v1250
          %v1252 = vrot.slane %v1141, %v1251
          %v1254 = vunpack.c.l.s4 1966171168
          %v1255 = vunpack.c.0.s8 %v1254
          %v1256 = vlaneseq
          %v1257 = vshrl.u32 %v1256, 7
          %v1258 = vsub.s32 %v1255, %v1257
          %v1259 = vrot.slane %v1245, %v1258
          %v1260 = vcombine.high %v1252, %v1252
          %v1261 = vcombine.high %v1259, %v1259
          %v1263 = vunpack.c.l.s4 1966171168
          %v1264 = vunpack.c.0.s8 %v1263
          %v1265 = vlaneseq
          %v1266 = vshrl.u32 %v1265, 7
          %v1267 = vsub.s32 %v1264, %v1266
          %v1268 = vrot.slane %v1252, %v1267
          %v1270 = vunpack.c.l.s4 1966171168
          %v1271 = vunpack.c.0.s8 %v1270
          %v1272 = vlaneseq
          %v1273 = vshrl.u32 %v1272, 7
          %v1274 = vsub.s32 %v1271, %v1273
          %v1275 = vrot.slane %v1259, %v1274
          %v1277 = vunpack.c.l.s4 1966171168
          %v1278 = vunpack.c.0.s8 %v1277
          %v1279 = vlaneseq
          %v1280 = vshrl.u32 %v1279, 7
          %v1281 = vsub.s32 %v1278, %v1280
          %v1282 = vrot.slane %v1260, %v1281
          %v1284 = vunpack.c.l.s4 1966171168
          %v1285 = vunpack.c.0.s8 %v1284
          %v1286 = vlaneseq
          %v1287 = vshrl.u32 %v1286, 7
          %v1288 = vsub.s32 %v1285, %v1287
          %v1289 = vrot.slane %v1261, %v1288
          %v1290 = vcombine.high %v1268, %v1268
          %v1291 = vcombine.high %v1282, %v1282
          %v1292 = vcombine.low %v1196, %v1196
          %v1293 = vcombine.low %v1210, %v1218
          %v1294 = vcombine.low %v1220, %v1203
          %v1296 = vunpack.c.l.s4 1966171168
          %v1297 = vunpack.c.0.s8 %v1296
          %v1298 = vlaneseq
          %v1299 = vshrl.u32 %v1298, 7
          %v1300 = vsub.s32 %v1297, %v1299
          %v1301 = vrot.slane %v1292, %v1300
          %v1303 = vunpack.c.l.s4 1966171168
          %v1304 = vunpack.c.0.s8 %v1303
          %v1305 = vlaneseq
          %v1306 = vshrl.u32 %v1305, 7
          %v1307 = vsub.s32 %v1304, %v1306
          %v1308 = vrot.slane %v1293, %v1307
          %v1310 = vunpack.c.l.s4 1966171168
          %v1311 = vunpack.c.0.s8 %v1310
          %v1312 = vlaneseq
          %v1313 = vshrl.u32 %v1312, 7
          %v1314 = vsub.s32 %v1311, %v1313
          %v1315 = vrot.slane %v1294, %v1314
          %v1316 = vcombine.low %v1301, %v1308
          %v1318 = vunpack.c.l.s4 1966171168
          %v1319 = vunpack.c.0.s8 %v1318
          %v1320 = vlaneseq
          %v1321 = vshrl.u32 %v1320, 7
          %v1322 = vsub.s32 %v1319, %v1321
          %v1323 = vrot.slane %v1316, %v1322
          %v1325 = vunpack.c.l.s4 1966171168
          %v1326 = vunpack.c.0.s8 %v1325
          %v1327 = vlaneseq
          %v1328 = vshrl.u32 %v1327, 7
          %v1329 = vsub.s32 %v1326, %v1328
          %v1330 = vrot.slane %v1315, %v1329
          %v1331 = vcombine.low %v1323, %v1330
          %v1332 = vcombine.low %v1217, %v1217
          %v1333 = vcombine.low %v1219, %v1221
          %v1334 = vcombine.low %v1236, %v1243
          %v1336 = vunpack.c.l.s4 1966171168
          %v1337 = vunpack.c.0.s8 %v1336
          %v1338 = vlaneseq
          %v1339 = vshrl.u32 %v1338, 7
          %v1340 = vsub.s32 %v1337, %v1339
          %v1341 = vrot.slane %v1332, %v1340
          %v1343 = vunpack.c.l.s4 1966171168
          %v1344 = vunpack.c.0.s8 %v1343
          %v1345 = vlaneseq
          %v1346 = vshrl.u32 %v1345, 7
          %v1347 = vsub.s32 %v1344, %v1346
          %v1348 = vrot.slane %v1333, %v1347
          %v1350 = vunpack.c.l.s4 1966171168
          %v1351 = vunpack.c.0.s8 %v1350
          %v1352 = vlaneseq
          %v1353 = vshrl.u32 %v1352, 7
          %v1354 = vsub.s32 %v1351, %v1353
          %v1355 = vrot.slane %v1334, %v1354
          %v1356 = vcombine.low %v1341, %v1348
          %v1358 = vunpack.c.l.s4 1966171168
          %v1359 = vunpack.c.0.s8 %v1358
          %v1360 = vlaneseq
          %v1361 = vshrl.u32 %v1360, 7
          %v1362 = vsub.s32 %v1359, %v1361
          %v1363 = vrot.slane %v1356, %v1362
          %v1365 = vunpack.c.l.s4 1966171168
          %v1366 = vunpack.c.0.s8 %v1365
          %v1367 = vlaneseq
          %v1368 = vshrl.u32 %v1367, 7
          %v1369 = vsub.s32 %v1366, %v1368
          %v1370 = vrot.slane %v1355, %v1369
          %v1371 = vcombine.low %v1363, %v1370
          %v1374 = vcombine.low %v1268, %v1282
          %v1376 = vunpack.c.l.s4 1966171168
          %v1377 = vunpack.c.0.s8 %v1376
          %v1378 = vlaneseq
          %v1379 = vshrl.u32 %v1378, 7
          %v1380 = vsub.s32 %v1377, %v1379
          %v1381 = vrot.slane %v1374, %v1380
          %v1382 = vcombine.low %v1381, %v1381
          %v1384 = vunpack.c.l.s4 1966171168
          %v1385 = vunpack.c.0.s8 %v1384
          %v1386 = vlaneseq
          %v1387 = vshrl.u32 %v1386, 7
          %v1388 = vsub.s32 %v1385, %v1387
          %v1389 = vrot.slane %v1382, %v1388
          %v1390 = vcombine.low %v1389, %v1389
          %v1392 = vunpack.c.l.s4 1966171168
          %v1393 = vunpack.c.0.s8 %v1392
          %v1394 = vlaneseq
          %v1395 = vshrl.u32 %v1394, 7
          %v1396 = vsub.s32 %v1393, %v1395
          %v1397 = vrot.slane %v1290, %v1396
          %v1399 = vunpack.c.l.s4 1966171168
          %v1400 = vunpack.c.0.s8 %v1399
          %v1401 = vlaneseq
          %v1402 = vshrl.u32 %v1401, 7
          %v1403 = vsub.s32 %v1400, %v1402
          %v1404 = vrot.slane %v1397, %v1403
          %v1405 = vcombine.low %v1291, %v1275
          %v1407 = vunpack.c.l.s4 1966171168
          %v1408 = vunpack.c.0.s8 %v1407
          %v1409 = vlaneseq
          %v1410 = vshrl.u32 %v1409, 7
          %v1411 = vsub.s32 %v1408, %v1410
          %v1412 = vrot.slane %v1405, %v1411
          %v1413 = vcombine.low %v1412, %v1412
          %v1415 = vunpack.c.l.s4 1966171168
          %v1416 = vunpack.c.0.s8 %v1415
          %v1417 = vlaneseq
          %v1418 = vshrl.u32 %v1417, 7
          %v1419 = vsub.s32 %v1416, %v1418
          %v1420 = vrot.slane %v1413, %v1419
          %v1421 = vcombine.low %v1420, %v1420
          %v1423 = vunpack.c.l.s4 1966171168
          %v1424 = vunpack.c.0.s8 %v1423
          %v1425 = vlaneseq
          %v1426 = vshrl.u32 %v1425, 7
          %v1427 = vsub.s32 %v1424, %v1426
          %v1428 = vrot.slane %v1289, %v1427
          %v1430 = vunpack.c.l.s4 1966171168
          %v1431 = vunpack.c.0.s8 %v1430
          %v1432 = vlaneseq
          %v1433 = vshrl.u32 %v1432, 7
          %v1434 = vsub.s32 %v1431, %v1433
          %v1435 = vrot.slane %v1428, %v1434
          %vm1440 = vcmask 1040384
          %v1441 = vsel %vm1440, %v1161, %v1331
          %v1442 = vsel %vm1440, %v1168, %v1371
          %v1443 = vsel %vm1102, %v1441, %v1390
          %v1444 = vsel %vm1102, %v1442, %v1421
          %v1445 = vld [vmem:[%s9] sm:$0xff]
          %v1446 = vld [vmem:[%s9 + $0x8] sm:$0x1]
          %v1447 = vadd.f32 %v1443, %v1445
          %v1448 = vadd.f32 %v1404, %v1446
          %v1449 = vadd.f32 %v1444, %v1445
          %v1450 = vadd.f32 %v1435, %v1446
          %v1451 = vld [vmem:[#allocation14] sm:$0x1]
          %v1452 = vld [vmem:[#allocation15] sm:$0x1]
          %vm1453 = vcmask 261120
          %v1454 = vsel %vm1453, %v1447, 0.0
          %1455 = vadd.xlane.f32.xlu0 %v1454
          %v1456 = vpop.xlane.xlu0 %1455
          %vm1457 = vcmask 253952
          %v1458 = vsel %vm1457, %v1448, 0.0
          %1459 = vadd.xlane.f32.xlu0 %v1458
          %v1460 = vpop.xlane.xlu0 %1459
          %v1461 = vsel %vm1453, %v1449, 0.0
          %1462 = vadd.xlane.f32.xlu0 %v1461
          %v1463 = vpop.xlane.xlu0 %1462
          %v1464 = vsel %vm1457, %v1450, 0.0
          %1465 = vadd.xlane.f32.xlu0 %v1464
          %v1466 = vpop.xlane.xlu0 %1465
          %v1467 = vrcp.pop 32.0
          %v1468 = vmul.f32 %v1456, %v1467
          %v1469 = vmul.f32 %v1460, %v1467
          %v1470 = vmul.f32 %v1463, %v1467
          %v1471 = vmul.f32 %v1466, %v1467
          %v1472 = vsub.f32 %v1447, %v1468
          %v1473 = vsub.f32 %v1448, %v1469
          %v1474 = vsub.f32 %v1449, %v1470
          %v1475 = vsub.f32 %v1450, %v1471
          %v1476 = vmul.f32 %v1472, %v1472
          %v1477 = vmul.f32 %v1473, %v1473
          %v1478 = vmul.f32 %v1474, %v1474
          %v1479 = vmul.f32 %v1475, %v1475
          %v1480 = vsel %vm1453, %v1476, 0.0
          %1481 = vadd.xlane.f32.xlu0 %v1480
          %v1482 = vpop.xlane.xlu0 %1481
          %v1483 = vsel %vm1457, %v1477, 0.0
          %1484 = vadd.xlane.f32.xlu0 %v1483
          %v1485 = vpop.xlane.xlu0 %1484
          %v1486 = vsel %vm1453, %v1478, 0.0
          %1487 = vadd.xlane.f32.xlu0 %v1486
          %v1488 = vpop.xlane.xlu0 %1487
          %v1489 = vsel %vm1457, %v1479, 0.0
          %1490 = vadd.xlane.f32.xlu0 %v1489
          %v1491 = vpop.xlane.xlu0 %1490
          %v1492 = vmul.f32 %v1482, %v1467
          %v1493 = vmul.f32 %v1485, %v1467
          %v1494 = vmul.f32 %v1488, %v1467
          %v1495 = vmul.f32 %v1491, %v1467
          %v1496 = vadd.f32 %v1492, 1e-12
          %v1497 = vadd.f32 %v1493, 1e-12
          %v1498 = vadd.f32 %v1494, 1e-12
          %v1499 = vadd.f32 %v1495, 1e-12
          %v1500 = vrsqrt.pop %v1496
          %v1501 = vrsqrt.pop %v1497
          %v1502 = vrsqrt.pop %v1498
          %v1503 = vrsqrt.pop %v1499
          %v1504 = vmul.f32 %v1472, %v1500
          %v1505 = vmul.f32 %v1473, %v1501
          %v1506 = vmul.f32 %v1474, %v1502
          %v1507 = vmul.f32 %v1475, %v1503
          %v1509 = vlaneseq
          %v1510 = vshrl.u32 %v1509, 7
          %v1511 = vsub.s32 0, %v1510
          %v1512 = vrot.slane %v1451, %v1511
          %v1514 = vmul.f32 %v1504, %v1512
          %v1515 = vmul.f32 %v1505, %v1512
          %v1516 = vmul.f32 %v1506, %v1512
          %v1517 = vmul.f32 %v1507, %v1512
          %v1519 = vlaneseq
          %v1520 = vshrl.u32 %v1519, 7
          %v1521 = vsub.s32 0, %v1520
          %v1522 = vrot.slane %v1452, %v1521
          %v1524 = vadd.f32 %v1514, %v1522
          %v1525 = vadd.f32 %v1515, %v1522
          %v1526 = vadd.f32 %v1516, %v1522
          %v1527 = vadd.f32 %v1517, %v1522
          %v1532 = vcombine.high %v1524, %v1524
          %v1534 = vunpack.c.l.s4 1966171168
          %v1535 = vunpack.c.0.s8 %v1534
          %v1536 = vlaneseq
          %v1537 = vshrl.u32 %v1536, 7
          %v1538 = vsub.s32 %v1535, %v1537
          %v1539 = vrot.slane %v1524, %v1538
          %v1541 = vunpack.c.l.s4 1966171168
          %v1542 = vunpack.c.0.s8 %v1541
          %v1543 = vlaneseq
          %v1544 = vshrl.u32 %v1543, 7
          %v1545 = vsub.s32 %v1542, %v1544
          %v1546 = vrot.slane %v1532, %v1545
          %v1547 = vcombine.high %v1539, %v1539
          %v1548 = vcombine.high %v1546, %v1546
          %v1550 = vunpack.c.l.s4 1966171168
          %v1551 = vunpack.c.0.s8 %v1550
          %v1552 = vlaneseq
          %v1553 = vshrl.u32 %v1552, 7
          %v1554 = vsub.s32 %v1551, %v1553
          %v1555 = vrot.slane %v1539, %v1554
          %v1557 = vunpack.c.l.s4 1966171168
          %v1558 = vunpack.c.0.s8 %v1557
          %v1559 = vlaneseq
          %v1560 = vshrl.u32 %v1559, 7
          %v1561 = vsub.s32 %v1558, %v1560
          %v1562 = vrot.slane %v1546, %v1561
          %v1564 = vunpack.c.l.s4 1966171168
          %v1565 = vunpack.c.0.s8 %v1564
          %v1566 = vlaneseq
          %v1567 = vshrl.u32 %v1566, 7
          %v1568 = vsub.s32 %v1565, %v1567
          %v1569 = vrot.slane %v1547, %v1568
          %v1571 = vunpack.c.l.s4 1966171168
          %v1572 = vunpack.c.0.s8 %v1571
          %v1573 = vlaneseq
          %v1574 = vshrl.u32 %v1573, 7
          %v1575 = vsub.s32 %v1572, %v1574
          %v1576 = vrot.slane %v1548, %v1575
          %v1577 = vcombine.high %v1555, %v1555
          %v1578 = vcombine.high %v1562, %v1562
          %v1579 = vcombine.high %v1569, %v1569
          %v1580 = vcombine.high %v1576, %v1576
          %v1582 = vunpack.c.l.s4 1966171168
          %v1583 = vunpack.c.0.s8 %v1582
          %v1584 = vlaneseq
          %v1585 = vshrl.u32 %v1584, 7
          %v1586 = vsub.s32 %v1583, %v1585
          %v1587 = vrot.slane %v1525, %v1586
          %v1589 = vunpack.c.l.s4 1966171168
          %v1590 = vunpack.c.0.s8 %v1589
          %v1591 = vlaneseq
          %v1592 = vshrl.u32 %v1591, 7
          %v1593 = vsub.s32 %v1590, %v1592
          %v1594 = vrot.slane %v1587, %v1593
          %v1595 = vcombine.high %v1526, %v1526
          %v1597 = vunpack.c.l.s4 1966171168
          %v1598 = vunpack.c.0.s8 %v1597
          %v1599 = vlaneseq
          %v1600 = vshrl.u32 %v1599, 7
          %v1601 = vsub.s32 %v1598, %v1600
          %v1602 = vrot.slane %v1526, %v1601
          %v1604 = vunpack.c.l.s4 1966171168
          %v1605 = vunpack.c.0.s8 %v1604
          %v1606 = vlaneseq
          %v1607 = vshrl.u32 %v1606, 7
          %v1608 = vsub.s32 %v1605, %v1607
          %v1609 = vrot.slane %v1595, %v1608
          %v1610 = vcombine.high %v1602, %v1602
          %v1611 = vcombine.high %v1609, %v1609
          %v1613 = vunpack.c.l.s4 1966171168
          %v1614 = vunpack.c.0.s8 %v1613
          %v1615 = vlaneseq
          %v1616 = vshrl.u32 %v1615, 7
          %v1617 = vsub.s32 %v1614, %v1616
          %v1618 = vrot.slane %v1602, %v1617
          %v1620 = vunpack.c.l.s4 1966171168
          %v1621 = vunpack.c.0.s8 %v1620
          %v1622 = vlaneseq
          %v1623 = vshrl.u32 %v1622, 7
          %v1624 = vsub.s32 %v1621, %v1623
          %v1625 = vrot.slane %v1609, %v1624
          %v1627 = vunpack.c.l.s4 1966171168
          %v1628 = vunpack.c.0.s8 %v1627
          %v1629 = vlaneseq
          %v1630 = vshrl.u32 %v1629, 7
          %v1631 = vsub.s32 %v1628, %v1630
          %v1632 = vrot.slane %v1610, %v1631
          %v1634 = vunpack.c.l.s4 1966171168
          %v1635 = vunpack.c.0.s8 %v1634
          %v1636 = vlaneseq
          %v1637 = vshrl.u32 %v1636, 7
          %v1638 = vsub.s32 %v1635, %v1637
          %v1639 = vrot.slane %v1611, %v1638
          %v1640 = vcombine.high %v1618, %v1618
          %v1641 = vcombine.high %v1625, %v1625
          %v1642 = vcombine.high %v1632, %v1632
          %v1643 = vcombine.high %v1639, %v1639
          %v1645 = vunpack.c.l.s4 1966171168
          %v1646 = vunpack.c.0.s8 %v1645
          %v1647 = vlaneseq
          %v1648 = vshrl.u32 %v1647, 7
          %v1649 = vsub.s32 %v1646, %v1648
          %v1650 = vrot.slane %v1527, %v1649
          %v1652 = vunpack.c.l.s4 1966171168
          %v1653 = vunpack.c.0.s8 %v1652
          %v1654 = vlaneseq
          %v1655 = vshrl.u32 %v1654, 7
          %v1656 = vsub.s32 %v1653, %v1655
          %v1657 = vrot.slane %v1650, %v1656
          %v1658 = vcombine.low %v1555, %v1569
          %v1659 = vcombine.low %v1577, %v1579
          %v1660 = vcombine.low %v1562, %v1576
          %v1661 = vcombine.low %v1578, %v1580
          %v1663 = vunpack.c.l.s4 1966171168
          %v1664 = vunpack.c.0.s8 %v1663
          %v1665 = vlaneseq
          %v1666 = vshrl.u32 %v1665, 7
          %v1667 = vsub.s32 %v1664, %v1666
          %v1668 = vrot.slane %v1658, %v1667
          %v1670 = vunpack.c.l.s4 1966171168
          %v1671 = vunpack.c.0.s8 %v1670
          %v1672 = vlaneseq
          %v1673 = vshrl.u32 %v1672, 7
          %v1674 = vsub.s32 %v1671, %v1673
          %v1675 = vrot.slane %v1659, %v1674
          %v1677 = vunpack.c.l.s4 1966171168
          %v1678 = vunpack.c.0.s8 %v1677
          %v1679 = vlaneseq
          %v1680 = vshrl.u32 %v1679, 7
          %v1681 = vsub.s32 %v1678, %v1680
          %v1682 = vrot.slane %v1660, %v1681
          %v1684 = vunpack.c.l.s4 1966171168
          %v1685 = vunpack.c.0.s8 %v1684
          %v1686 = vlaneseq
          %v1687 = vshrl.u32 %v1686, 7
          %v1688 = vsub.s32 %v1685, %v1687
          %v1689 = vrot.slane %v1661, %v1688
          %v1690 = vcombine.low %v1668, %v1675
          %v1691 = vcombine.low %v1682, %v1689
          %v1693 = vunpack.c.l.s4 1966171168
          %v1694 = vunpack.c.0.s8 %v1693
          %v1695 = vlaneseq
          %v1696 = vshrl.u32 %v1695, 7
          %v1697 = vsub.s32 %v1694, %v1696
          %v1698 = vrot.slane %v1690, %v1697
          %v1700 = vunpack.c.l.s4 1966171168
          %v1701 = vunpack.c.0.s8 %v1700
          %v1702 = vlaneseq
          %v1703 = vshrl.u32 %v1702, 7
          %v1704 = vsub.s32 %v1701, %v1703
          %v1705 = vrot.slane %v1691, %v1704
          %v1706 = vcombine.low %v1698, %v1705
          %v1707 = vcombine.low %v1594, %v1618
          %v1708 = vcombine.low %v1632, %v1640
          %v1709 = vcombine.low %v1642, %v1625
          %v1710 = vcombine.low %v1639, %v1641
          %v1712 = vunpack.c.l.s4 1966171168
          %v1713 = vunpack.c.0.s8 %v1712
          %v1714 = vlaneseq
          %v1715 = vshrl.u32 %v1714, 7
          %v1716 = vsub.s32 %v1713, %v1715
          %v1717 = vrot.slane %v1707, %v1716
          %v1719 = vunpack.c.l.s4 1966171168
          %v1720 = vunpack.c.0.s8 %v1719
          %v1721 = vlaneseq
          %v1722 = vshrl.u32 %v1721, 7
          %v1723 = vsub.s32 %v1720, %v1722
          %v1724 = vrot.slane %v1708, %v1723
          %v1726 = vunpack.c.l.s4 1966171168
          %v1727 = vunpack.c.0.s8 %v1726
          %v1728 = vlaneseq
          %v1729 = vshrl.u32 %v1728, 7
          %v1730 = vsub.s32 %v1727, %v1729
          %v1731 = vrot.slane %v1709, %v1730
          %v1733 = vunpack.c.l.s4 1966171168
          %v1734 = vunpack.c.0.s8 %v1733
          %v1735 = vlaneseq
          %v1736 = vshrl.u32 %v1735, 7
          %v1737 = vsub.s32 %v1734, %v1736
          %v1738 = vrot.slane %v1710, %v1737
          %v1739 = vcombine.low %v1717, %v1724
          %v1740 = vcombine.low %v1731, %v1738
          %v1742 = vunpack.c.l.s4 1966171168
          %v1743 = vunpack.c.0.s8 %v1742
          %v1744 = vlaneseq
          %v1745 = vshrl.u32 %v1744, 7
          %v1746 = vsub.s32 %v1743, %v1745
          %v1747 = vrot.slane %v1739, %v1746
          %v1749 = vunpack.c.l.s4 1966171168
          %v1750 = vunpack.c.0.s8 %v1749
          %v1751 = vlaneseq
          %v1752 = vshrl.u32 %v1751, 7
          %v1753 = vsub.s32 %v1750, %v1752
          %v1754 = vrot.slane %v1740, %v1753
          %v1755 = vcombine.low %v1747, %v1754
          %v1756 = vcombine.low %v1643, %v1657
          %v1758 = vunpack.c.l.s4 1966171168
          %v1759 = vunpack.c.0.s8 %v1758
          %v1760 = vlaneseq
          %v1761 = vshrl.u32 %v1760, 7
          %v1762 = vsub.s32 %v1759, %v1761
          %v1763 = vrot.slane %v1756, %v1762
          %v1765 = vunpack.c.l.s4 1966171168
          %v1766 = vunpack.c.0.s8 %v1765
          %v1767 = vlaneseq
          %v1768 = vshrl.u32 %v1767, 7
          %v1769 = vsub.s32 %v1766, %v1768
          %v1770 = vrot.slane %v1763, %v1769
          %1774 = vst.msk [vmem:[#allocation2] sm:$0xff] %vm1453, %v1706
          %1775 = vst.msk [vmem:[#allocation2 + $0x8] sm:$0xff] %vm1453, %v1755
          %vm1776 = vcmask 254976
          %1777 = vst.msk [vmem:[#allocation2 + $0x10] sm:$0x3] %vm1776, %v1770
        $region124: #{deepdraft_forward.2} parent=87 // pred_fallthru
          _
        %v1778 = vld [vmem:[%s715] sm:$0xff]
        %v1779 = vld [vmem:[#allocation2] sm:$0xff]
        %v1780 = vld [vmem:[#allocation2 + $0x8] sm:$0xff]
        %v1781 = vld [vmem:[#allocation2 + $0x10] sm:$0x3]
        %v1782 = vld [vmem:[%s696] sm:$0xf]
        %v1783 = vld [vmem:[%s696 + $0x4] sm:$0xf]
        %v1784 = vld [vmem:[%s696 + $0x8] sm:$0xf]
        %v1785 = vld [vmem:[%s696 + $0xc] sm:$0xf]
        %v1786 = vpack.c.bf16 %v1780, %v1779
        %v1787 = vpack.c.bf16 %v1781, %v1781
        %v1788 = vlaneseq
        %v1789 = vshrl.u32 %v1788, 7
        %v1790 = vsub.s32 0, %v1789
        %v1791 = vrot.slane %v1778, %v1790
        %v1796 = vunpack.c.l.b16 %v1782
        %v1797 = vunpack.c.l.b16 %v1783
        %v1798 = vunpack.c.l.b16 %v1784
        %v1799 = vunpack.c.l.b16 %v1785
        %v1800 = vpack.c.b16 %v1797, %v1796
        %v1801 = vpack.c.b16 %v1799, %v1798
        %vm1804 = vcmask 261120
        %v1806 = vsel %vm1804, %v1786, 0
        %v1809 = vsel %vm1804, %v1787, 0
        %1811 = vmatprep.subr.bf16.mxu0 0
        %1812 = vmatpush1.bf16.msra.mxu0 %v1800
        %1813 = vmatprep.subr.bf16.mxu0 0
        %1814 = vmatpush1.bf16.msra.mxu0 %v1801
        %1815 = vmatprep.subr.bf16.mxu0 0
        %1816 = vmatpush1.bf16.msra.mxu0 0
        %1817 = vmatprep.subr.bf16.mxu0 0
        %1818 = vmatpush1.bf16.msra.mxu0 0
        %1819 = vmatprep.subr.bf16.mxu0 0
        %1820 = vmatpush1.bf16.msra.mxu0 0
        %1821 = vmatprep.subr.bf16.mxu0 0
        %1822 = vmatpush1.bf16.msra.mxu0 0
        %1823 = vmatprep.subr.bf16.mxu0 0
        %1824 = vmatpush1.bf16.msra.mxu0 0
        %1825 = vmatprep.subr.bf16.mxu0 0
        %1826 = vmatpush1.bf16.msra.mxu0 0
        %1827 = vmatprep.subr.bf16.mxu0 0
        %1828 = vmatpush1.bf16.msra.mxu0 0
        %1829 = vmatprep.subr.bf16.mxu0 0
        %1830 = vmatpush1.bf16.msra.mxu0 0
        %1831 = vmatprep.subr.bf16.mxu0 0
        %1832 = vmatpush1.bf16.msra.mxu0 0
        %1833 = vmatprep.subr.bf16.mxu0 0
        %1834 = vmatpush1.bf16.msra.mxu0 0
        %1835 = vmatprep.subr.bf16.mxu0 0
        %1836 = vmatpush1.bf16.msra.mxu0 0
        %1837 = vmatprep.subr.bf16.mxu0 0
        %1838 = vmatpush1.bf16.msra.mxu0 0
        %1839 = vmatprep.subr.bf16.mxu0 0
        %1840 = vmatpush1.bf16.msra.mxu0 0
        %1841 = vmatprep.subr.bf16.mxu0 0
        %1842 = vmatpush1.bf16.msra.mxu0 0
        %1843 = vmatprep.mubr.bf16.mxu0 0
        %1844 = vmatmul.mubr.bf16.gmra.mrb[0].mxu0 %v1806
        %v1845 = vpop.f32.mrb[0].mxu0
        %v1846 = vadd.f32 %v1791, %v1845
        %v1847 = vpop.f32.mrb[0].mxu0
        %v1848 = vpop.f32.mrb[0].mxu0
        %v1849 = vadd.f32 %v1791, %v1848
        %v1850 = vpop.f32.mrb[0].mxu0
        %1851 = vmatprep.mubr.bf16.mxu0 0
        %1852 = vmatmul.mubr.bf16.gmra.mrb[0].mxu0 %v1809
        %v1853 = vpop.f32.mrb[0].mxu0
        %v1854 = vadd.f32 %v1791, %v1853
        %v1855 = vpop.f32.mrb[0].mxu0
        %v1856 = vpop.f32.mrb[0].mxu0
        %v1857 = vpop.f32.mrb[0].mxu0
        %1858 = vdwg.mxu0
        %v1862 = vcombine.high %v1846, %v1846
        %v1864 = vunpack.c.l.s4 1966171168
        %v1865 = vunpack.c.0.s8 %v1864
        %v1866 = vlaneseq
        %v1867 = vshrl.u32 %v1866, 7
        %v1868 = vsub.s32 %v1865, %v1867
        %v1869 = vrot.slane %v1846, %v1868
        %v1871 = vunpack.c.l.s4 1966171168
        %v1872 = vunpack.c.0.s8 %v1871
        %v1873 = vlaneseq
        %v1874 = vshrl.u32 %v1873, 7
        %v1875 = vsub.s32 %v1872, %v1874
        %v1876 = vrot.slane %v1862, %v1875
        %v1877 = vcombine.high %v1869, %v1869
        %v1878 = vcombine.high %v1876, %v1876
        %v1880 = vunpack.c.l.s4 1966171168
        %v1881 = vunpack.c.0.s8 %v1880
        %v1882 = vlaneseq
        %v1883 = vshrl.u32 %v1882, 7
        %v1884 = vsub.s32 %v1881, %v1883
        %v1885 = vrot.slane %v1869, %v1884
        %v1887 = vunpack.c.l.s4 1966171168
        %v1888 = vunpack.c.0.s8 %v1887
        %v1889 = vlaneseq
        %v1890 = vshrl.u32 %v1889, 7
        %v1891 = vsub.s32 %v1888, %v1890
        %v1892 = vrot.slane %v1876, %v1891
        %v1894 = vunpack.c.l.s4 1966171168
        %v1895 = vunpack.c.0.s8 %v1894
        %v1896 = vlaneseq
        %v1897 = vshrl.u32 %v1896, 7
        %v1898 = vsub.s32 %v1895, %v1897
        %v1899 = vrot.slane %v1877, %v1898
        %v1901 = vunpack.c.l.s4 1966171168
        %v1902 = vunpack.c.0.s8 %v1901
        %v1903 = vlaneseq
        %v1904 = vshrl.u32 %v1903, 7
        %v1905 = vsub.s32 %v1902, %v1904
        %v1906 = vrot.slane %v1878, %v1905
        %v1907 = vcombine.high %v1885, %v1885
        %v1908 = vcombine.high %v1892, %v1892
        %v1909 = vcombine.high %v1899, %v1899
        %v1910 = vcombine.high %v1906, %v1906
        %v1911 = vcombine.high %v1849, %v1849
        %v1913 = vunpack.c.l.s4 1966171168
        %v1914 = vunpack.c.0.s8 %v1913
        %v1915 = vlaneseq
        %v1916 = vshrl.u32 %v1915, 7
        %v1917 = vsub.s32 %v1914, %v1916
        %v1918 = vrot.slane %v1849, %v1917
        %v1920 = vunpack.c.l.s4 1966171168
        %v1921 = vunpack.c.0.s8 %v1920
        %v1922 = vlaneseq
        %v1923 = vshrl.u32 %v1922, 7
        %v1924 = vsub.s32 %v1921, %v1923
        %v1925 = vrot.slane %v1911, %v1924
        %v1926 = vcombine.high %v1918, %v1918
        %v1927 = vcombine.high %v1925, %v1925
        %v1929 = vunpack.c.l.s4 1966171168
        %v1930 = vunpack.c.0.s8 %v1929
        %v1931 = vlaneseq
        %v1932 = vshrl.u32 %v1931, 7
        %v1933 = vsub.s32 %v1930, %v1932
        %v1934 = vrot.slane %v1918, %v1933
        %v1936 = vunpack.c.l.s4 1966171168
        %v1937 = vunpack.c.0.s8 %v1936
        %v1938 = vlaneseq
        %v1939 = vshrl.u32 %v1938, 7
        %v1940 = vsub.s32 %v1937, %v1939
        %v1941 = vrot.slane %v1925, %v1940
        %v1943 = vunpack.c.l.s4 1966171168
        %v1944 = vunpack.c.0.s8 %v1943
        %v1945 = vlaneseq
        %v1946 = vshrl.u32 %v1945, 7
        %v1947 = vsub.s32 %v1944, %v1946
        %v1948 = vrot.slane %v1926, %v1947
        %v1950 = vunpack.c.l.s4 1966171168
        %v1951 = vunpack.c.0.s8 %v1950
        %v1952 = vlaneseq
        %v1953 = vshrl.u32 %v1952, 7
        %v1954 = vsub.s32 %v1951, %v1953
        %v1955 = vrot.slane %v1927, %v1954
        %v1956 = vcombine.high %v1934, %v1934
        %v1957 = vcombine.high %v1941, %v1941
        %v1958 = vcombine.high %v1948, %v1948
        %v1959 = vcombine.high %v1955, %v1955
        %v1961 = vunpack.c.l.s4 1966171168
        %v1962 = vunpack.c.0.s8 %v1961
        %v1963 = vlaneseq
        %v1964 = vshrl.u32 %v1963, 7
        %v1965 = vsub.s32 %v1962, %v1964
        %v1966 = vrot.slane %v1854, %v1965
        %v1967 = vcombine.high %v1966, %v1966
        %v1969 = vunpack.c.l.s4 1966171168
        %v1970 = vunpack.c.0.s8 %v1969
        %v1971 = vlaneseq
        %v1972 = vshrl.u32 %v1971, 7
        %v1973 = vsub.s32 %v1970, %v1972
        %v1974 = vrot.slane %v1966, %v1973
        %v1976 = vunpack.c.l.s4 1966171168
        %v1977 = vunpack.c.0.s8 %v1976
        %v1978 = vlaneseq
        %v1979 = vshrl.u32 %v1978, 7
        %v1980 = vsub.s32 %v1977, %v1979
        %v1981 = vrot.slane %v1967, %v1980
        %v1982 = vcombine.low %v1885, %v1899
        %v1983 = vcombine.low %v1907, %v1909
        %v1984 = vcombine.low %v1892, %v1906
        %v1985 = vcombine.low %v1908, %v1910
        %v1987 = vunpack.c.l.s4 1966171168
        %v1988 = vunpack.c.0.s8 %v1987
        %v1989 = vlaneseq
        %v1990 = vshrl.u32 %v1989, 7
        %v1991 = vsub.s32 %v1988, %v1990
        %v1992 = vrot.slane %v1982, %v1991
        %v1994 = vunpack.c.l.s4 1966171168
        %v1995 = vunpack.c.0.s8 %v1994
        %v1996 = vlaneseq
        %v1997 = vshrl.u32 %v1996, 7
        %v1998 = vsub.s32 %v1995, %v1997
        %v1999 = vrot.slane %v1983, %v1998
        %v2001 = vunpack.c.l.s4 1966171168
        %v2002 = vunpack.c.0.s8 %v2001
        %v2003 = vlaneseq
        %v2004 = vshrl.u32 %v2003, 7
        %v2005 = vsub.s32 %v2002, %v2004
        %v2006 = vrot.slane %v1984, %v2005
        %v2008 = vunpack.c.l.s4 1966171168
        %v2009 = vunpack.c.0.s8 %v2008
        %v2010 = vlaneseq
        %v2011 = vshrl.u32 %v2010, 7
        %v2012 = vsub.s32 %v2009, %v2011
        %v2013 = vrot.slane %v1985, %v2012
        %v2014 = vcombine.low %v1992, %v1999
        %v2015 = vcombine.low %v2006, %v2013
        %v2017 = vunpack.c.l.s4 1966171168
        %v2018 = vunpack.c.0.s8 %v2017
        %v2019 = vlaneseq
        %v2020 = vshrl.u32 %v2019, 7
        %v2021 = vsub.s32 %v2018, %v2020
        %v2022 = vrot.slane %v2014, %v2021
        %v2024 = vunpack.c.l.s4 1966171168
        %v2025 = vunpack.c.0.s8 %v2024
        %v2026 = vlaneseq
        %v2027 = vshrl.u32 %v2026, 7
        %v2028 = vsub.s32 %v2025, %v2027
        %v2029 = vrot.slane %v2015, %v2028
        %v2030 = vcombine.low %v2022, %v2029
        %v2032 = vunpack.c.l.s4 1966171168
        %v2033 = vunpack.c.0.s8 %v2032
        %v2034 = vlaneseq
        %v2035 = vshrl.u32 %v2034, 7
        %v2036 = vsub.s32 %v2033, %v2035
        %v2037 = vrot.slane %v1934, %v2036
        %v2039 = vunpack.c.l.s4 1966171168
        %v2040 = vunpack.c.0.s8 %v2039
        %v2041 = vlaneseq
        %v2042 = vshrl.u32 %v2041, 7
        %v2043 = vsub.s32 %v2040, %v2042
        %v2044 = vrot.slane %v2037, %v2043
        %v2045 = vcombine.low %v1948, %v1956
        %v2046 = vcombine.low %v1958, %v1941
        %v2047 = vcombine.low %v1955, %v1957
        %v2048 = vcombine.low %v1959, %v1974
        %v2050 = vunpack.c.l.s4 1966171168
        %v2051 = vunpack.c.0.s8 %v2050
        %v2052 = vlaneseq
        %v2053 = vshrl.u32 %v2052, 7
        %v2054 = vsub.s32 %v2051, %v2053
        %v2055 = vrot.slane %v2045, %v2054
        %v2057 = vunpack.c.l.s4 1966171168
        %v2058 = vunpack.c.0.s8 %v2057
        %v2059 = vlaneseq
        %v2060 = vshrl.u32 %v2059, 7
        %v2061 = vsub.s32 %v2058, %v2060
        %v2062 = vrot.slane %v2046, %v2061
        %v2064 = vunpack.c.l.s4 1966171168
        %v2065 = vunpack.c.0.s8 %v2064
        %v2066 = vlaneseq
        %v2067 = vshrl.u32 %v2066, 7
        %v2068 = vsub.s32 %v2065, %v2067
        %v2069 = vrot.slane %v2047, %v2068
        %v2071 = vunpack.c.l.s4 1966171168
        %v2072 = vunpack.c.0.s8 %v2071
        %v2073 = vlaneseq
        %v2074 = vshrl.u32 %v2073, 7
        %v2075 = vsub.s32 %v2072, %v2074
        %v2076 = vrot.slane %v2048, %v2075
        %v2077 = vcombine.low %v2055, %v2062
        %v2078 = vcombine.low %v2069, %v2076
        %v2080 = vunpack.c.l.s4 1966171168
        %v2081 = vunpack.c.0.s8 %v2080
        %v2082 = vlaneseq
        %v2083 = vshrl.u32 %v2082, 7
        %v2084 = vsub.s32 %v2081, %v2083
        %v2085 = vrot.slane %v2077, %v2084
        %v2087 = vunpack.c.l.s4 1966171168
        %v2088 = vunpack.c.0.s8 %v2087
        %v2089 = vlaneseq
        %v2090 = vshrl.u32 %v2089, 7
        %v2091 = vsub.s32 %v2088, %v2090
        %v2092 = vrot.slane %v2078, %v2091
        %v2093 = vcombine.low %v2085, %v2092
        %v2095 = vunpack.c.l.s4 1966171168
        %v2096 = vunpack.c.0.s8 %v2095
        %v2097 = vlaneseq
        %v2098 = vshrl.u32 %v2097, 7
        %v2099 = vsub.s32 %v2096, %v2098
        %v2100 = vrot.slane %v1981, %v2099
        %v2102 = vunpack.c.l.s4 1966171168
        %v2103 = vunpack.c.0.s8 %v2102
        %v2104 = vlaneseq
        %v2105 = vshrl.u32 %v2104, 7
        %v2106 = vsub.s32 %v2103, %v2105
        %v2107 = vrot.slane %v2100, %v2106
        %v2112 = vpack.c.bf16 %v2044, %v2030
        %v2113 = vpack.c.bf16 %v2107, %v2093
        %2115 = vrot.lane.b32.xlu0 %v2112, 96
        %v2116 = vpop.permute.xlu0 %2115
        %vm2117 = vcmask 64512
        %v2119 = vsel %vm2117, %v2112, 0
        %v2122 = vsel %vm2117, %v2116, 0
        %2124 = vmatprep.subr.bf16.mxu0 0
        %2125 = vmatpush1.bf16.xpose.msra.mxu0 %v2122
        %2126 = vmatprep.subr.bf16.mxu0 0
        %2127 = vmatpush1.bf16.xpose.msra.mxu0 0
        %2128 = vmatprep.subr.bf16.mxu0 0
        %2129 = vmatpush1.bf16.xpose.msra.mxu0 0
        %2130 = vmatprep.subr.bf16.mxu0 0
        %2131 = vmatpush1.bf16.xpose.msra.mxu0 0
        %2132 = vmatprep.subr.bf16.mxu0 0
        %2133 = vmatpush1.bf16.xpose.msra.mxu0 0
        %2134 = vmatprep.subr.bf16.mxu0 0
        %2135 = vmatpush1.bf16.xpose.msra.mxu0 0
        %2136 = vmatprep.subr.bf16.mxu0 0
        %2137 = vmatpush1.bf16.xpose.msra.mxu0 0
        %2138 = vmatprep.subr.bf16.mxu0 0
        %2139 = vmatpush1.bf16.xpose.msra.mxu0 0
        %2140 = vmatprep.subr.bf16.mxu0 0
        %2141 = vmatpush1.bf16.xpose.msra.mxu0 0
        %2142 = vmatprep.subr.bf16.mxu0 0
        %2143 = vmatpush1.bf16.xpose.msra.mxu0 0
        %2144 = vmatprep.subr.bf16.mxu0 0
        %2145 = vmatpush1.bf16.xpose.msra.mxu0 0
        %2146 = vmatprep.subr.bf16.mxu0 0
        %2147 = vmatpush1.bf16.xpose.msra.mxu0 0
        %2148 = vmatprep.subr.bf16.mxu0 0
        %2149 = vmatpush1.bf16.xpose.msra.mxu0 0
        %2150 = vmatprep.subr.bf16.mxu0 0
        %2151 = vmatpush1.bf16.xpose.msra.mxu0 0
        %2152 = vmatprep.subr.bf16.mxu0 0
        %2153 = vmatpush1.bf16.xpose.msra.mxu0 0
        %2154 = vmatprep.subr.bf16.mxu0 0
        %2155 = vmatpush1.bf16.xpose.msra.mxu0 0
        %2156 = vmatprep.mubr.bf16.mxu0 0
        %2157 = vmatmul.mubr.bf16.gmra.mrb[0].mxu0 %v2119
        %v2158 = vpop.f32.mrb[0].mxu0
        %v2159 = vadd.f32 0.0, %v2158
        %v2160 = vpop.f32.mrb[0].mxu0
        %v2161 = vpop.f32.mrb[0].mxu0
        %v2162 = vadd.f32 0.0, %v2161
        %v2163 = vpop.f32.mrb[0].mxu0
        %2164 = vdwg.mxu0
        %2166 = vrot.lane.b32.xlu0 %v2113, 96
        %v2167 = vpop.permute.xlu0 %2166
        %v2169 = vsel %vm2117, %v2113, 0
        %v2172 = vsel %vm2117, %v2167, 0
        %2174 = vmatprep.subr.bf16.mxu0 0
        %2175 = vmatpush1.bf16.xpose.msra.mxu0 %v2172
        %2176 = vmatprep.subr.bf16.mxu0 0
        %2177 = vmatpush1.bf16.xpose.msra.mxu0 0
        %2178 = vmatprep.subr.bf16.mxu0 0
        %2179 = vmatpush1.bf16.xpose.msra.mxu0 0
        %2180 = vmatprep.subr.bf16.mxu0 0
        %2181 = vmatpush1.bf16.xpose.msra.mxu0 0
        %2182 = vmatprep.subr.bf16.mxu0 0
        %2183 = vmatpush1.bf16.xpose.msra.mxu0 0
        %2184 = vmatprep.subr.bf16.mxu0 0
        %2185 = vmatpush1.bf16.xpose.msra.mxu0 0
        %2186 = vmatprep.subr.bf16.mxu0 0
        %2187 = vmatpush1.bf16.xpose.msra.mxu0 0
        %2188 = vmatprep.subr.bf16.mxu0 0
        %2189 = vmatpush1.bf16.xpose.msra.mxu0 0
        %2190 = vmatprep.subr.bf16.mxu0 0
        %2191 = vmatpush1.bf16.xpose.msra.mxu0 0
        %2192 = vmatprep.subr.bf16.mxu0 0
        %2193 = vmatpush1.bf16.xpose.msra.mxu0 0
        %2194 = vmatprep.subr.bf16.mxu0 0
        %2195 = vmatpush1.bf16.xpose.msra.mxu0 0
        %2196 = vmatprep.subr.bf16.mxu0 0
        %2197 = vmatpush1.bf16.xpose.msra.mxu0 0
        %2198 = vmatprep.subr.bf16.mxu0 0
        %2199 = vmatpush1.bf16.xpose.msra.mxu0 0
        %2200 = vmatprep.subr.bf16.mxu0 0
        %2201 = vmatpush1.bf16.xpose.msra.mxu0 0
        %2202 = vmatprep.subr.bf16.mxu0 0
        %2203 = vmatpush1.bf16.xpose.msra.mxu0 0
        %2204 = vmatprep.subr.bf16.mxu0 0
        %2205 = vmatpush1.bf16.xpose.msra.mxu0 0
        %2206 = vmatprep.mubr.bf16.mxu0 0
        %2207 = vmatmul.mubr.bf16.gmra.mrb[0].mxu0 %v2169
        %v2208 = vpop.f32.mrb[0].mxu0
        %v2209 = vadd.f32 0.0, %v2208
        %v2210 = vpop.f32.mrb[0].mxu0
        %v2211 = vpop.f32.mrb[0].mxu0
        %v2212 = vadd.f32 0.0, %v2211
        %v2213 = vpop.f32.mrb[0].mxu0
        %2214 = vdwg.mxu0
        %vm2215 = vcmask 72704
        %v2216 = vsel %vm2215, %v2159, -inf
        %2217 = vmax.xlane.f32.xlu0 %v2216
        %v2218 = vpop.xlane.xlu0 %2217
        %vm2219 = vcmask 65536
        %v2220 = vsel %vm2219, %v2162, -inf
        %2221 = vmax.xlane.f32.xlu0 %v2220
        %v2222 = vpop.xlane.xlu0 %2221
        %v2223 = vsel %vm2215, %v2209, -inf
        %2224 = vmax.xlane.f32.xlu0 %v2223
        %v2225 = vpop.xlane.xlu0 %2224
        %v2226 = vsel %vm2219, %v2212, -inf
        %2227 = vmax.xlane.f32.xlu0 %v2226
        %v2228 = vpop.xlane.xlu0 %2227
        %v2229 = vsub.f32 %v2159, %v2218
        %v2230 = vsub.f32 %v2162, %v2222
        %v2231 = vsub.f32 %v2209, %v2225
        %v2232 = vsub.f32 %v2212, %v2228
        %v2233 = vmul.f32 %v2229, 1.442695
        %v2234 = vpow.pop %v2233
        %v2235 = vmul.f32 %v2230, 1.442695
        %v2236 = vpow.pop %v2235
        %v2237 = vmul.f32 %v2231, 1.442695
        %v2238 = vpow.pop %v2237
        %v2239 = vmul.f32 %v2232, 1.442695
        %v2240 = vpow.pop %v2239
        %v2241 = vsel %vm2215, %v2234, 0.0
        %2242 = vadd.xlane.f32.xlu0 %v2241
        %v2243 = vpop.xlane.xlu0 %2242
        %v2244 = vsel %vm2219, %v2236, 0.0
        %2245 = vadd.xlane.f32.xlu0 %v2244
        %v2246 = vpop.xlane.xlu0 %2245
        %v2247 = vsel %vm2215, %v2238, 0.0
        %2248 = vadd.xlane.f32.xlu0 %v2247
        %v2249 = vpop.xlane.xlu0 %2248
        %v2250 = vsel %vm2219, %v2240, 0.0
        %2251 = vadd.xlane.f32.xlu0 %v2250
        %v2252 = vpop.xlane.xlu0 %2251
        %v2253 = vrcp.pop %v2243
        %v2254 = vrcp.pop %v2246
        %v2255 = vrcp.pop %v2249
        %v2256 = vrcp.pop %v2252
        %v2257 = vmul.f32 %v2234, %v2253
        %v2258 = vmul.f32 %v2236, %v2254
        %v2259 = vmul.f32 %v2238, %v2255
        %v2260 = vmul.f32 %v2240, %v2256
        %v2261 = vpack.c.bf16 %v2258, %v2257
        %v2262 = vpack.c.bf16 %v2260, %v2259
        %2263 = vrot.lane.b32.xlu0 %v2112, 64
        %v2264 = vpop.permute.xlu0 %2263
        %v2266 = vsel %vm2215, %v2261, 0
        %vm2268 = vcmask 1043456
        %vm2269 = vcmask 1044480
        %v2270 = vsel %vm2268, 4294967295, 65535
        %v2271 = vsel %vm2269, %v2270, 0
        %v2273 = vand.u32 %v2264, %v2271
        %2275 = vmatprep.subr.bf16.mxu0 0
        %2276 = vmatpush1.bf16.msra.mxu0 %v2273
        %2277 = vmatprep.subr.bf16.mxu0 0
        %2278 = vmatpush1.bf16.msra.mxu0 0
        %2279 = vmatprep.subr.bf16.mxu0 0
        %2280 = vmatpush1.bf16.msra.mxu0 0
        %2281 = vmatprep.subr.bf16.mxu0 0
        %2282 = vmatpush1.bf16.msra.mxu0 0
        %2283 = vmatprep.subr.bf16.mxu0 0
        %2284 = vmatpush1.bf16.msra.mxu0 0
        %2285 = vmatprep.subr.bf16.mxu0 0
        %2286 = vmatpush1.bf16.msra.mxu0 0
        %2287 = vmatprep.subr.bf16.mxu0 0
        %2288 = vmatpush1.bf16.msra.mxu0 0
        %2289 = vmatprep.subr.bf16.mxu0 0
        %2290 = vmatpush1.bf16.msra.mxu0 0
        %2291 = vmatprep.subr.bf16.mxu0 0
        %2292 = vmatpush1.bf16.msra.mxu0 0
        %2293 = vmatprep.subr.bf16.mxu0 0
        %2294 = vmatpush1.bf16.msra.mxu0 0
        %2295 = vmatprep.subr.bf16.mxu0 0
        %2296 = vmatpush1.bf16.msra.mxu0 0
        %2297 = vmatprep.subr.bf16.mxu0 0
        %2298 = vmatpush1.bf16.msra.mxu0 0
        %2299 = vmatprep.subr.bf16.mxu0 0
        %2300 = vmatpush1.bf16.msra.mxu0 0
        %2301 = vmatprep.subr.bf16.mxu0 0
        %2302 = vmatpush1.bf16.msra.mxu0 0
        %2303 = vmatprep.subr.bf16.mxu0 0
        %2304 = vmatpush1.bf16.msra.mxu0 0
        %2305 = vmatprep.subr.bf16.mxu0 0
        %2306 = vmatpush1.bf16.msra.mxu0 0
        %2307 = vmatprep.mubr.bf16.mxu0 0
        %2308 = vmatmul.mubr.bf16.gmra.mrb[0].mxu0 %v2266
        %v2309 = vpop.f32.mrb[0].mxu0
        %v2310 = vadd.f32 0.0, %v2309
        %v2311 = vpop.f32.mrb[0].mxu0
        %v2312 = vpop.f32.mrb[0].mxu0
        %v2313 = vadd.f32 0.0, %v2312
        %v2314 = vpop.f32.mrb[0].mxu0
        %2315 = vdwg.mxu0
        %2316 = vrot.lane.b32.xlu0 %v2113, 64
        %v2317 = vpop.permute.xlu0 %2316
        %v2319 = vsel %vm2215, %v2262, 0
        %v2322 = vand.u32 %v2317, %v2271
        %2324 = vmatprep.subr.bf16.mxu0 0
        %2325 = vmatpush1.bf16.msra.mxu0 %v2322
        %2326 = vmatprep.subr.bf16.mxu0 0
        %2327 = vmatpush1.bf16.msra.mxu0 0
        %2328 = vmatprep.subr.bf16.mxu0 0
        %2329 = vmatpush1.bf16.msra.mxu0 0
        %2330 = vmatprep.subr.bf16.mxu0 0
        %2331 = vmatpush1.bf16.msra.mxu0 0
        %2332 = vmatprep.subr.bf16.mxu0 0
        %2333 = vmatpush1.bf16.msra.mxu0 0
        %2334 = vmatprep.subr.bf16.mxu0 0
        %2335 = vmatpush1.bf16.msra.mxu0 0
        %2336 = vmatprep.subr.bf16.mxu0 0
        %2337 = vmatpush1.bf16.msra.mxu0 0
        %2338 = vmatprep.subr.bf16.mxu0 0
        %2339 = vmatpush1.bf16.msra.mxu0 0
        %2340 = vmatprep.subr.bf16.mxu0 0
        %2341 = vmatpush1.bf16.msra.mxu0 0
        %2342 = vmatprep.subr.bf16.mxu0 0
        %2343 = vmatpush1.bf16.msra.mxu0 0
        %2344 = vmatprep.subr.bf16.mxu0 0
        %2345 = vmatpush1.bf16.msra.mxu0 0
        %2346 = vmatprep.subr.bf16.mxu0 0
        %2347 = vmatpush1.bf16.msra.mxu0 0
        %2348 = vmatprep.subr.bf16.mxu0 0
        %2349 = vmatpush1.bf16.msra.mxu0 0
        %2350 = vmatprep.subr.bf16.mxu0 0
        %2351 = vmatpush1.bf16.msra.mxu0 0
        %2352 = vmatprep.subr.bf16.mxu0 0
        %2353 = vmatpush1.bf16.msra.mxu0 0
        %2354 = vmatprep.subr.bf16.mxu0 0
        %2355 = vmatpush1.bf16.msra.mxu0 0
        %2356 = vmatprep.mubr.bf16.mxu0 0
        %2357 = vmatmul.mubr.bf16.gmra.mrb[0].mxu0 %v2319
        %v2358 = vpop.f32.mrb[0].mxu0
        %v2359 = vadd.f32 0.0, %v2358
        %v2360 = vpop.f32.mrb[0].mxu0
        %v2361 = vpop.f32.mrb[0].mxu0
        %v2362 = vadd.f32 0.0, %v2361
        %v2363 = vpop.f32.mrb[0].mxu0
        %2364 = vdwg.mxu0
        %v2369 = vcombine.high %v2310, %v2310
        %v2371 = vunpack.c.l.s4 1966171168
        %v2372 = vunpack.c.0.s8 %v2371
        %v2373 = vlaneseq
        %v2374 = vshrl.u32 %v2373, 7
        %v2375 = vsub.s32 %v2372, %v2374
        %v2376 = vrot.slane %v2310, %v2375
        %v2378 = vunpack.c.l.s4 1966171168
        %v2379 = vunpack.c.0.s8 %v2378
        %v2380 = vlaneseq
        %v2381 = vshrl.u32 %v2380, 7
        %v2382 = vsub.s32 %v2379, %v2381
        %v2383 = vrot.slane %v2369, %v2382
        %v2384 = vcombine.high %v2376, %v2376
        %v2385 = vcombine.high %v2383, %v2383
        %v2387 = vunpack.c.l.s4 1966171168
        %v2388 = vunpack.c.0.s8 %v2387
        %v2389 = vlaneseq
        %v2390 = vshrl.u32 %v2389, 7
        %v2391 = vsub.s32 %v2388, %v2390
        %v2392 = vrot.slane %v2376, %v2391
        %v2394 = vunpack.c.l.s4 1966171168
        %v2395 = vunpack.c.0.s8 %v2394
        %v2396 = vlaneseq
        %v2397 = vshrl.u32 %v2396, 7
        %v2398 = vsub.s32 %v2395, %v2397
        %v2399 = vrot.slane %v2383, %v2398
        %v2401 = vunpack.c.l.s4 1966171168
        %v2402 = vunpack.c.0.s8 %v2401
        %v2403 = vlaneseq
        %v2404 = vshrl.u32 %v2403, 7
        %v2405 = vsub.s32 %v2402, %v2404
        %v2406 = vrot.slane %v2384, %v2405
        %v2408 = vunpack.c.l.s4 1966171168
        %v2409 = vunpack.c.0.s8 %v2408
        %v2410 = vlaneseq
        %v2411 = vshrl.u32 %v2410, 7
        %v2412 = vsub.s32 %v2409, %v2411
        %v2413 = vrot.slane %v2385, %v2412
        %v2414 = vcombine.high %v2392, %v2392
        %v2415 = vcombine.high %v2399, %v2399
        %v2416 = vcombine.high %v2406, %v2406
        %v2417 = vcombine.high %v2413, %v2413
        %v2419 = vunpack.c.l.s4 1966171168
        %v2420 = vunpack.c.0.s8 %v2419
        %v2421 = vlaneseq
        %v2422 = vshrl.u32 %v2421, 7
        %v2423 = vsub.s32 %v2420, %v2422
        %v2424 = vrot.slane %v2313, %v2423
        %v2426 = vunpack.c.l.s4 1966171168
        %v2427 = vunpack.c.0.s8 %v2426
        %v2428 = vlaneseq
        %v2429 = vshrl.u32 %v2428, 7
        %v2430 = vsub.s32 %v2427, %v2429
        %v2431 = vrot.slane %v2424, %v2430
        %v2432 = vcombine.high %v2359, %v2359
        %v2434 = vunpack.c.l.s4 1966171168
        %v2435 = vunpack.c.0.s8 %v2434
        %v2436 = vlaneseq
        %v2437 = vshrl.u32 %v2436, 7
        %v2438 = vsub.s32 %v2435, %v2437
        %v2439 = vrot.slane %v2359, %v2438
        %v2441 = vunpack.c.l.s4 1966171168
        %v2442 = vunpack.c.0.s8 %v2441
        %v2443 = vlaneseq
        %v2444 = vshrl.u32 %v2443, 7
        %v2445 = vsub.s32 %v2442, %v2444
        %v2446 = vrot.slane %v2432, %v2445
        %v2447 = vcombine.high %v2439, %v2439
        %v2448 = vcombine.high %v2446, %v2446
        %v2450 = vunpack.c.l.s4 1966171168
        %v2451 = vunpack.c.0.s8 %v2450
        %v2452 = vlaneseq
        %v2453 = vshrl.u32 %v2452, 7
        %v2454 = vsub.s32 %v2451, %v2453
        %v2455 = vrot.slane %v2439, %v2454
        %v2457 = vunpack.c.l.s4 1966171168
        %v2458 = vunpack.c.0.s8 %v2457
        %v2459 = vlaneseq
        %v2460 = vshrl.u32 %v2459, 7
        %v2461 = vsub.s32 %v2458, %v2460
        %v2462 = vrot.slane %v2446, %v2461
        %v2464 = vunpack.c.l.s4 1966171168
        %v2465 = vunpack.c.0.s8 %v2464
        %v2466 = vlaneseq
        %v2467 = vshrl.u32 %v2466, 7
        %v2468 = vsub.s32 %v2465, %v2467
        %v2469 = vrot.slane %v2447, %v2468
        %v2471 = vunpack.c.l.s4 1966171168
        %v2472 = vunpack.c.0.s8 %v2471
        %v2473 = vlaneseq
        %v2474 = vshrl.u32 %v2473, 7
        %v2475 = vsub.s32 %v2472, %v2474
        %v2476 = vrot.slane %v2448, %v2475
        %v2477 = vcombine.high %v2455, %v2455
        %v2478 = vcombine.high %v2462, %v2462
        %v2479 = vcombine.high %v2469, %v2469
        %v2480 = vcombine.high %v2476, %v2476
        %v2482 = vunpack.c.l.s4 1966171168
        %v2483 = vunpack.c.0.s8 %v2482
        %v2484 = vlaneseq
        %v2485 = vshrl.u32 %v2484, 7
        %v2486 = vsub.s32 %v2483, %v2485
        %v2487 = vrot.slane %v2362, %v2486
        %v2489 = vunpack.c.l.s4 1966171168
        %v2490 = vunpack.c.0.s8 %v2489
        %v2491 = vlaneseq
        %v2492 = vshrl.u32 %v2491, 7
        %v2493 = vsub.s32 %v2490, %v2492
        %v2494 = vrot.slane %v2487, %v2493
        %v2495 = vcombine.low %v2392, %v2406
        %v2496 = vcombine.low %v2414, %v2416
        %v2497 = vcombine.low %v2399, %v2413
        %v2498 = vcombine.low %v2415, %v2417
        %v2500 = vunpack.c.l.s4 1966171168
        %v2501 = vunpack.c.0.s8 %v2500
        %v2502 = vlaneseq
        %v2503 = vshrl.u32 %v2502, 7
        %v2504 = vsub.s32 %v2501, %v2503
        %v2505 = vrot.slane %v2495, %v2504
        %v2507 = vunpack.c.l.s4 1966171168
        %v2508 = vunpack.c.0.s8 %v2507
        %v2509 = vlaneseq
        %v2510 = vshrl.u32 %v2509, 7
        %v2511 = vsub.s32 %v2508, %v2510
        %v2512 = vrot.slane %v2496, %v2511
        %v2514 = vunpack.c.l.s4 1966171168
        %v2515 = vunpack.c.0.s8 %v2514
        %v2516 = vlaneseq
        %v2517 = vshrl.u32 %v2516, 7
        %v2518 = vsub.s32 %v2515, %v2517
        %v2519 = vrot.slane %v2497, %v2518
        %v2521 = vunpack.c.l.s4 1966171168
        %v2522 = vunpack.c.0.s8 %v2521
        %v2523 = vlaneseq
        %v2524 = vshrl.u32 %v2523, 7
        %v2525 = vsub.s32 %v2522, %v2524
        %v2526 = vrot.slane %v2498, %v2525
        %v2527 = vcombine.low %v2505, %v2512
        %v2528 = vcombine.low %v2519, %v2526
        %v2530 = vunpack.c.l.s4 1966171168
        %v2531 = vunpack.c.0.s8 %v2530
        %v2532 = vlaneseq
        %v2533 = vshrl.u32 %v2532, 7
        %v2534 = vsub.s32 %v2531, %v2533
        %v2535 = vrot.slane %v2527, %v2534
        %v2537 = vunpack.c.l.s4 1966171168
        %v2538 = vunpack.c.0.s8 %v2537
        %v2539 = vlaneseq
        %v2540 = vshrl.u32 %v2539, 7
        %v2541 = vsub.s32 %v2538, %v2540
        %v2542 = vrot.slane %v2528, %v2541
        %v2543 = vcombine.low %v2535, %v2542
        %v2544 = vcombine.low %v2431, %v2455
        %v2545 = vcombine.low %v2469, %v2477
        %v2546 = vcombine.low %v2479, %v2462
        %v2547 = vcombine.low %v2476, %v2478
        %v2549 = vunpack.c.l.s4 1966171168
        %v2550 = vunpack.c.0.s8 %v2549
        %v2551 = vlaneseq
        %v2552 = vshrl.u32 %v2551, 7
        %v2553 = vsub.s32 %v2550, %v2552
        %v2554 = vrot.slane %v2544, %v2553
        %v2556 = vunpack.c.l.s4 1966171168
        %v2557 = vunpack.c.0.s8 %v2556
        %v2558 = vlaneseq
        %v2559 = vshrl.u32 %v2558, 7
        %v2560 = vsub.s32 %v2557, %v2559
        %v2561 = vrot.slane %v2545, %v2560
        %v2563 = vunpack.c.l.s4 1966171168
        %v2564 = vunpack.c.0.s8 %v2563
        %v2565 = vlaneseq
        %v2566 = vshrl.u32 %v2565, 7
        %v2567 = vsub.s32 %v2564, %v2566
        %v2568 = vrot.slane %v2546, %v2567
        %v2570 = vunpack.c.l.s4 1966171168
        %v2571 = vunpack.c.0.s8 %v2570
        %v2572 = vlaneseq
        %v2573 = vshrl.u32 %v2572, 7
        %v2574 = vsub.s32 %v2571, %v2573
        %v2575 = vrot.slane %v2547, %v2574
        %v2576 = vcombine.low %v2554, %v2561
        %v2577 = vcombine.low %v2568, %v2575
        %v2579 = vunpack.c.l.s4 1966171168
        %v2580 = vunpack.c.0.s8 %v2579
        %v2581 = vlaneseq
        %v2582 = vshrl.u32 %v2581, 7
        %v2583 = vsub.s32 %v2580, %v2582
        %v2584 = vrot.slane %v2576, %v2583
        %v2586 = vunpack.c.l.s4 1966171168
        %v2587 = vunpack.c.0.s8 %v2586
        %v2588 = vlaneseq
        %v2589 = vshrl.u32 %v2588, 7
        %v2590 = vsub.s32 %v2587, %v2589
        %v2591 = vrot.slane %v2577, %v2590
        %v2592 = vcombine.low %v2584, %v2591
        %v2593 = vcombine.low %v2480, %v2494
        %v2595 = vunpack.c.l.s4 1966171168
        %v2596 = vunpack.c.0.s8 %v2595
        %v2597 = vlaneseq
        %v2598 = vshrl.u32 %v2597, 7
        %v2599 = vsub.s32 %v2596, %v2598
        %v2600 = vrot.slane %v2593, %v2599
        %v2602 = vunpack.c.l.s4 1966171168
        %v2603 = vunpack.c.0.s8 %v2602
        %v2604 = vlaneseq
        %v2605 = vshrl.u32 %v2604, 7
        %v2606 = vsub.s32 %v2603, %v2605
        %v2607 = vrot.slane %v2600, %v2606
        %v2611 = vpack.c.bf16 %v2592, %v2543
        %v2612 = vpack.c.bf16 %v2607, %v2607
        %v2615 = vunpack.c.l.b16 %v2611
        %v2616 = vunpack.c.h.b16 %v2611
        %v2617 = vunpack.c.l.b16 %v2612
        %v2618 = vpack.c.b16 %v2615, %v2615
        %v2619 = vpack.c.b16 %v2616, %v2616
        %v2620 = vpack.c.b16 %v2617, %v2617
        %vm2624 = vcmask 60416
        %2625 = vst.msk [vmem:[#allocation3] sm:$0xf] %vm2624, %v2618
        %2626 = vst.msk [vmem:[#allocation3 + $0x4] sm:$0xf] %vm2624, %v2619
        %vm2627 = vcmask 57344
        %2628 = vst.msk [vmem:[#allocation3 + $0x8] sm:$0x1] %vm2627, %v2620
        %2629 = vrot.lane.b32.xlu0 %v2112, 120
        %v2630 = vpop.permute.xlu0 %2629
        %2631 = vrot.lane.b32.xlu0 %v2112, 88
        %v2632 = vpop.permute.xlu0 %2631
        %v2634 = vsel %vm2117, %v2630, 0
        %v2637 = vsel %vm2117, %v2632, 0
        %2639 = vmatprep.subr.bf16.mxu0 0
        %2640 = vmatpush1.bf16.xpose.msra.mxu0 %v2637
        %2641 = vmatprep.subr.bf16.mxu0 0
        %2642 = vmatpush1.bf16.xpose.msra.mxu0 0
        %2643 = vmatprep.subr.bf16.mxu0 0
        %2644 = vmatpush1.bf16.xpose.msra.mxu0 0
        %2645 = vmatprep.subr.bf16.mxu0 0
        %2646 = vmatpush1.bf16.xpose.msra.mxu0 0
        %2647 = vmatprep.subr.bf16.mxu0 0
        %2648 = vmatpush1.bf16.xpose.msra.mxu0 0
        %2649 = vmatprep.subr.bf16.mxu0 0
        %2650 = vmatpush1.bf16.xpose.msra.mxu0 0
        %2651 = vmatprep.subr.bf16.mxu0 0
        %2652 = vmatpush1.bf16.xpose.msra.mxu0 0
        %2653 = vmatprep.subr.bf16.mxu0 0
        %2654 = vmatpush1.bf16.xpose.msra.mxu0 0
        %2655 = vmatprep.subr.bf16.mxu0 0
        %2656 = vmatpush1.bf16.xpose.msra.mxu0 0
        %2657 = vmatprep.subr.bf16.mxu0 0
        %2658 = vmatpush1.bf16.xpose.msra.mxu0 0
        %2659 = vmatprep.subr.bf16.mxu0 0
        %2660 = vmatpush1.bf16.xpose.msra.mxu0 0
        %2661 = vmatprep.subr.bf16.mxu0 0
        %2662 = vmatpush1.bf16.xpose.msra.mxu0 0
        %2663 = vmatprep.subr.bf16.mxu0 0
        %2664 = vmatpush1.bf16.xpose.msra.mxu0 0
        %2665 = vmatprep.subr.bf16.mxu0 0
        %2666 = vmatpush1.bf16.xpose.msra.mxu0 0
        %2667 = vmatprep.subr.bf16.mxu0 0
        %2668 = vmatpush1.bf16.xpose.msra.mxu0 0
        %2669 = vmatprep.subr.bf16.mxu0 0
        %2670 = vmatpush1.bf16.xpose.msra.mxu0 0
        %2671 = vmatprep.mubr.bf16.mxu0 0
        %2672 = vmatmul.mubr.bf16.gmra.mrb[0].mxu0 %v2634
        %v2673 = vpop.f32.mrb[0].mxu0
        %v2674 = vadd.f32 0.0, %v2673
        %v2675 = vpop.f32.mrb[0].mxu0
        %v2676 = vpop.f32.mrb[0].mxu0
        %v2677 = vadd.f32 0.0, %v2676
        %v2678 = vpop.f32.mrb[0].mxu0
        %2679 = vdwg.mxu0
        %2680 = vrot.lane.b32.xlu0 %v2113, 120
        %v2681 = vpop.permute.xlu0 %2680
        %2682 = vrot.lane.b32.xlu0 %v2113, 88
        %v2683 = vpop.permute.xlu0 %2682
        %v2685 = vsel %vm2117, %v2681, 0
        %v2688 = vsel %vm2117, %v2683, 0
        %2690 = vmatprep.subr.bf16.mxu0 0
        %2691 = vmatpush1.bf16.xpose.msra.mxu0 %v2688
        %2692 = vmatprep.subr.bf16.mxu0 0
        %2693 = vmatpush1.bf16.xpose.msra.mxu0 0
        %2694 = vmatprep.subr.bf16.mxu0 0
        %2695 = vmatpush1.bf16.xpose.msra.mxu0 0
        %2696 = vmatprep.subr.bf16.mxu0 0
        %2697 = vmatpush1.bf16.xpose.msra.mxu0 0
        %2698 = vmatprep.subr.bf16.mxu0 0
        %2699 = vmatpush1.bf16.xpose.msra.mxu0 0
        %2700 = vmatprep.subr.bf16.mxu0 0
        %2701 = vmatpush1.bf16.xpose.msra.mxu0 0
        %2702 = vmatprep.subr.bf16.mxu0 0
        %2703 = vmatpush1.bf16.xpose.msra.mxu0 0
        %2704 = vmatprep.subr.bf16.mxu0 0
        %2705 = vmatpush1.bf16.xpose.msra.mxu0 0
        %2706 = vmatprep.subr.bf16.mxu0 0
        %2707 = vmatpush1.bf16.xpose.msra.mxu0 0
        %2708 = vmatprep.subr.bf16.mxu0 0
        %2709 = vmatpush1.bf16.xpose.msra.mxu0 0
        %2710 = vmatprep.subr.bf16.mxu0 0
        %2711 = vmatpush1.bf16.xpose.msra.mxu0 0
        %2712 = vmatprep.subr.bf16.mxu0 0
        %2713 = vmatpush1.bf16.xpose.msra.mxu0 0
        %2714 = vmatprep.subr.bf16.mxu0 0
        %2715 = vmatpush1.bf16.xpose.msra.mxu0 0
        %2716 = vmatprep.subr.bf16.mxu0 0
        %2717 = vmatpush1.bf16.xpose.msra.mxu0 0
        %2718 = vmatprep.subr.bf16.mxu0 0
        %2719 = vmatpush1.bf16.xpose.msra.mxu0 0
        %2720 = vmatprep.subr.bf16.mxu0 0
        %2721 = vmatpush1.bf16.xpose.msra.mxu0 0
        %2722 = vmatprep.mubr.bf16.mxu0 0
        %2723 = vmatmul.mubr.bf16.gmra.mrb[0].mxu0 %v2685
        %v2724 = vpop.f32.mrb[0].mxu0
        %v2725 = vadd.f32 0.0, %v2724
        %v2726 = vpop.f32.mrb[0].mxu0
        %v2727 = vpop.f32.mrb[0].mxu0
        %v2728 = vadd.f32 0.0, %v2727
        %v2729 = vpop.f32.mrb[0].mxu0
        %2730 = vdwg.mxu0
        %v2731 = vsel %vm2215, %v2674, -inf
        %2732 = vmax.xlane.f32.xlu0 %v2731
        %v2733 = vpop.xlane.xlu0 %2732
        %v2734 = vsel %vm2219, %v2677, -inf
        %2735 = vmax.xlane.f32.xlu0 %v2734
        %v2736 = vpop.xlane.xlu0 %2735
        %v2737 = vsel %vm2215, %v2725, -inf
        %2738 = vmax.xlane.f32.xlu0 %v2737
        %v2739 = vpop.xlane.xlu0 %2738
        %v2740 = vsel %vm2219, %v2728, -inf
        %2741 = vmax.xlane.f32.xlu0 %v2740
        %v2742 = vpop.xlane.xlu0 %2741
        %v2743 = vsub.f32 %v2674, %v2733
        %v2744 = vsub.f32 %v2677, %v2736
        %v2745 = vsub.f32 %v2725, %v2739
        %v2746 = vsub.f32 %v2728, %v2742
        %v2747 = vmul.f32 %v2743, 1.442695
        %v2748 = vpow.pop %v2747
        %v2749 = vmul.f32 %v2744, 1.442695
        %v2750 = vpow.pop %v2749
        %v2751 = vmul.f32 %v2745, 1.442695
        %v2752 = vpow.pop %v2751
        %v2753 = vmul.f32 %v2746, 1.442695
        %v2754 = vpow.pop %v2753
        %v2755 = vsel %vm2215, %v2748, 0.0
        %2756 = vadd.xlane.f32.xlu0 %v2755
        %v2757 = vpop.xlane.xlu0 %2756
        %v2758 = vsel %vm2219, %v2750, 0.0
        %2759 = vadd.xlane.f32.xlu0 %v2758
        %v2760 = vpop.xlane.xlu0 %2759
        %v2761 = vsel %vm2215, %v2752, 0.0
        %2762 = vadd.xlane.f32.xlu0 %v2761
        %v2763 = vpop.xlane.xlu0 %2762
        %v2764 = vsel %vm2219, %v2754, 0.0
        %2765 = vadd.xlane.f32.xlu0 %v2764
        %v2766 = vpop.xlane.xlu0 %2765
        %v2767 = vrcp.pop %v2757
        %v2768 = vrcp.pop %v2760
        %v2769 = vrcp.pop %v2763
        %v2770 = vrcp.pop %v2766
        %v2771 = vmul.f32 %v2748, %v2767
        %v2772 = vmul.f32 %v2750, %v2768
        %v2773 = vmul.f32 %v2752, %v2769
        %v2774 = vmul.f32 %v2754, %v2770
        %v2775 = vpack.c.bf16 %v2772, %v2771
        %v2776 = vpack.c.bf16 %v2774, %v2773
        %2777 = vrot.lane.b32.xlu0 %v2112, 56
        %v2778 = vpop.permute.xlu0 %2777
        %v2780 = vsel %vm2215, %v2775, 0
        %v2783 = vand.u32 %v2778, %v2271
        %2785 = vmatprep.subr.bf16.mxu0 0
        %2786 = vmatpush1.bf16.msra.mxu0 %v2783
        %2787 = vmatprep.subr.bf16.mxu0 0
        %2788 = vmatpush1.bf16.msra.mxu0 0
        %2789 = vmatprep.subr.bf16.mxu0 0
        %2790 = vmatpush1.bf16.msra.mxu0 0
        %2791 = vmatprep.subr.bf16.mxu0 0
        %2792 = vmatpush1.bf16.msra.mxu0 0
        %2793 = vmatprep.subr.bf16.mxu0 0
        %2794 = vmatpush1.bf16.msra.mxu0 0
        %2795 = vmatprep.subr.bf16.mxu0 0
        %2796 = vmatpush1.bf16.msra.mxu0 0
        %2797 = vmatprep.subr.bf16.mxu0 0
        %2798 = vmatpush1.bf16.msra.mxu0 0
        %2799 = vmatprep.subr.bf16.mxu0 0
        %2800 = vmatpush1.bf16.msra.mxu0 0
        %2801 = vmatprep.subr.bf16.mxu0 0
        %2802 = vmatpush1.bf16.msra.mxu0 0
        %2803 = vmatprep.subr.bf16.mxu0 0
        %2804 = vmatpush1.bf16.msra.mxu0 0
        %2805 = vmatprep.subr.bf16.mxu0 0
        %2806 = vmatpush1.bf16.msra.mxu0 0
        %2807 = vmatprep.subr.bf16.mxu0 0
        %2808 = vmatpush1.bf16.msra.mxu0 0
        %2809 = vmatprep.subr.bf16.mxu0 0
        %2810 = vmatpush1.bf16.msra.mxu0 0
        %2811 = vmatprep.subr.bf16.mxu0 0
        %2812 = vmatpush1.bf16.msra.mxu0 0
        %2813 = vmatprep.subr.bf16.mxu0 0
        %2814 = vmatpush1.bf16.msra.mxu0 0
        %2815 = vmatprep.subr.bf16.mxu0 0
        %2816 = vmatpush1.bf16.msra.mxu0 0
        %2817 = vmatprep.mubr.bf16.mxu0 0
        %2818 = vmatmul.mubr.bf16.gmra.mrb[0].mxu0 %v2780
        %v2819 = vpop.f32.mrb[0].mxu0
        %v2820 = vadd.f32 0.0, %v2819
        %v2821 = vpop.f32.mrb[0].mxu0
        %v2822 = vpop.f32.mrb[0].mxu0
        %v2823 = vadd.f32 0.0, %v2822
        %v2824 = vpop.f32.mrb[0].mxu0
        %2825 = vdwg.mxu0
        %2826 = vrot.lane.b32.xlu0 %v2113, 56
        %v2827 = vpop.permute.xlu0 %2826
        %v2829 = vsel %vm2215, %v2776, 0
        %v2832 = vand.u32 %v2827, %v2271
        %2834 = vmatprep.subr.bf16.mxu0 0
        %2835 = vmatpush1.bf16.msra.mxu0 %v2832
        %2836 = vmatprep.subr.bf16.mxu0 0
        %2837 = vmatpush1.bf16.msra.mxu0 0
        %2838 = vmatprep.subr.bf16.mxu0 0
        %2839 = vmatpush1.bf16.msra.mxu0 0
        %2840 = vmatprep.subr.bf16.mxu0 0
        %2841 = vmatpush1.bf16.msra.mxu0 0
        %2842 = vmatprep.subr.bf16.mxu0 0
        %2843 = vmatpush1.bf16.msra.mxu0 0
        %2844 = vmatprep.subr.bf16.mxu0 0
        %2845 = vmatpush1.bf16.msra.mxu0 0
        %2846 = vmatprep.subr.bf16.mxu0 0
        %2847 = vmatpush1.bf16.msra.mxu0 0
        %2848 = vmatprep.subr.bf16.mxu0 0
        %2849 = vmatpush1.bf16.msra.mxu0 0
        %2850 = vmatprep.subr.bf16.mxu0 0
        %2851 = vmatpush1.bf16.msra.mxu0 0
        %2852 = vmatprep.subr.bf16.mxu0 0
        %2853 = vmatpush1.bf16.msra.mxu0 0
        %2854 = vmatprep.subr.bf16.mxu0 0
        %2855 = vmatpush1.bf16.msra.mxu0 0
        %2856 = vmatprep.subr.bf16.mxu0 0
        %2857 = vmatpush1.bf16.msra.mxu0 0
        %2858 = vmatprep.subr.bf16.mxu0 0
        %2859 = vmatpush1.bf16.msra.mxu0 0
        %2860 = vmatprep.subr.bf16.mxu0 0
        %2861 = vmatpush1.bf16.msra.mxu0 0
        %2862 = vmatprep.subr.bf16.mxu0 0
        %2863 = vmatpush1.bf16.msra.mxu0 0
        %2864 = vmatprep.subr.bf16.mxu0 0
        %2865 = vmatpush1.bf16.msra.mxu0 0
        %2866 = vmatprep.mubr.bf16.mxu0 0
        %2867 = vmatmul.mubr.bf16.gmra.mrb[0].mxu0 %v2829
        %v2868 = vpop.f32.mrb[0].mxu0
        %v2869 = vadd.f32 0.0, %v2868
        %v2870 = vpop.f32.mrb[0].mxu0
        %v2871 = vpop.f32.mrb[0].mxu0
        %v2872 = vadd.f32 0.0, %v2871
        %v2873 = vpop.f32.mrb[0].mxu0
        %2874 = vdwg.mxu0
        %v2879 = vcombine.high %v2820, %v2820
        %v2881 = vunpack.c.l.s4 1966171168
        %v2882 = vunpack.c.0.s8 %v2881
        %v2883 = vlaneseq
        %v2884 = vshrl.u32 %v2883, 7
        %v2885 = vsub.s32 %v2882, %v2884
        %v2886 = vrot.slane %v2820, %v2885
        %v2888 = vunpack.c.l.s4 1966171168
        %v2889 = vunpack.c.0.s8 %v2888
        %v2890 = vlaneseq
        %v2891 = vshrl.u32 %v2890, 7
        %v2892 = vsub.s32 %v2889, %v2891
        %v2893 = vrot.slane %v2879, %v2892
        %v2894 = vcombine.high %v2886, %v2886
        %v2895 = vcombine.high %v2893, %v2893
        %v2897 = vunpack.c.l.s4 1966171168
        %v2898 = vunpack.c.0.s8 %v2897
        %v2899 = vlaneseq
        %v2900 = vshrl.u32 %v2899, 7
        %v2901 = vsub.s32 %v2898, %v2900
        %v2902 = vrot.slane %v2886, %v2901
        %v2904 = vunpack.c.l.s4 1966171168
        %v2905 = vunpack.c.0.s8 %v2904
        %v2906 = vlaneseq
        %v2907 = vshrl.u32 %v2906, 7
        %v2908 = vsub.s32 %v2905, %v2907
        %v2909 = vrot.slane %v2893, %v2908
        %v2911 = vunpack.c.l.s4 1966171168
        %v2912 = vunpack.c.0.s8 %v2911
        %v2913 = vlaneseq
        %v2914 = vshrl.u32 %v2913, 7
        %v2915 = vsub.s32 %v2912, %v2914
        %v2916 = vrot.slane %v2894, %v2915
        %v2918 = vunpack.c.l.s4 1966171168
        %v2919 = vunpack.c.0.s8 %v2918
        %v2920 = vlaneseq
        %v2921 = vshrl.u32 %v2920, 7
        %v2922 = vsub.s32 %v2919, %v2921
        %v2923 = vrot.slane %v2895, %v2922
        %v2924 = vcombine.high %v2902, %v2902
        %v2925 = vcombine.high %v2909, %v2909
        %v2926 = vcombine.high %v2916, %v2916
        %v2927 = vcombine.high %v2923, %v2923
        %v2929 = vunpack.c.l.s4 1966171168
        %v2930 = vunpack.c.0.s8 %v2929
        %v2931 = vlaneseq
        %v2932 = vshrl.u32 %v2931, 7
        %v2933 = vsub.s32 %v2930, %v2932
        %v2934 = vrot.slane %v2823, %v2933
        %v2936 = vunpack.c.l.s4 1966171168
        %v2937 = vunpack.c.0.s8 %v2936
        %v2938 = vlaneseq
        %v2939 = vshrl.u32 %v2938, 7
        %v2940 = vsub.s32 %v2937, %v2939
        %v2941 = vrot.slane %v2934, %v2940
        %v2942 = vcombine.high %v2869, %v2869
        %v2944 = vunpack.c.l.s4 1966171168
        %v2945 = vunpack.c.0.s8 %v2944
        %v2946 = vlaneseq
        %v2947 = vshrl.u32 %v2946, 7
        %v2948 = vsub.s32 %v2945, %v2947
        %v2949 = vrot.slane %v2869, %v2948
        %v2951 = vunpack.c.l.s4 1966171168
        %v2952 = vunpack.c.0.s8 %v2951
        %v2953 = vlaneseq
        %v2954 = vshrl.u32 %v2953, 7
        %v2955 = vsub.s32 %v2952, %v2954
        %v2956 = vrot.slane %v2942, %v2955
        %v2957 = vcombine.high %v2949, %v2949
        %v2958 = vcombine.high %v2956, %v2956
        %v2960 = vunpack.c.l.s4 1966171168
        %v2961 = vunpack.c.0.s8 %v2960
        %v2962 = vlaneseq
        %v2963 = vshrl.u32 %v2962, 7
        %v2964 = vsub.s32 %v2961, %v2963
        %v2965 = vrot.slane %v2949, %v2964
        %v2967 = vunpack.c.l.s4 1966171168
        %v2968 = vunpack.c.0.s8 %v2967
        %v2969 = vlaneseq
        %v2970 = vshrl.u32 %v2969, 7
        %v2971 = vsub.s32 %v2968, %v2970
        %v2972 = vrot.slane %v2956, %v2971
        %v2974 = vunpack.c.l.s4 1966171168
        %v2975 = vunpack.c.0.s8 %v2974
        %v2976 = vlaneseq
        %v2977 = vshrl.u32 %v2976, 7
        %v2978 = vsub.s32 %v2975, %v2977
        %v2979 = vrot.slane %v2957, %v2978
        %v2981 = vunpack.c.l.s4 1966171168
        %v2982 = vunpack.c.0.s8 %v2981
        %v2983 = vlaneseq
        %v2984 = vshrl.u32 %v2983, 7
        %v2985 = vsub.s32 %v2982, %v2984
        %v2986 = vrot.slane %v2958, %v2985
        %v2987 = vcombine.high %v2965, %v2965
        %v2988 = vcombine.high %v2972, %v2972
        %v2989 = vcombine.high %v2979, %v2979
        %v2990 = vcombine.high %v2986, %v2986
        %v2992 = vunpack.c.l.s4 1966171168
        %v2993 = vunpack.c.0.s8 %v2992
        %v2994 = vlaneseq
        %v2995 = vshrl.u32 %v2994, 7
        %v2996 = vsub.s32 %v2993, %v2995
        %v2997 = vrot.slane %v2872, %v2996
        %v2999 = vunpack.c.l.s4 1966171168
        %v3000 = vunpack.c.0.s8 %v2999
        %v3001 = vlaneseq
        %v3002 = vshrl.u32 %v3001, 7
        %v3003 = vsub.s32 %v3000, %v3002
        %v3004 = vrot.slane %v2997, %v3003
        %v3005 = vcombine.low %v2902, %v2916
        %v3006 = vcombine.low %v2924, %v2926
        %v3007 = vcombine.low %v2909, %v2923
        %v3008 = vcombine.low %v2925, %v2927
        %v3010 = vunpack.c.l.s4 1966171168
        %v3011 = vunpack.c.0.s8 %v3010
        %v3012 = vlaneseq
        %v3013 = vshrl.u32 %v3012, 7
        %v3014 = vsub.s32 %v3011, %v3013
        %v3015 = vrot.slane %v3005, %v3014
        %v3017 = vunpack.c.l.s4 1966171168
        %v3018 = vunpack.c.0.s8 %v3017
        %v3019 = vlaneseq
        %v3020 = vshrl.u32 %v3019, 7
        %v3021 = vsub.s32 %v3018, %v3020
        %v3022 = vrot.slane %v3006, %v3021
        %v3024 = vunpack.c.l.s4 1966171168
        %v3025 = vunpack.c.0.s8 %v3024
        %v3026 = vlaneseq
        %v3027 = vshrl.u32 %v3026, 7
        %v3028 = vsub.s32 %v3025, %v3027
        %v3029 = vrot.slane %v3007, %v3028
        %v3031 = vunpack.c.l.s4 1966171168
        %v3032 = vunpack.c.0.s8 %v3031
        %v3033 = vlaneseq
        %v3034 = vshrl.u32 %v3033, 7
        %v3035 = vsub.s32 %v3032, %v3034
        %v3036 = vrot.slane %v3008, %v3035
        %v3037 = vcombine.low %v3015, %v3022
        %v3038 = vcombine.low %v3029, %v3036
        %v3040 = vunpack.c.l.s4 1966171168
        %v3041 = vunpack.c.0.s8 %v3040
        %v3042 = vlaneseq
        %v3043 = vshrl.u32 %v3042, 7
        %v3044 = vsub.s32 %v3041, %v3043
        %v3045 = vrot.slane %v3037, %v3044
        %v3047 = vunpack.c.l.s4 1966171168
        %v3048 = vunpack.c.0.s8 %v3047
        %v3049 = vlaneseq
        %v3050 = vshrl.u32 %v3049, 7
        %v3051 = vsub.s32 %v3048, %v3050
        %v3052 = vrot.slane %v3038, %v3051
        %v3053 = vcombine.low %v3045, %v3052
        %v3054 = vcombine.low %v2941, %v2965
        %v3055 = vcombine.low %v2979, %v2987
        %v3056 = vcombine.low %v2989, %v2972
        %v3057 = vcombine.low %v2986, %v2988
        %v3059 = vunpack.c.l.s4 1966171168
        %v3060 = vunpack.c.0.s8 %v3059
        %v3061 = vlaneseq
        %v3062 = vshrl.u32 %v3061, 7
        %v3063 = vsub.s32 %v3060, %v3062
        %v3064 = vrot.slane %v3054, %v3063
        %v3066 = vunpack.c.l.s4 1966171168
        %v3067 = vunpack.c.0.s8 %v3066
        %v3068 = vlaneseq
        %v3069 = vshrl.u32 %v3068, 7
        %v3070 = vsub.s32 %v3067, %v3069
        %v3071 = vrot.slane %v3055, %v3070
        %v3073 = vunpack.c.l.s4 1966171168
        %v3074 = vunpack.c.0.s8 %v3073
        %v3075 = vlaneseq
        %v3076 = vshrl.u32 %v3075, 7
        %v3077 = vsub.s32 %v3074, %v3076
        %v3078 = vrot.slane %v3056, %v3077
        %v3080 = vunpack.c.l.s4 1966171168
        %v3081 = vunpack.c.0.s8 %v3080
        %v3082 = vlaneseq
        %v3083 = vshrl.u32 %v3082, 7
        %v3084 = vsub.s32 %v3081, %v3083
        %v3085 = vrot.slane %v3057, %v3084
        %v3086 = vcombine.low %v3064, %v3071
        %v3087 = vcombine.low %v3078, %v3085
        %v3089 = vunpack.c.l.s4 1966171168
        %v3090 = vunpack.c.0.s8 %v3089
        %v3091 = vlaneseq
        %v3092 = vshrl.u32 %v3091, 7
        %v3093 = vsub.s32 %v3090, %v3092
        %v3094 = vrot.slane %v3086, %v3093
        %v3096 = vunpack.c.l.s4 1966171168
        %v3097 = vunpack.c.0.s8 %v3096
        %v3098 = vlaneseq
        %v3099 = vshrl.u32 %v3098, 7
        %v3100 = vsub.s32 %v3097, %v3099
        %v3101 = vrot.slane %v3087, %v3100
        %v3102 = vcombine.low %v3094, %v3101
        %v3103 = vcombine.low %v2990, %v3004
        %v3105 = vunpack.c.l.s4 1966171168
        %v3106 = vunpack.c.0.s8 %v3105
        %v3107 = vlaneseq
        %v3108 = vshrl.u32 %v3107, 7
        %v3109 = vsub.s32 %v3106, %v3108
        %v3110 = vrot.slane %v3103, %v3109
        %v3112 = vunpack.c.l.s4 1966171168
        %v3113 = vunpack.c.0.s8 %v3112
        %v3114 = vlaneseq
        %v3115 = vshrl.u32 %v3114, 7
        %v3116 = vsub.s32 %v3113, %v3115
        %v3117 = vrot.slane %v3110, %v3116
        %v3121 = vpack.c.bf16 %v3102, %v3053
        %v3122 = vpack.c.bf16 %v3117, %v3117
        %v3125 = vunpack.c.l.b16 %v3121
        %v3126 = vunpack.c.h.b16 %v3121
        %v3127 = vunpack.c.l.b16 %v3122
        %v3128 = vpack.c.b16 %v3125, %v3125
        %v3129 = vpack.c.b16 %v3126, %v3126
        %v3130 = vpack.c.b16 %v3127, %v3127
        %3131 = vrot.lane.b32.xlu0 %v3128, 8
        %v3132 = vpop.permute.xlu0 %3131
        %3133 = vrot.lane.b32.xlu0 %v3129, 8
        %v3134 = vpop.permute.xlu0 %3133
        %3135 = vrot.lane.b32.xlu0 %v3130, 8
        %v3136 = vpop.permute.xlu0 %3135
        %vm3140 = vcmask 126016
        %3141 = vst.msk [vmem:[#allocation3] sm:$0xf] %vm3140, %v3132
        %3142 = vst.msk [vmem:[#allocation3 + $0x4] sm:$0xf] %vm3140, %v3134
        %vm3143 = vcmask 122944
        %3144 = vst.msk [vmem:[#allocation3 + $0x8] sm:$0x1] %vm3143, %v3136
        %3145 = vrot.lane.b32.xlu0 %v2112, 112
        %v3146 = vpop.permute.xlu0 %3145
        %3147 = vrot.lane.b32.xlu0 %v2112, 80
        %v3148 = vpop.permute.xlu0 %3147
        %v3150 = vsel %vm2117, %v3146, 0
        %v3153 = vsel %vm2117, %v3148, 0
        %3155 = vmatprep.subr.bf16.mxu0 0
        %3156 = vmatpush1.bf16.xpose.msra.mxu0 %v3153
        %3157 = vmatprep.subr.bf16.mxu0 0
        %3158 = vmatpush1.bf16.xpose.msra.mxu0 0
        %3159 = vmatprep.subr.bf16.mxu0 0
        %3160 = vmatpush1.bf16.xpose.msra.mxu0 0
        %3161 = vmatprep.subr.bf16.mxu0 0
        %3162 = vmatpush1.bf16.xpose.msra.mxu0 0
        %3163 = vmatprep.subr.bf16.mxu0 0
        %3164 = vmatpush1.bf16.xpose.msra.mxu0 0
        %3165 = vmatprep.subr.bf16.mxu0 0
        %3166 = vmatpush1.bf16.xpose.msra.mxu0 0
        %3167 = vmatprep.subr.bf16.mxu0 0
        %3168 = vmatpush1.bf16.xpose.msra.mxu0 0
        %3169 = vmatprep.subr.bf16.mxu0 0
        %3170 = vmatpush1.bf16.xpose.msra.mxu0 0
        %3171 = vmatprep.subr.bf16.mxu0 0
        %3172 = vmatpush1.bf16.xpose.msra.mxu0 0
        %3173 = vmatprep.subr.bf16.mxu0 0
        %3174 = vmatpush1.bf16.xpose.msra.mxu0 0
        %3175 = vmatprep.subr.bf16.mxu0 0
        %3176 = vmatpush1.bf16.xpose.msra.mxu0 0
        %3177 = vmatprep.subr.bf16.mxu0 0
        %3178 = vmatpush1.bf16.xpose.msra.mxu0 0
        %3179 = vmatprep.subr.bf16.mxu0 0
        %3180 = vmatpush1.bf16.xpose.msra.mxu0 0
        %3181 = vmatprep.subr.bf16.mxu0 0
        %3182 = vmatpush1.bf16.xpose.msra.mxu0 0
        %3183 = vmatprep.subr.bf16.mxu0 0
        %3184 = vmatpush1.bf16.xpose.msra.mxu0 0
        %3185 = vmatprep.subr.bf16.mxu0 0
        %3186 = vmatpush1.bf16.xpose.msra.mxu0 0
        %3187 = vmatprep.mubr.bf16.mxu0 0
        %3188 = vmatmul.mubr.bf16.gmra.mrb[0].mxu0 %v3150
        %v3189 = vpop.f32.mrb[0].mxu0
        %v3190 = vadd.f32 0.0, %v3189
        %v3191 = vpop.f32.mrb[0].mxu0
        %v3192 = vpop.f32.mrb[0].mxu0
        %v3193 = vadd.f32 0.0, %v3192
        %v3194 = vpop.f32.mrb[0].mxu0
        %3195 = vdwg.mxu0
        %3196 = vrot.lane.b32.xlu0 %v2113, 112
        %v3197 = vpop.permute.xlu0 %3196
        %3198 = vrot.lane.b32.xlu0 %v2113, 80
        %v3199 = vpop.permute.xlu0 %3198
        %v3201 = vsel %vm2117, %v3197, 0
        %v3204 = vsel %vm2117, %v3199, 0
        %3206 = vmatprep.subr.bf16.mxu0 0
        %3207 = vmatpush1.bf16.xpose.msra.mxu0 %v3204
        %3208 = vmatprep.subr.bf16.mxu0 0
        %3209 = vmatpush1.bf16.xpose.msra.mxu0 0
        %3210 = vmatprep.subr.bf16.mxu0 0
        %3211 = vmatpush1.bf16.xpose.msra.mxu0 0
        %3212 = vmatprep.subr.bf16.mxu0 0
        %3213 = vmatpush1.bf16.xpose.msra.mxu0 0
        %3214 = vmatprep.subr.bf16.mxu0 0
        %3215 = vmatpush1.bf16.xpose.msra.mxu0 0
        %3216 = vmatprep.subr.bf16.mxu0 0
        %3217 = vmatpush1.bf16.xpose.msra.mxu0 0
        %3218 = vmatprep.subr.bf16.mxu0 0
        %3219 = vmatpush1.bf16.xpose.msra.mxu0 0
        %3220 = vmatprep.subr.bf16.mxu0 0
        %3221 = vmatpush1.bf16.xpose.msra.mxu0 0
        %3222 = vmatprep.subr.bf16.mxu0 0
        %3223 = vmatpush1.bf16.xpose.msra.mxu0 0
        %3224 = vmatprep.subr.bf16.mxu0 0
        %3225 = vmatpush1.bf16.xpose.msra.mxu0 0
        %3226 = vmatprep.subr.bf16.mxu0 0
        %3227 = vmatpush1.bf16.xpose.msra.mxu0 0
        %3228 = vmatprep.subr.bf16.mxu0 0
        %3229 = vmatpush1.bf16.xpose.msra.mxu0 0
        %3230 = vmatprep.subr.bf16.mxu0 0
        %3231 = vmatpush1.bf16.xpose.msra.mxu0 0
        %3232 = vmatprep.subr.bf16.mxu0 0
        %3233 = vmatpush1.bf16.xpose.msra.mxu0 0
        %3234 = vmatprep.subr.bf16.mxu0 0
        %3235 = vmatpush1.bf16.xpose.msra.mxu0 0
        %3236 = vmatprep.subr.bf16.mxu0 0
        %3237 = vmatpush1.bf16.xpose.msra.mxu0 0
        %3238 = vmatprep.mubr.bf16.mxu0 0
        %3239 = vmatmul.mubr.bf16.gmra.mrb[0].mxu0 %v3201
        %v3240 = vpop.f32.mrb[0].mxu0
        %v3241 = vadd.f32 0.0, %v3240
        %v3242 = vpop.f32.mrb[0].mxu0
        %v3243 = vpop.f32.mrb[0].mxu0
        %v3244 = vadd.f32 0.0, %v3243
        %v3245 = vpop.f32.mrb[0].mxu0
        %3246 = vdwg.mxu0
        %v3247 = vsel %vm2215, %v3190, -inf
        %3248 = vmax.xlane.f32.xlu0 %v3247
        %v3249 = vpop.xlane.xlu0 %3248
        %v3250 = vsel %vm2219, %v3193, -inf
        %3251 = vmax.xlane.f32.xlu0 %v3250
        %v3252 = vpop.xlane.xlu0 %3251
        %v3253 = vsel %vm2215, %v3241, -inf
        %3254 = vmax.xlane.f32.xlu0 %v3253
        %v3255 = vpop.xlane.xlu0 %3254
        %v3256 = vsel %vm2219, %v3244, -inf
        %3257 = vmax.xlane.f32.xlu0 %v3256
        %v3258 = vpop.xlane.xlu0 %3257
        %v3259 = vsub.f32 %v3190, %v3249
        %v3260 = vsub.f32 %v3193, %v3252
        %v3261 = vsub.f32 %v3241, %v3255
        %v3262 = vsub.f32 %v3244, %v3258
        %v3263 = vmul.f32 %v3259, 1.442695
        %v3264 = vpow.pop %v3263
        %v3265 = vmul.f32 %v3260, 1.442695
        %v3266 = vpow.pop %v3265
        %v3267 = vmul.f32 %v3261, 1.442695
        %v3268 = vpow.pop %v3267
        %v3269 = vmul.f32 %v3262, 1.442695
        %v3270 = vpow.pop %v3269
        %v3271 = vsel %vm2215, %v3264, 0.0
        %3272 = vadd.xlane.f32.xlu0 %v3271
        %v3273 = vpop.xlane.xlu0 %3272
        %v3274 = vsel %vm2219, %v3266, 0.0
        %3275 = vadd.xlane.f32.xlu0 %v3274
        %v3276 = vpop.xlane.xlu0 %3275
        %v3277 = vsel %vm2215, %v3268, 0.0
        %3278 = vadd.xlane.f32.xlu0 %v3277
        %v3279 = vpop.xlane.xlu0 %3278
        %v3280 = vsel %vm2219, %v3270, 0.0
        %3281 = vadd.xlane.f32.xlu0 %v3280
        %v3282 = vpop.xlane.xlu0 %3281
        %v3283 = vrcp.pop %v3273
        %v3284 = vrcp.pop %v3276
        %v3285 = vrcp.pop %v3279
        %v3286 = vrcp.pop %v3282
        %v3287 = vmul.f32 %v3264, %v3283
        %v3288 = vmul.f32 %v3266, %v3284
        %v3289 = vmul.f32 %v3268, %v3285
        %v3290 = vmul.f32 %v3270, %v3286
        %v3291 = vpack.c.bf16 %v3288, %v3287
        %v3292 = vpack.c.bf16 %v3290, %v3289
        %3293 = vrot.lane.b32.xlu0 %v2112, 48
        %v3294 = vpop.permute.xlu0 %3293
        %v3296 = vsel %vm2215, %v3291, 0
        %v3299 = vand.u32 %v3294, %v2271
        %3301 = vmatprep.subr.bf16.mxu0 0
        %3302 = vmatpush1.bf16.msra.mxu0 %v3299
        %3303 = vmatprep.subr.bf16.mxu0 0
        %3304 = vmatpush1.bf16.msra.mxu0 0
        %3305 = vmatprep.subr.bf16.mxu0 0
        %3306 = vmatpush1.bf16.msra.mxu0 0
        %3307 = vmatprep.subr.bf16.mxu0 0
        %3308 = vmatpush1.bf16.msra.mxu0 0
        %3309 = vmatprep.subr.bf16.mxu0 0
        %3310 = vmatpush1.bf16.msra.mxu0 0
        %3311 = vmatprep.subr.bf16.mxu0 0
        %3312 = vmatpush1.bf16.msra.mxu0 0
        %3313 = vmatprep.subr.bf16.mxu0 0
        %3314 = vmatpush1.bf16.msra.mxu0 0
        %3315 = vmatprep.subr.bf16.mxu0 0
        %3316 = vmatpush1.bf16.msra.mxu0 0
        %3317 = vmatprep.subr.bf16.mxu0 0
        %3318 = vmatpush1.bf16.msra.mxu0 0
        %3319 = vmatprep.subr.bf16.mxu0 0
        %3320 = vmatpush1.bf16.msra.mxu0 0
        %3321 = vmatprep.subr.bf16.mxu0 0
        %3322 = vmatpush1.bf16.msra.mxu0 0
        %3323 = vmatprep.subr.bf16.mxu0 0
        %3324 = vmatpush1.bf16.msra.mxu0 0
        %3325 = vmatprep.subr.bf16.mxu0 0
        %3326 = vmatpush1.bf16.msra.mxu0 0
        %3327 = vmatprep.subr.bf16.mxu0 0
        %3328 = vmatpush1.bf16.msra.mxu0 0
        %3329 = vmatprep.subr.bf16.mxu0 0
        %3330 = vmatpush1.bf16.msra.mxu0 0
        %3331 = vmatprep.subr.bf16.mxu0 0
        %3332 = vmatpush1.bf16.msra.mxu0 0
        %3333 = vmatprep.mubr.bf16.mxu0 0
        %3334 = vmatmul.mubr.bf16.gmra.mrb[0].mxu0 %v3296
        %v3335 = vpop.f32.mrb[0].mxu0
        %v3336 = vadd.f32 0.0, %v3335
        %v3337 = vpop.f32.mrb[0].mxu0
        %v3338 = vpop.f32.mrb[0].mxu0
        %v3339 = vadd.f32 0.0, %v3338
        %v3340 = vpop.f32.mrb[0].mxu0
        %3341 = vdwg.mxu0
        %3342 = vrot.lane.b32.xlu0 %v2113, 48
        %v3343 = vpop.permute.xlu0 %3342
        %v3345 = vsel %vm2215, %v3292, 0
        %v3348 = vand.u32 %v3343, %v2271
        %3350 = vmatprep.subr.bf16.mxu0 0
        %3351 = vmatpush1.bf16.msra.mxu0 %v3348
        %3352 = vmatprep.subr.bf16.mxu0 0
        %3353 = vmatpush1.bf16.msra.mxu0 0
        %3354 = vmatprep.subr.bf16.mxu0 0
        %3355 = vmatpush1.bf16.msra.mxu0 0
        %3356 = vmatprep.subr.bf16.mxu0 0
        %3357 = vmatpush1.bf16.msra.mxu0 0
        %3358 = vmatprep.subr.bf16.mxu0 0
        %3359 = vmatpush1.bf16.msra.mxu0 0
        %3360 = vmatprep.subr.bf16.mxu0 0
        %3361 = vmatpush1.bf16.msra.mxu0 0
        %3362 = vmatprep.subr.bf16.mxu0 0
        %3363 = vmatpush1.bf16.msra.mxu0 0
        %3364 = vmatprep.subr.bf16.mxu0 0
        %3365 = vmatpush1.bf16.msra.mxu0 0
        %3366 = vmatprep.subr.bf16.mxu0 0
        %3367 = vmatpush1.bf16.msra.mxu0 0
        %3368 = vmatprep.subr.bf16.mxu0 0
        %3369 = vmatpush1.bf16.msra.mxu0 0
        %3370 = vmatprep.subr.bf16.mxu0 0
        %3371 = vmatpush1.bf16.msra.mxu0 0
        %3372 = vmatprep.subr.bf16.mxu0 0
        %3373 = vmatpush1.bf16.msra.mxu0 0
        %3374 = vmatprep.subr.bf16.mxu0 0
        %3375 = vmatpush1.bf16.msra.mxu0 0
        %3376 = vmatprep.subr.bf16.mxu0 0
        %3377 = vmatpush1.bf16.msra.mxu0 0
        %3378 = vmatprep.subr.bf16.mxu0 0
        %3379 = vmatpush1.bf16.msra.mxu0 0
        %3380 = vmatprep.subr.bf16.mxu0 0
        %3381 = vmatpush1.bf16.msra.mxu0 0
        %3382 = vmatprep.mubr.bf16.mxu0 0
        %3383 = vmatmul.mubr.bf16.gmra.mrb[0].mxu0 %v3345
        %v3384 = vpop.f32.mrb[0].mxu0
        %v3385 = vadd.f32 0.0, %v3384
        %v3386 = vpop.f32.mrb[0].mxu0
        %v3387 = vpop.f32.mrb[0].mxu0
        %v3388 = vadd.f32 0.0, %v3387
        %v3389 = vpop.f32.mrb[0].mxu0
        %3390 = vdwg.mxu0
        %v3395 = vcombine.high %v3336, %v3336
        %v3397 = vunpack.c.l.s4 1966171168
        %v3398 = vunpack.c.0.s8 %v3397
        %v3399 = vlaneseq
        %v3400 = vshrl.u32 %v3399, 7
        %v3401 = vsub.s32 %v3398, %v3400
        %v3402 = vrot.slane %v3336, %v3401
        %v3404 = vunpack.c.l.s4 1966171168
        %v3405 = vunpack.c.0.s8 %v3404
        %v3406 = vlaneseq
        %v3407 = vshrl.u32 %v3406, 7
        %v3408 = vsub.s32 %v3405, %v3407
        %v3409 = vrot.slane %v3395, %v3408
        %v3410 = vcombine.high %v3402, %v3402
        %v3411 = vcombine.high %v3409, %v3409
        %v3413 = vunpack.c.l.s4 1966171168
        %v3414 = vunpack.c.0.s8 %v3413
        %v3415 = vlaneseq
        %v3416 = vshrl.u32 %v3415, 7
        %v3417 = vsub.s32 %v3414, %v3416
        %v3418 = vrot.slane %v3402, %v3417
        %v3420 = vunpack.c.l.s4 1966171168
        %v3421 = vunpack.c.0.s8 %v3420
        %v3422 = vlaneseq
        %v3423 = vshrl.u32 %v3422, 7
        %v3424 = vsub.s32 %v3421, %v3423
        %v3425 = vrot.slane %v3409, %v3424
        %v3427 = vunpack.c.l.s4 1966171168
        %v3428 = vunpack.c.0.s8 %v3427
        %v3429 = vlaneseq
        %v3430 = vshrl.u32 %v3429, 7
        %v3431 = vsub.s32 %v3428, %v3430
        %v3432 = vrot.slane %v3410, %v3431
        %v3434 = vunpack.c.l.s4 1966171168
        %v3435 = vunpack.c.0.s8 %v3434
        %v3436 = vlaneseq
        %v3437 = vshrl.u32 %v3436, 7
        %v3438 = vsub.s32 %v3435, %v3437
        %v3439 = vrot.slane %v3411, %v3438
        %v3440 = vcombine.high %v3418, %v3418
        %v3441 = vcombine.high %v3425, %v3425
        %v3442 = vcombine.high %v3432, %v3432
        %v3443 = vcombine.high %v3439, %v3439
        %v3445 = vunpack.c.l.s4 1966171168
        %v3446 = vunpack.c.0.s8 %v3445
        %v3447 = vlaneseq
        %v3448 = vshrl.u32 %v3447, 7
        %v3449 = vsub.s32 %v3446, %v3448
        %v3450 = vrot.slane %v3339, %v3449
        %v3452 = vunpack.c.l.s4 1966171168
        %v3453 = vunpack.c.0.s8 %v3452
        %v3454 = vlaneseq
        %v3455 = vshrl.u32 %v3454, 7
        %v3456 = vsub.s32 %v3453, %v3455
        %v3457 = vrot.slane %v3450, %v3456
        %v3458 = vcombine.high %v3385, %v3385
        %v3460 = vunpack.c.l.s4 1966171168
        %v3461 = vunpack.c.0.s8 %v3460
        %v3462 = vlaneseq
        %v3463 = vshrl.u32 %v3462, 7
        %v3464 = vsub.s32 %v3461, %v3463
        %v3465 = vrot.slane %v3385, %v3464
        %v3467 = vunpack.c.l.s4 1966171168
        %v3468 = vunpack.c.0.s8 %v3467
        %v3469 = vlaneseq
        %v3470 = vshrl.u32 %v3469, 7
        %v3471 = vsub.s32 %v3468, %v3470
        %v3472 = vrot.slane %v3458, %v3471
        %v3473 = vcombine.high %v3465, %v3465
        %v3474 = vcombine.high %v3472, %v3472
        %v3476 = vunpack.c.l.s4 1966171168
        %v3477 = vunpack.c.0.s8 %v3476
        %v3478 = vlaneseq
        %v3479 = vshrl.u32 %v3478, 7
        %v3480 = vsub.s32 %v3477, %v3479
        %v3481 = vrot.slane %v3465, %v3480
        %v3483 = vunpack.c.l.s4 1966171168
        %v3484 = vunpack.c.0.s8 %v3483
        %v3485 = vlaneseq
        %v3486 = vshrl.u32 %v3485, 7
        %v3487 = vsub.s32 %v3484, %v3486
        %v3488 = vrot.slane %v3472, %v3487
        %v3490 = vunpack.c.l.s4 1966171168
        %v3491 = vunpack.c.0.s8 %v3490
        %v3492 = vlaneseq
        %v3493 = vshrl.u32 %v3492, 7
        %v3494 = vsub.s32 %v3491, %v3493
        %v3495 = vrot.slane %v3473, %v3494
        %v3497 = vunpack.c.l.s4 1966171168
        %v3498 = vunpack.c.0.s8 %v3497
        %v3499 = vlaneseq
        %v3500 = vshrl.u32 %v3499, 7
        %v3501 = vsub.s32 %v3498, %v3500
        %v3502 = vrot.slane %v3474, %v3501
        %v3503 = vcombine.high %v3481, %v3481
        %v3504 = vcombine.high %v3488, %v3488
        %v3505 = vcombine.high %v3495, %v3495
        %v3506 = vcombine.high %v3502, %v3502
        %v3508 = vunpack.c.l.s4 1966171168
        %v3509 = vunpack.c.0.s8 %v3508
        %v3510 = vlaneseq
        %v3511 = vshrl.u32 %v3510, 7
        %v3512 = vsub.s32 %v3509, %v3511
        %v3513 = vrot.slane %v3388, %v3512
        %v3515 = vunpack.c.l.s4 1966171168
        %v3516 = vunpack.c.0.s8 %v3515
        %v3517 = vlaneseq
        %v3518 = vshrl.u32 %v3517, 7
        %v3519 = vsub.s32 %v3516, %v3518
        %v3520 = vrot.slane %v3513, %v3519
        %v3521 = vcombine.low %v3418, %v3432
        %v3522 = vcombine.low %v3440, %v3442
        %v3523 = vcombine.low %v3425, %v3439
        %v3524 = vcombine.low %v3441, %v3443
        %v3526 = vunpack.c.l.s4 1966171168
        %v3527 = vunpack.c.0.s8 %v3526
        %v3528 = vlaneseq
        %v3529 = vshrl.u32 %v3528, 7
        %v3530 = vsub.s32 %v3527, %v3529
        %v3531 = vrot.slane %v3521, %v3530
        %v3533 = vunpack.c.l.s4 1966171168
        %v3534 = vunpack.c.0.s8 %v3533
        %v3535 = vlaneseq
        %v3536 = vshrl.u32 %v3535, 7
        %v3537 = vsub.s32 %v3534, %v3536
        %v3538 = vrot.slane %v3522, %v3537
        %v3540 = vunpack.c.l.s4 1966171168
        %v3541 = vunpack.c.0.s8 %v3540
        %v3542 = vlaneseq
        %v3543 = vshrl.u32 %v3542, 7
        %v3544 = vsub.s32 %v3541, %v3543
        %v3545 = vrot.slane %v3523, %v3544
        %v3547 = vunpack.c.l.s4 1966171168
        %v3548 = vunpack.c.0.s8 %v3547
        %v3549 = vlaneseq
        %v3550 = vshrl.u32 %v3549, 7
        %v3551 = vsub.s32 %v3548, %v3550
        %v3552 = vrot.slane %v3524, %v3551
        %v3553 = vcombine.low %v3531, %v3538
        %v3554 = vcombine.low %v3545, %v3552
        %v3556 = vunpack.c.l.s4 1966171168
        %v3557 = vunpack.c.0.s8 %v3556
        %v3558 = vlaneseq
        %v3559 = vshrl.u32 %v3558, 7
        %v3560 = vsub.s32 %v3557, %v3559
        %v3561 = vrot.slane %v3553, %v3560
        %v3563 = vunpack.c.l.s4 1966171168
        %v3564 = vunpack.c.0.s8 %v3563
        %v3565 = vlaneseq
        %v3566 = vshrl.u32 %v3565, 7
        %v3567 = vsub.s32 %v3564, %v3566
        %v3568 = vrot.slane %v3554, %v3567
        %v3569 = vcombine.low %v3561, %v3568
        %v3570 = vcombine.low %v3457, %v3481
        %v3571 = vcombine.low %v3495, %v3503
        %v3572 = vcombine.low %v3505, %v3488
        %v3573 = vcombine.low %v3502, %v3504
        %v3575 = vunpack.c.l.s4 1966171168
        %v3576 = vunpack.c.0.s8 %v3575
        %v3577 = vlaneseq
        %v3578 = vshrl.u32 %v3577, 7
        %v3579 = vsub.s32 %v3576, %v3578
        %v3580 = vrot.slane %v3570, %v3579
        %v3582 = vunpack.c.l.s4 1966171168
        %v3583 = vunpack.c.0.s8 %v3582
        %v3584 = vlaneseq
        %v3585 = vshrl.u32 %v3584, 7
        %v3586 = vsub.s32 %v3583, %v3585
        %v3587 = vrot.slane %v3571, %v3586
        %v3589 = vunpack.c.l.s4 1966171168
        %v3590 = vunpack.c.0.s8 %v3589
        %v3591 = vlaneseq
        %v3592 = vshrl.u32 %v3591, 7
        %v3593 = vsub.s32 %v3590, %v3592
        %v3594 = vrot.slane %v3572, %v3593
        %v3596 = vunpack.c.l.s4 1966171168
        %v3597 = vunpack.c.0.s8 %v3596
        %v3598 = vlaneseq
        %v3599 = vshrl.u32 %v3598, 7
        %v3600 = vsub.s32 %v3597, %v3599
        %v3601 = vrot.slane %v3573, %v3600
        %v3602 = vcombine.low %v3580, %v3587
        %v3603 = vcombine.low %v3594, %v3601
        %v3605 = vunpack.c.l.s4 1966171168
        %v3606 = vunpack.c.0.s8 %v3605
        %v3607 = vlaneseq
        %v3608 = vshrl.u32 %v3607, 7
        %v3609 = vsub.s32 %v3606, %v3608
        %v3610 = vrot.slane %v3602, %v3609
        %v3612 = vunpack.c.l.s4 1966171168
        %v3613 = vunpack.c.0.s8 %v3612
        %v3614 = vlaneseq
        %v3615 = vshrl.u32 %v3614, 7
        %v3616 = vsub.s32 %v3613, %v3615
        %v3617 = vrot.slane %v3603, %v3616
        %v3618 = vcombine.low %v3610, %v3617
        %v3619 = vcombine.low %v3506, %v3520
        %v3621 = vunpack.c.l.s4 1966171168
        %v3622 = vunpack.c.0.s8 %v3621
        %v3623 = vlaneseq
        %v3624 = vshrl.u32 %v3623, 7
        %v3625 = vsub.s32 %v3622, %v3624
        %v3626 = vrot.slane %v3619, %v3625
        %v3628 = vunpack.c.l.s4 1966171168
        %v3629 = vunpack.c.0.s8 %v3628
        %v3630 = vlaneseq
        %v3631 = vshrl.u32 %v3630, 7
        %v3632 = vsub.s32 %v3629, %v3631
        %v3633 = vrot.slane %v3626, %v3632
        %v3637 = vpack.c.bf16 %v3618, %v3569
        %v3638 = vpack.c.bf16 %v3633, %v3633
        %v3641 = vunpack.c.l.b16 %v3637
        %v3642 = vunpack.c.h.b16 %v3637
        %v3643 = vunpack.c.l.b16 %v3638
        %v3644 = vpack.c.b16 %v3641, %v3641
        %v3645 = vpack.c.b16 %v3642, %v3642
        %v3646 = vpack.c.b16 %v3643, %v3643
        %3647 = vrot.lane.b32.xlu0 %v3644, 16
        %v3648 = vpop.permute.xlu0 %3647
        %3649 = vrot.lane.b32.xlu0 %v3645, 16
        %v3650 = vpop.permute.xlu0 %3649
        %3651 = vrot.lane.b32.xlu0 %v3646, 16
        %v3652 = vpop.permute.xlu0 %3651
        %vm3656 = vcmask 191616
        %3657 = vst.msk [vmem:[#allocation3] sm:$0xf] %vm3656, %v3648
        %3658 = vst.msk [vmem:[#allocation3 + $0x4] sm:$0xf] %vm3656, %v3650
        %vm3659 = vcmask 188544
        %3660 = vst.msk [vmem:[#allocation3 + $0x8] sm:$0x1] %vm3659, %v3652
        %3661 = vrot.lane.b32.xlu0 %v2112, 104
        %v3662 = vpop.permute.xlu0 %3661
        %3663 = vrot.lane.b32.xlu0 %v2112, 72
        %v3664 = vpop.permute.xlu0 %3663
        %v3666 = vsel %vm2117, %v3662, 0
        %v3669 = vsel %vm2117, %v3664, 0
        %3671 = vmatprep.subr.bf16.mxu0 0
        %3672 = vmatpush1.bf16.xpose.msra.mxu0 %v3669
        %3673 = vmatprep.subr.bf16.mxu0 0
        %3674 = vmatpush1.bf16.xpose.msra.mxu0 0
        %3675 = vmatprep.subr.bf16.mxu0 0
        %3676 = vmatpush1.bf16.xpose.msra.mxu0 0
        %3677 = vmatprep.subr.bf16.mxu0 0
        %3678 = vmatpush1.bf16.xpose.msra.mxu0 0
        %3679 = vmatprep.subr.bf16.mxu0 0
        %3680 = vmatpush1.bf16.xpose.msra.mxu0 0
        %3681 = vmatprep.subr.bf16.mxu0 0
        %3682 = vmatpush1.bf16.xpose.msra.mxu0 0
        %3683 = vmatprep.subr.bf16.mxu0 0
        %3684 = vmatpush1.bf16.xpose.msra.mxu0 0
        %3685 = vmatprep.subr.bf16.mxu0 0
        %3686 = vmatpush1.bf16.xpose.msra.mxu0 0
        %3687 = vmatprep.subr.bf16.mxu0 0
        %3688 = vmatpush1.bf16.xpose.msra.mxu0 0
        %3689 = vmatprep.subr.bf16.mxu0 0
        %3690 = vmatpush1.bf16.xpose.msra.mxu0 0
        %3691 = vmatprep.subr.bf16.mxu0 0
        %3692 = vmatpush1.bf16.xpose.msra.mxu0 0
        %3693 = vmatprep.subr.bf16.mxu0 0
        %3694 = vmatpush1.bf16.xpose.msra.mxu0 0
        %3695 = vmatprep.subr.bf16.mxu0 0
        %3696 = vmatpush1.bf16.xpose.msra.mxu0 0
        %3697 = vmatprep.subr.bf16.mxu0 0
        %3698 = vmatpush1.bf16.xpose.msra.mxu0 0
        %3699 = vmatprep.subr.bf16.mxu0 0
        %3700 = vmatpush1.bf16.xpose.msra.mxu0 0
        %3701 = vmatprep.subr.bf16.mxu0 0
        %3702 = vmatpush1.bf16.xpose.msra.mxu0 0
        %3703 = vmatprep.mubr.bf16.mxu0 0
        %3704 = vmatmul.mubr.bf16.gmra.mrb[0].mxu0 %v3666
        %v3705 = vpop.f32.mrb[0].mxu0
        %v3706 = vadd.f32 0.0, %v3705
        %v3707 = vpop.f32.mrb[0].mxu0
        %v3708 = vpop.f32.mrb[0].mxu0
        %v3709 = vadd.f32 0.0, %v3708
        %v3710 = vpop.f32.mrb[0].mxu0
        %3711 = vdwg.mxu0
        %3712 = vrot.lane.b32.xlu0 %v2113, 104
        %v3713 = vpop.permute.xlu0 %3712
        %3714 = vrot.lane.b32.xlu0 %v2113, 72
        %v3715 = vpop.permute.xlu0 %3714
        %v3717 = vsel %vm2117, %v3713, 0
        %v3720 = vsel %vm2117, %v3715, 0
        %3722 = vmatprep.subr.bf16.mxu0 0
        %3723 = vmatpush1.bf16.xpose.msra.mxu0 %v3720
        %3724 = vmatprep.subr.bf16.mxu0 0
        %3725 = vmatpush1.bf16.xpose.msra.mxu0 0
        %3726 = vmatprep.subr.bf16.mxu0 0
        %3727 = vmatpush1.bf16.xpose.msra.mxu0 0
        %3728 = vmatprep.subr.bf16.mxu0 0
        %3729 = vmatpush1.bf16.xpose.msra.mxu0 0
        %3730 = vmatprep.subr.bf16.mxu0 0
        %3731 = vmatpush1.bf16.xpose.msra.mxu0 0
        %3732 = vmatprep.subr.bf16.mxu0 0
        %3733 = vmatpush1.bf16.xpose.msra.mxu0 0
        %3734 = vmatprep.subr.bf16.mxu0 0
        %3735 = vmatpush1.bf16.xpose.msra.mxu0 0
        %3736 = vmatprep.subr.bf16.mxu0 0
        %3737 = vmatpush1.bf16.xpose.msra.mxu0 0
        %3738 = vmatprep.subr.bf16.mxu0 0
        %3739 = vmatpush1.bf16.xpose.msra.mxu0 0
        %3740 = vmatprep.subr.bf16.mxu0 0
        %3741 = vmatpush1.bf16.xpose.msra.mxu0 0
        %3742 = vmatprep.subr.bf16.mxu0 0
        %3743 = vmatpush1.bf16.xpose.msra.mxu0 0
        %3744 = vmatprep.subr.bf16.mxu0 0
        %3745 = vmatpush1.bf16.xpose.msra.mxu0 0
        %3746 = vmatprep.subr.bf16.mxu0 0
        %3747 = vmatpush1.bf16.xpose.msra.mxu0 0
        %3748 = vmatprep.subr.bf16.mxu0 0
        %3749 = vmatpush1.bf16.xpose.msra.mxu0 0
        %3750 = vmatprep.subr.bf16.mxu0 0
        %3751 = vmatpush1.bf16.xpose.msra.mxu0 0
        %3752 = vmatprep.subr.bf16.mxu0 0
        %3753 = vmatpush1.bf16.xpose.msra.mxu0 0
        %3754 = vmatprep.mubr.bf16.mxu0 0
        %3755 = vmatmul.mubr.bf16.gmra.mrb[0].mxu0 %v3717
        %v3756 = vpop.f32.mrb[0].mxu0
        %v3757 = vadd.f32 0.0, %v3756
        %v3758 = vpop.f32.mrb[0].mxu0
        %v3759 = vpop.f32.mrb[0].mxu0
        %v3760 = vadd.f32 0.0, %v3759
        %v3761 = vpop.f32.mrb[0].mxu0
        %3762 = vdwg.mxu0
        %v3763 = vsel %vm2215, %v3706, -inf
        %3764 = vmax.xlane.f32.xlu0 %v3763
        %v3765 = vpop.xlane.xlu0 %3764
        %v3766 = vsel %vm2219, %v3709, -inf
        %3767 = vmax.xlane.f32.xlu0 %v3766
        %v3768 = vpop.xlane.xlu0 %3767
        %v3769 = vsel %vm2215, %v3757, -inf
        %3770 = vmax.xlane.f32.xlu0 %v3769
        %v3771 = vpop.xlane.xlu0 %3770
        %v3772 = vsel %vm2219, %v3760, -inf
        %3773 = vmax.xlane.f32.xlu0 %v3772
        %v3774 = vpop.xlane.xlu0 %3773
        %v3775 = vsub.f32 %v3706, %v3765
        %v3776 = vsub.f32 %v3709, %v3768
        %v3777 = vsub.f32 %v3757, %v3771
        %v3778 = vsub.f32 %v3760, %v3774
        %v3779 = vmul.f32 %v3775, 1.442695
        %v3780 = vpow.pop %v3779
        %v3781 = vmul.f32 %v3776, 1.442695
        %v3782 = vpow.pop %v3781
        %v3783 = vmul.f32 %v3777, 1.442695
        %v3784 = vpow.pop %v3783
        %v3785 = vmul.f32 %v3778, 1.442695
        %v3786 = vpow.pop %v3785
        %v3787 = vsel %vm2215, %v3780, 0.0
        %3788 = vadd.xlane.f32.xlu0 %v3787
        %v3789 = vpop.xlane.xlu0 %3788
        %v3790 = vsel %vm2219, %v3782, 0.0
        %3791 = vadd.xlane.f32.xlu0 %v3790
        %v3792 = vpop.xlane.xlu0 %3791
        %v3793 = vsel %vm2215, %v3784, 0.0
        %3794 = vadd.xlane.f32.xlu0 %v3793
        %v3795 = vpop.xlane.xlu0 %3794
        %v3796 = vsel %vm2219, %v3786, 0.0
        %3797 = vadd.xlane.f32.xlu0 %v3796
        %v3798 = vpop.xlane.xlu0 %3797
        %v3799 = vrcp.pop %v3789
        %v3800 = vrcp.pop %v3792
        %v3801 = vrcp.pop %v3795
        %v3802 = vrcp.pop %v3798
        %v3803 = vmul.f32 %v3780, %v3799
        %v3804 = vmul.f32 %v3782, %v3800
        %v3805 = vmul.f32 %v3784, %v3801
        %v3806 = vmul.f32 %v3786, %v3802
        %v3807 = vpack.c.bf16 %v3804, %v3803
        %v3808 = vpack.c.bf16 %v3806, %v3805
        %3809 = vrot.lane.b32.xlu0 %v2112, 40
        %v3810 = vpop.permute.xlu0 %3809
        %v3812 = vsel %vm2215, %v3807, 0
        %v3815 = vand.u32 %v3810, %v2271
        %3817 = vmatprep.subr.bf16.mxu0 0
        %3818 = vmatpush1.bf16.msra.mxu0 %v3815
        %3819 = vmatprep.subr.bf16.mxu0 0
        %3820 = vmatpush1.bf16.msra.mxu0 0
        %3821 = vmatprep.subr.bf16.mxu0 0
        %3822 = vmatpush1.bf16.msra.mxu0 0
        %3823 = vmatprep.subr.bf16.mxu0 0
        %3824 = vmatpush1.bf16.msra.mxu0 0
        %3825 = vmatprep.subr.bf16.mxu0 0
        %3826 = vmatpush1.bf16.msra.mxu0 0
        %3827 = vmatprep.subr.bf16.mxu0 0
        %3828 = vmatpush1.bf16.msra.mxu0 0
        %3829 = vmatprep.subr.bf16.mxu0 0
        %3830 = vmatpush1.bf16.msra.mxu0 0
        %3831 = vmatprep.subr.bf16.mxu0 0
        %3832 = vmatpush1.bf16.msra.mxu0 0
        %3833 = vmatprep.subr.bf16.mxu0 0
        %3834 = vmatpush1.bf16.msra.mxu0 0
        %3835 = vmatprep.subr.bf16.mxu0 0
        %3836 = vmatpush1.bf16.msra.mxu0 0
        %3837 = vmatprep.subr.bf16.mxu0 0
        %3838 = vmatpush1.bf16.msra.mxu0 0
        %3839 = vmatprep.subr.bf16.mxu0 0
        %3840 = vmatpush1.bf16.msra.mxu0 0
        %3841 = vmatprep.subr.bf16.mxu0 0
        %3842 = vmatpush1.bf16.msra.mxu0 0
        %3843 = vmatprep.subr.bf16.mxu0 0
        %3844 = vmatpush1.bf16.msra.mxu0 0
        %3845 = vmatprep.subr.bf16.mxu0 0
        %3846 = vmatpush1.bf16.msra.mxu0 0
        %3847 = vmatprep.subr.bf16.mxu0 0
        %3848 = vmatpush1.bf16.msra.mxu0 0
        %3849 = vmatprep.mubr.bf16.mxu0 0
        %3850 = vmatmul.mubr.bf16.gmra.mrb[0].mxu0 %v3812
        %v3851 = vpop.f32.mrb[0].mxu0
        %v3852 = vadd.f32 0.0, %v3851
        %v3853 = vpop.f32.mrb[0].mxu0
        %v3854 = vpop.f32.mrb[0].mxu0
        %v3855 = vadd.f32 0.0, %v3854
        %v3856 = vpop.f32.mrb[0].mxu0
        %3857 = vdwg.mxu0
        %3858 = vrot.lane.b32.xlu0 %v2113, 40
        %v3859 = vpop.permute.xlu0 %3858
        %v3861 = vsel %vm2215, %v3808, 0
        %v3864 = vand.u32 %v3859, %v2271
        %3866 = vmatprep.subr.bf16.mxu0 0
        %3867 = vmatpush1.bf16.msra.mxu0 %v3864
        %3868 = vmatprep.subr.bf16.mxu0 0
        %3869 = vmatpush1.bf16.msra.mxu0 0
        %3870 = vmatprep.subr.bf16.mxu0 0
        %3871 = vmatpush1.bf16.msra.mxu0 0
        %3872 = vmatprep.subr.bf16.mxu0 0
        %3873 = vmatpush1.bf16.msra.mxu0 0
        %3874 = vmatprep.subr.bf16.mxu0 0
        %3875 = vmatpush1.bf16.msra.mxu0 0
        %3876 = vmatprep.subr.bf16.mxu0 0
        %3877 = vmatpush1.bf16.msra.mxu0 0
        %3878 = vmatprep.subr.bf16.mxu0 0
        %3879 = vmatpush1.bf16.msra.mxu0 0
        %3880 = vmatprep.subr.bf16.mxu0 0
        %3881 = vmatpush1.bf16.msra.mxu0 0
        %3882 = vmatprep.subr.bf16.mxu0 0
        %3883 = vmatpush1.bf16.msra.mxu0 0
        %3884 = vmatprep.subr.bf16.mxu0 0
        %3885 = vmatpush1.bf16.msra.mxu0 0
        %3886 = vmatprep.subr.bf16.mxu0 0
        %3887 = vmatpush1.bf16.msra.mxu0 0
        %3888 = vmatprep.subr.bf16.mxu0 0
        %3889 = vmatpush1.bf16.msra.mxu0 0
        %3890 = vmatprep.subr.bf16.mxu0 0
        %3891 = vmatpush1.bf16.msra.mxu0 0
        %3892 = vmatprep.subr.bf16.mxu0 0
        %3893 = vmatpush1.bf16.msra.mxu0 0
        %3894 = vmatprep.subr.bf16.mxu0 0
        %3895 = vmatpush1.bf16.msra.mxu0 0
        %3896 = vmatprep.subr.bf16.mxu0 0
        %3897 = vmatpush1.bf16.msra.mxu0 0
        %3898 = vmatprep.mubr.bf16.mxu0 0
        %3899 = vmatmul.mubr.bf16.gmra.mrb[0].mxu0 %v3861
        %v3900 = vpop.f32.mrb[0].mxu0
        %v3901 = vadd.f32 0.0, %v3900
        %v3902 = vpop.f32.mrb[0].mxu0
        %v3903 = vpop.f32.mrb[0].mxu0
        %v3904 = vadd.f32 0.0, %v3903
        %v3905 = vpop.f32.mrb[0].mxu0
        %3906 = vdwg.mxu0
        %v3911 = vcombine.high %v3852, %v3852
        %v3913 = vunpack.c.l.s4 1966171168
        %v3914 = vunpack.c.0.s8 %v3913
        %v3915 = vlaneseq
        %v3916 = vshrl.u32 %v3915, 7
        %v3917 = vsub.s32 %v3914, %v3916
        %v3918 = vrot.slane %v3852, %v3917
        %v3920 = vunpack.c.l.s4 1966171168
        %v3921 = vunpack.c.0.s8 %v3920
        %v3922 = vlaneseq
        %v3923 = vshrl.u32 %v3922, 7
        %v3924 = vsub.s32 %v3921, %v3923
        %v3925 = vrot.slane %v3911, %v3924
        %v3926 = vcombine.high %v3918, %v3918
        %v3927 = vcombine.high %v3925, %v3925
        %v3929 = vunpack.c.l.s4 1966171168
        %v3930 = vunpack.c.0.s8 %v3929
        %v3931 = vlaneseq
        %v3932 = vshrl.u32 %v3931, 7
        %v3933 = vsub.s32 %v3930, %v3932
        %v3934 = vrot.slane %v3918, %v3933
        %v3936 = vunpack.c.l.s4 1966171168
        %v3937 = vunpack.c.0.s8 %v3936
        %v3938 = vlaneseq
        %v3939 = vshrl.u32 %v3938, 7
        %v3940 = vsub.s32 %v3937, %v3939
        %v3941 = vrot.slane %v3925, %v3940
        %v3943 = vunpack.c.l.s4 1966171168
        %v3944 = vunpack.c.0.s8 %v3943
        %v3945 = vlaneseq
        %v3946 = vshrl.u32 %v3945, 7
        %v3947 = vsub.s32 %v3944, %v3946
        %v3948 = vrot.slane %v3926, %v3947
        %v3950 = vunpack.c.l.s4 1966171168
        %v3951 = vunpack.c.0.s8 %v3950
        %v3952 = vlaneseq
        %v3953 = vshrl.u32 %v3952, 7
        %v3954 = vsub.s32 %v3951, %v3953
        %v3955 = vrot.slane %v3927, %v3954
        %v3956 = vcombine.high %v3934, %v3934
        %v3957 = vcombine.high %v3941, %v3941
        %v3958 = vcombine.high %v3948, %v3948
        %v3959 = vcombine.high %v3955, %v3955
        %v3961 = vunpack.c.l.s4 1966171168
        %v3962 = vunpack.c.0.s8 %v3961
        %v3963 = vlaneseq
        %v3964 = vshrl.u32 %v3963, 7
        %v3965 = vsub.s32 %v3962, %v3964
        %v3966 = vrot.slane %v3855, %v3965
        %v3968 = vunpack.c.l.s4 1966171168
        %v3969 = vunpack.c.0.s8 %v3968
        %v3970 = vlaneseq
        %v3971 = vshrl.u32 %v3970, 7
        %v3972 = vsub.s32 %v3969, %v3971
        %v3973 = vrot.slane %v3966, %v3972
        %v3974 = vcombine.high %v3901, %v3901
        %v3976 = vunpack.c.l.s4 1966171168
        %v3977 = vunpack.c.0.s8 %v3976
        %v3978 = vlaneseq
        %v3979 = vshrl.u32 %v3978, 7
        %v3980 = vsub.s32 %v3977, %v3979
        %v3981 = vrot.slane %v3901, %v3980
        %v3983 = vunpack.c.l.s4 1966171168
        %v3984 = vunpack.c.0.s8 %v3983
        %v3985 = vlaneseq
        %v3986 = vshrl.u32 %v3985, 7
        %v3987 = vsub.s32 %v3984, %v3986
        %v3988 = vrot.slane %v3974, %v3987
        %v3989 = vcombine.high %v3981, %v3981
        %v3990 = vcombine.high %v3988, %v3988
        %v3992 = vunpack.c.l.s4 1966171168
        %v3993 = vunpack.c.0.s8 %v3992
        %v3994 = vlaneseq
        %v3995 = vshrl.u32 %v3994, 7
        %v3996 = vsub.s32 %v3993, %v3995
        %v3997 = vrot.slane %v3981, %v3996
        %v3999 = vunpack.c.l.s4 1966171168
        %v4000 = vunpack.c.0.s8 %v3999
        %v4001 = vlaneseq
        %v4002 = vshrl.u32 %v4001, 7
        %v4003 = vsub.s32 %v4000, %v4002
        %v4004 = vrot.slane %v3988, %v4003
        %v4006 = vunpack.c.l.s4 1966171168
        %v4007 = vunpack.c.0.s8 %v4006
        %v4008 = vlaneseq
        %v4009 = vshrl.u32 %v4008, 7
        %v4010 = vsub.s32 %v4007, %v4009
        %v4011 = vrot.slane %v3989, %v4010
        %v4013 = vunpack.c.l.s4 1966171168
        %v4014 = vunpack.c.0.s8 %v4013
        %v4015 = vlaneseq
        %v4016 = vshrl.u32 %v4015, 7
        %v4017 = vsub.s32 %v4014, %v4016
        %v4018 = vrot.slane %v3990, %v4017
        %v4019 = vcombine.high %v3997, %v3997
        %v4020 = vcombine.high %v4004, %v4004
        %v4021 = vcombine.high %v4011, %v4011
        %v4022 = vcombine.high %v4018, %v4018
        %v4024 = vunpack.c.l.s4 1966171168
        %v4025 = vunpack.c.0.s8 %v4024
        %v4026 = vlaneseq
        %v4027 = vshrl.u32 %v4026, 7
        %v4028 = vsub.s32 %v4025, %v4027
        %v4029 = vrot.slane %v3904, %v4028
        %v4031 = vunpack.c.l.s4 1966171168
        %v4032 = vunpack.c.0.s8 %v4031
        %v4033 = vlaneseq
        %v4034 = vshrl.u32 %v4033, 7
        %v4035 = vsub.s32 %v4032, %v4034
        %v4036 = vrot.slane %v4029, %v4035
        %v4037 = vcombine.low %v3934, %v3948
        %v4038 = vcombine.low %v3956, %v3958
        %v4039 = vcombine.low %v3941, %v3955
        %v4040 = vcombine.low %v3957, %v3959
        %v4042 = vunpack.c.l.s4 1966171168
        %v4043 = vunpack.c.0.s8 %v4042
        %v4044 = vlaneseq
        %v4045 = vshrl.u32 %v4044, 7
        %v4046 = vsub.s32 %v4043, %v4045
        %v4047 = vrot.slane %v4037, %v4046
        %v4049 = vunpack.c.l.s4 1966171168
        %v4050 = vunpack.c.0.s8 %v4049
        %v4051 = vlaneseq
        %v4052 = vshrl.u32 %v4051, 7
        %v4053 = vsub.s32 %v4050, %v4052
        %v4054 = vrot.slane %v4038, %v4053
        %v4056 = vunpack.c.l.s4 1966171168
        %v4057 = vunpack.c.0.s8 %v4056
        %v4058 = vlaneseq
        %v4059 = vshrl.u32 %v4058, 7
        %v4060 = vsub.s32 %v4057, %v4059
        %v4061 = vrot.slane %v4039, %v4060
        %v4063 = vunpack.c.l.s4 1966171168
        %v4064 = vunpack.c.0.s8 %v4063
        %v4065 = vlaneseq
        %v4066 = vshrl.u32 %v4065, 7
        %v4067 = vsub.s32 %v4064, %v4066
        %v4068 = vrot.slane %v4040, %v4067
        %v4069 = vcombine.low %v4047, %v4054
        %v4070 = vcombine.low %v4061, %v4068
        %v4072 = vunpack.c.l.s4 1966171168
        %v4073 = vunpack.c.0.s8 %v4072
        %v4074 = vlaneseq
        %v4075 = vshrl.u32 %v4074, 7
        %v4076 = vsub.s32 %v4073, %v4075
        %v4077 = vrot.slane %v4069, %v4076
        %v4079 = vunpack.c.l.s4 1966171168
        %v4080 = vunpack.c.0.s8 %v4079
        %v4081 = vlaneseq
        %v4082 = vshrl.u32 %v4081, 7
        %v4083 = vsub.s32 %v4080, %v4082
        %v4084 = vrot.slane %v4070, %v4083
        %v4085 = vcombine.low %v4077, %v4084
        %v4086 = vcombine.low %v3973, %v3997
        %v4087 = vcombine.low %v4011, %v4019
        %v4088 = vcombine.low %v4021, %v4004
        %v4089 = vcombine.low %v4018, %v4020
        %v4091 = vunpack.c.l.s4 1966171168
        %v4092 = vunpack.c.0.s8 %v4091
        %v4093 = vlaneseq
        %v4094 = vshrl.u32 %v4093, 7
        %v4095 = vsub.s32 %v4092, %v4094
        %v4096 = vrot.slane %v4086, %v4095
        %v4098 = vunpack.c.l.s4 1966171168
        %v4099 = vunpack.c.0.s8 %v4098
        %v4100 = vlaneseq
        %v4101 = vshrl.u32 %v4100, 7
        %v4102 = vsub.s32 %v4099, %v4101
        %v4103 = vrot.slane %v4087, %v4102
        %v4105 = vunpack.c.l.s4 1966171168
        %v4106 = vunpack.c.0.s8 %v4105
        %v4107 = vlaneseq
        %v4108 = vshrl.u32 %v4107, 7
        %v4109 = vsub.s32 %v4106, %v4108
        %v4110 = vrot.slane %v4088, %v4109
        %v4112 = vunpack.c.l.s4 1966171168
        %v4113 = vunpack.c.0.s8 %v4112
        %v4114 = vlaneseq
        %v4115 = vshrl.u32 %v4114, 7
        %v4116 = vsub.s32 %v4113, %v4115
        %v4117 = vrot.slane %v4089, %v4116
        %v4118 = vcombine.low %v4096, %v4103
        %v4119 = vcombine.low %v4110, %v4117
        %v4121 = vunpack.c.l.s4 1966171168
        %v4122 = vunpack.c.0.s8 %v4121
        %v4123 = vlaneseq
        %v4124 = vshrl.u32 %v4123, 7
        %v4125 = vsub.s32 %v4122, %v4124
        %v4126 = vrot.slane %v4118, %v4125
        %v4128 = vunpack.c.l.s4 1966171168
        %v4129 = vunpack.c.0.s8 %v4128
        %v4130 = vlaneseq
        %v4131 = vshrl.u32 %v4130, 7
        %v4132 = vsub.s32 %v4129, %v4131
        %v4133 = vrot.slane %v4119, %v4132
        %v4134 = vcombine.low %v4126, %v4133
        %v4135 = vcombine.low %v4022, %v4036
        %v4137 = vunpack.c.l.s4 1966171168
        %v4138 = vunpack.c.0.s8 %v4137
        %v4139 = vlaneseq
        %v4140 = vshrl.u32 %v4139, 7
        %v4141 = vsub.s32 %v4138, %v4140
        %v4142 = vrot.slane %v4135, %v4141
        %v4144 = vunpack.c.l.s4 1966171168
        %v4145 = vunpack.c.0.s8 %v4144
        %v4146 = vlaneseq
        %v4147 = vshrl.u32 %v4146, 7
        %v4148 = vsub.s32 %v4145, %v4147
        %v4149 = vrot.slane %v4142, %v4148
        %v4153 = vpack.c.bf16 %v4134, %v4085
        %v4154 = vpack.c.bf16 %v4149, %v4149
        %v4157 = vunpack.c.l.b16 %v4153
        %v4158 = vunpack.c.h.b16 %v4153
        %v4159 = vunpack.c.l.b16 %v4154
        %v4160 = vpack.c.b16 %v4157, %v4157
        %v4161 = vpack.c.b16 %v4158, %v4158
        %v4162 = vpack.c.b16 %v4159, %v4159
        %4163 = vrot.lane.b32.xlu0 %v4160, 24
        %v4164 = vpop.permute.xlu0 %4163
        %4165 = vrot.lane.b32.xlu0 %v4161, 24
        %v4166 = vpop.permute.xlu0 %4165
        %4167 = vrot.lane.b32.xlu0 %v4162, 24
        %v4168 = vpop.permute.xlu0 %4167
        %vm4172 = vcmask 257216
        %4173 = vst.msk [vmem:[#allocation3] sm:$0xf] %vm4172, %v4164
        %4174 = vst.msk [vmem:[#allocation3 + $0x4] sm:$0xf] %vm4172, %v4166
        %vm4175 = vcmask 254144
        %4176 = vst.msk [vmem:[#allocation3 + $0x8] sm:$0x1] %vm4175, %v4168
        %v4177 = vld [vmem:[#allocation3] sm:$0xf]
        %v4178 = vld [vmem:[#allocation3 + $0x4] sm:$0xf]
        %v4179 = vld [vmem:[#allocation3 + $0x8] sm:$0x1]
        %v4180 = vld [vmem:[%s701] sm:$0xf]
        %v4181 = vld [vmem:[%s701 + $0x4] sm:$0xf]
        %v4182 = vld [vmem:[%s701 + $0x8] sm:$0xf]
        %v4183 = vld [vmem:[%s701 + $0xc] sm:$0xf]
        %v4184 = vlaneseq
        %v4185 = vshrl.u32 %v4184, 7
        %v4186 = vsub.s32 1, %v4185
        %v4187 = vrot.slane %v1778, %v4186
        %v4191 = vunpack.c.l.b16 %v4177
        %v4192 = vunpack.c.l.b16 %v4178
        %v4193 = vunpack.c.l.b16 %v4179
        %v4194 = vpack.c.b16 %v4192, %v4191
        %v4195 = vpack.c.b16 %v4193, %v4193
        %v4200 = vunpack.c.l.b16 %v4180
        %v4201 = vunpack.c.l.b16 %v4181
        %v4202 = vunpack.c.l.b16 %v4182
        %v4203 = vunpack.c.l.b16 %v4183
        %v4204 = vpack.c.b16 %v4201, %v4200
        %v4205 = vpack.c.b16 %v4203, %v4202
        %v4209 = vsel %vm1804, %v4194, 0
        %v4212 = vsel %vm1804, %v4195, 0
        %4214 = vmatprep.subr.bf16.mxu0 0
        %4215 = vmatpush1.bf16.msra.mxu0 %v4204
        %4216 = vmatprep.subr.bf16.mxu0 0
        %4217 = vmatpush1.bf16.msra.mxu0 %v4205
        %4218 = vmatprep.subr.bf16.mxu0 0
        %4219 = vmatpush1.bf16.msra.mxu0 0
        %4220 = vmatprep.subr.bf16.mxu0 0
        %4221 = vmatpush1.bf16.msra.mxu0 0
        %4222 = vmatprep.subr.bf16.mxu0 0
        %4223 = vmatpush1.bf16.msra.mxu0 0
        %4224 = vmatprep.subr.bf16.mxu0 0
        %4225 = vmatpush1.bf16.msra.mxu0 0
        %4226 = vmatprep.subr.bf16.mxu0 0
        %4227 = vmatpush1.bf16.msra.mxu0 0
        %4228 = vmatprep.subr.bf16.mxu0 0
        %4229 = vmatpush1.bf16.msra.mxu0 0
        %4230 = vmatprep.subr.bf16.mxu0 0
        %4231 = vmatpush1.bf16.msra.mxu0 0
        %4232 = vmatprep.subr.bf16.mxu0 0
        %4233 = vmatpush1.bf16.msra.mxu0 0
        %4234 = vmatprep.subr.bf16.mxu0 0
        %4235 = vmatpush1.bf16.msra.mxu0 0
        %4236 = vmatprep.subr.bf16.mxu0 0
        %4237 = vmatpush1.bf16.msra.mxu0 0
        %4238 = vmatprep.subr.bf16.mxu0 0
        %4239 = vmatpush1.bf16.msra.mxu0 0
        %4240 = vmatprep.subr.bf16.mxu0 0
        %4241 = vmatpush1.bf16.msra.mxu0 0
        %4242 = vmatprep.subr.bf16.mxu0 0
        %4243 = vmatpush1.bf16.msra.mxu0 0
        %4244 = vmatprep.subr.bf16.mxu0 0
        %4245 = vmatpush1.bf16.msra.mxu0 0
        %4246 = vmatprep.mubr.bf16.mxu0 0
        %4247 = vmatmul.mubr.bf16.gmra.mrb[0].mxu0 %v4209
        %v4248 = vpop.f32.mrb[0].mxu0
        %v4249 = vadd.f32 %v4187, %v4248
        %v4250 = vpop.f32.mrb[0].mxu0
        %v4251 = vpop.f32.mrb[0].mxu0
        %v4252 = vadd.f32 %v4187, %v4251
        %v4253 = vpop.f32.mrb[0].mxu0
        %4254 = vmatprep.mubr.bf16.mxu0 0
        %4255 = vmatmul.mubr.bf16.gmra.mrb[0].mxu0 %v4212
        %v4256 = vpop.f32.mrb[0].mxu0
        %v4257 = vadd.f32 %v4187, %v4256
        %v4258 = vpop.f32.mrb[0].mxu0
        %v4259 = vpop.f32.mrb[0].mxu0
        %v4260 = vpop.f32.mrb[0].mxu0
        %4261 = vdwg.mxu0
        %v4262 = vadd.f32 %v1779, %v4249
        %v4263 = vadd.f32 %v1780, %v4252
        %v4264 = vadd.f32 %v1781, %v4257
        %v4265 = vsel %vm1804, %v4262, 0.0
        %4266 = vadd.xlane.f32.xlu0 %v4265
        %v4267 = vpop.xlane.xlu0 %4266
        %v4268 = vsel %vm1804, %v4263, 0.0
        %4269 = vadd.xlane.f32.xlu0 %v4268
        %v4270 = vpop.xlane.xlu0 %4269
        %vm4271 = vcmask 254976
        %v4272 = vsel %vm4271, %v4264, 0.0
        %4273 = vadd.xlane.f32.xlu0 %v4272
        %v4274 = vpop.xlane.xlu0 %4273
        %v4275 = vrcp.pop 32.0
        %v4276 = vmul.f32 %v4267, %v4275
        %v4277 = vmul.f32 %v4270, %v4275
        %v4278 = vmul.f32 %v4274, %v4275
        %v4279 = vsub.f32 %v4262, %v4276
        %v4280 = vsub.f32 %v4263, %v4277
        %v4281 = vsub.f32 %v4264, %v4278
        %v4282 = vmul.f32 %v4279, %v4279
        %v4283 = vmul.f32 %v4280, %v4280
        %v4284 = vmul.f32 %v4281, %v4281
        %v4285 = vsel %vm1804, %v4282, 0.0
        %4286 = vadd.xlane.f32.xlu0 %v4285
        %v4287 = vpop.xlane.xlu0 %4286
        %v4288 = vsel %vm1804, %v4283, 0.0
        %4289 = vadd.xlane.f32.xlu0 %v4288
        %v4290 = vpop.xlane.xlu0 %4289
        %v4291 = vsel %vm4271, %v4284, 0.0
        %4292 = vadd.xlane.f32.xlu0 %v4291
        %v4293 = vpop.xlane.xlu0 %4292
        %v4294 = vmul.f32 %v4287, %v4275
        %v4295 = vmul.f32 %v4290, %v4275
        %v4296 = vmul.f32 %v4293, %v4275
        %v4297 = vadd.f32 %v4294, 1e-12
        %v4298 = vadd.f32 %v4295, 1e-12
        %v4299 = vadd.f32 %v4296, 1e-12
        %v4300 = vrsqrt.pop %v4297
        %v4301 = vrsqrt.pop %v4298
        %v4302 = vrsqrt.pop %v4299
        %v4303 = vmul.f32 %v4279, %v4300
        %v4304 = vmul.f32 %v4280, %v4301
        %v4305 = vmul.f32 %v4281, %v4302
        %v4306 = vlaneseq
        %v4307 = vshrl.u32 %v4306, 7
        %v4308 = vsub.s32 2, %v4307
        %v4309 = vrot.slane %v1778, %v4308
        %v4310 = vmul.f32 %v4303, %v4309
        %v4311 = vmul.f32 %v4304, %v4309
        %v4312 = vmul.f32 %v4305, %v4309
        %v4313 = vlaneseq
        %v4314 = vshrl.u32 %v4313, 7
        %v4315 = vsub.s32 3, %v4314
        %v4316 = vrot.slane %v1778, %v4315
        %v4317 = vadd.f32 %v4310, %v4316
        %v4318 = vadd.f32 %v4311, %v4316
        %v4319 = vadd.f32 %v4312, %v4316
        %v4320 = vld [vmem:[%s706] sm:$0xf]
        %v4321 = vld [vmem:[%s706 + $0x4] sm:$0xf]
        %v4322 = vld [vmem:[%s706 + $0x8] sm:$0xf]
        %v4323 = vld [vmem:[%s706 + $0xc] sm:$0xf]
        %v4324 = vpack.c.bf16 %v4318, %v4317
        %v4325 = vpack.c.bf16 %v4319, %v4319
        %v4326 = vlaneseq
        %v4327 = vshrl.u32 %v4326, 7
        %v4328 = vsub.s32 4, %v4327
        %v4329 = vrot.slane %v1778, %v4328
        %v4334 = vunpack.c.l.b16 %v4320
        %v4335 = vunpack.c.l.b16 %v4321
        %v4336 = vunpack.c.l.b16 %v4322
        %v4337 = vunpack.c.l.b16 %v4323
        %v4338 = vpack.c.b16 %v4335, %v4334
        %v4339 = vpack.c.b16 %v4337, %v4336
        %v4343 = vsel %vm1804, %v4324, 0
        %v4346 = vsel %vm1804, %v4325, 0
        %4348 = vmatprep.subr.bf16.mxu0 0
        %4349 = vmatpush1.bf16.msra.mxu0 %v4338
        %4350 = vmatprep.subr.bf16.mxu0 0
        %4351 = vmatpush1.bf16.msra.mxu0 %v4339
        %4352 = vmatprep.subr.bf16.mxu0 0
        %4353 = vmatpush1.bf16.msra.mxu0 0
        %4354 = vmatprep.subr.bf16.mxu0 0
        %4355 = vmatpush1.bf16.msra.mxu0 0
        %4356 = vmatprep.subr.bf16.mxu0 0
        %4357 = vmatpush1.bf16.msra.mxu0 0
        %4358 = vmatprep.subr.bf16.mxu0 0
        %4359 = vmatpush1.bf16.msra.mxu0 0
        %4360 = vmatprep.subr.bf16.mxu0 0
        %4361 = vmatpush1.bf16.msra.mxu0 0
        %4362 = vmatprep.subr.bf16.mxu0 0
        %4363 = vmatpush1.bf16.msra.mxu0 0
        %4364 = vmatprep.subr.bf16.mxu0 0
        %4365 = vmatpush1.bf16.msra.mxu0 0
        %4366 = vmatprep.subr.bf16.mxu0 0
        %4367 = vmatpush1.bf16.msra.mxu0 0
        %4368 = vmatprep.subr.bf16.mxu0 0
        %4369 = vmatpush1.bf16.msra.mxu0 0
        %4370 = vmatprep.subr.bf16.mxu0 0
        %4371 = vmatpush1.bf16.msra.mxu0 0
        %4372 = vmatprep.subr.bf16.mxu0 0
        %4373 = vmatpush1.bf16.msra.mxu0 0
        %4374 = vmatprep.subr.bf16.mxu0 0
        %4375 = vmatpush1.bf16.msra.mxu0 0
        %4376 = vmatprep.subr.bf16.mxu0 0
        %4377 = vmatpush1.bf16.msra.mxu0 0
        %4378 = vmatprep.subr.bf16.mxu0 0
        %4379 = vmatpush1.bf16.msra.mxu0 0
        %4380 = vmatprep.mubr.bf16.mxu0 0
        %4381 = vmatmul.mubr.bf16.gmra.mrb[0].mxu0 %v4343
        %v4382 = vpop.f32.mrb[0].mxu0
        %v4383 = vadd.f32 %v4329, %v4382
        %v4384 = vpop.f32.mrb[0].mxu0
        %v4385 = vpop.f32.mrb[0].mxu0
        %v4386 = vadd.f32 %v4329, %v4385
        %v4387 = vpop.f32.mrb[0].mxu0
        %4388 = vmatprep.mubr.bf16.mxu0 0
        %4389 = vmatmul.mubr.bf16.gmra.mrb[0].mxu0 %v4346
        %v4390 = vpop.f32.mrb[0].mxu0
        %v4391 = vadd.f32 %v4329, %v4390
        %v4392 = vpop.f32.mrb[0].mxu0
        %v4393 = vpop.f32.mrb[0].mxu0
        %v4394 = vpop.f32.mrb[0].mxu0
        %4395 = vdwg.mxu0
        %v4396 = vpack.c.bf16 %v4386, %v4383
        %v4397 = vpack.c.bf16 %v4391, %v4391
        %v4398 = vmul.bf16 %v4396, %v4396
        %v4399 = vmul.bf16 %v4397, %v4397
        %v4400 = vmul.bf16 %v4396, %v4398
        %v4401 = vmul.bf16 %v4397, %v4399
        %v4402 = vmul.bf16 %v4400, 1027030327
        %v4403 = vmul.bf16 %v4401, 1027030327
        %v4404 = vadd.bf16 %v4396, %v4402
        %v4405 = vadd.bf16 %v4397, %v4403
        %v4406 = vmul.bf16 %v4404, 1061961548
        %v4407 = vmul.bf16 %v4405, 1061961548
        %v4408 = vtanh.bf16.pop %v4406
        %v4409 = vtanh.bf16.pop %v4407
        %v4410 = vadd.bf16 %v4408, 1065369472
        %v4411 = vadd.bf16 %v4409, 1065369472
        %v4412 = vmul.bf16 %v4410, 1056980736
        %v4413 = vmul.bf16 %v4411, 1056980736
        %v4414 = vmul.bf16 %v4396, %v4412
        %v4415 = vmul.bf16 %v4397, %v4413
        %v4416 = vld [vmem:[%s711] sm:$0xf]
        %v4417 = vld [vmem:[%s711 + $0x4] sm:$0xf]
        %v4418 = vld [vmem:[%s711 + $0x8] sm:$0xf]
        %v4419 = vld [vmem:[%s711 + $0xc] sm:$0xf]
        %v4420 = vld [vmem:[%s711 + $0x10] sm:$0xf]
        %v4421 = vld [vmem:[%s711 + $0x14] sm:$0xf]
        %v4422 = vld [vmem:[%s711 + $0x18] sm:$0xf]
        %v4423 = vld [vmem:[%s711 + $0x1c] sm:$0xf]
        %v4424 = vlaneseq
        %v4425 = vshrl.u32 %v4424, 7
        %v4426 = vsub.s32 5, %v4425
        %v4427 = vrot.slane %v1778, %v4426
        %v4436 = vunpack.c.l.b16 %v4416
        %v4437 = vunpack.c.l.b16 %v4417
        %v4438 = vunpack.c.l.b16 %v4418
        %v4439 = vunpack.c.l.b16 %v4419
        %v4440 = vunpack.c.l.b16 %v4420
        %v4441 = vunpack.c.l.b16 %v4421
        %v4442 = vunpack.c.l.b16 %v4422
        %v4443 = vunpack.c.l.b16 %v4423
        %v4444 = vpack.c.b16 %v4437, %v4436
        %v4445 = vpack.c.b16 %v4439, %v4438
        %v4446 = vpack.c.b16 %v4441, %v4440
        %v4447 = vpack.c.b16 %v4443, %v4442
        %vm4452 = vcmask 523264
        %v4454 = vsel %vm4452, %v4414, 0
        %v4457 = vsel %vm4452, %v4415, 0
        %4459 = vmatprep.subr.bf16.mxu0 0
        %4460 = vmatpush1.bf16.msra.mxu0 %v4444
        %4461 = vmatprep.subr.bf16.mxu0 0
        %4462 = vmatpush1.bf16.msra.mxu0 %v4445
        %4463 = vmatprep.subr.bf16.mxu0 0
        %4464 = vmatpush1.bf16.msra.mxu0 %v4446
        %4465 = vmatprep.subr.bf16.mxu0 0
        %4466 = vmatpush1.bf16.msra.mxu0 %v4447
        %4467 = vmatprep.subr.bf16.mxu0 0
        %4468 = vmatpush1.bf16.msra.mxu0 0
        %4469 = vmatprep.subr.bf16.mxu0 0
        %4470 = vmatpush1.bf16.msra.mxu0 0
        %4471 = vmatprep.subr.bf16.mxu0 0
        %4472 = vmatpush1.bf16.msra.mxu0 0
        %4473 = vmatprep.subr.bf16.mxu0 0
        %4474 = vmatpush1.bf16.msra.mxu0 0
        %4475 = vmatprep.subr.bf16.mxu0 0
        %4476 = vmatpush1.bf16.msra.mxu0 0
        %4477 = vmatprep.subr.bf16.mxu0 0
        %4478 = vmatpush1.bf16.msra.mxu0 0
        %4479 = vmatprep.subr.bf16.mxu0 0
        %4480 = vmatpush1.bf16.msra.mxu0 0
        %4481 = vmatprep.subr.bf16.mxu0 0
        %4482 = vmatpush1.bf16.msra.mxu0 0
        %4483 = vmatprep.subr.bf16.mxu0 0
        %4484 = vmatpush1.bf16.msra.mxu0 0
        %4485 = vmatprep.subr.bf16.mxu0 0
        %4486 = vmatpush1.bf16.msra.mxu0 0
        %4487 = vmatprep.subr.bf16.mxu0 0
        %4488 = vmatpush1.bf16.msra.mxu0 0
        %4489 = vmatprep.subr.bf16.mxu0 0
        %4490 = vmatpush1.bf16.msra.mxu0 0
        %4491 = vmatprep.mubr.bf16.mxu0 0
        %4492 = vmatmul.mubr.bf16.gmra.mrb[0].mxu0 %v4454
        %v4493 = vpop.f32.mrb[0].mxu0
        %v4494 = vadd.f32 %v4427, %v4493
        %v4495 = vpop.f32.mrb[0].mxu0
        %v4496 = vpop.f32.mrb[0].mxu0
        %v4497 = vadd.f32 %v4427, %v4496
        %v4498 = vpop.f32.mrb[0].mxu0
        %4499 = vmatprep.mubr.bf16.mxu0 0
        %4500 = vmatmul.mubr.bf16.gmra.mrb[0].mxu0 %v4457
        %v4501 = vpop.f32.mrb[0].mxu0
        %v4502 = vadd.f32 %v4427, %v4501
        %v4503 = vpop.f32.mrb[0].mxu0
        %v4504 = vpop.f32.mrb[0].mxu0
        %v4505 = vpop.f32.mrb[0].mxu0
        %4506 = vdwg.mxu0
        %v4507 = vadd.f32 %v4317, %v4494
        %v4508 = vadd.f32 %v4318, %v4497
        %v4509 = vadd.f32 %v4319, %v4502
        %v4510 = vsel %vm1804, %v4507, 0.0
        %4511 = vadd.xlane.f32.xlu0 %v4510
        %v4512 = vpop.xlane.xlu0 %4511
        %v4513 = vsel %vm1804, %v4508, 0.0
        %4514 = vadd.xlane.f32.xlu0 %v4513
        %v4515 = vpop.xlane.xlu0 %4514
        %v4516 = vsel %vm4271, %v4509, 0.0
        %4517 = vadd.xlane.f32.xlu0 %v4516
        %v4518 = vpop.xlane.xlu0 %4517
        %v4519 = vmul.f32 %v4512, %v4275
        %v4520 = vmul.f32 %v4515, %v4275
        %v4521 = vmul.f32 %v4518, %v4275
        %v4522 = vsub.f32 %v4507, %v4519
        %v4523 = vsub.f32 %v4508, %v4520
        %v4524 = vsub.f32 %v4509, %v4521
        %v4525 = vmul.f32 %v4522, %v4522
        %v4526 = vmul.f32 %v4523, %v4523
        %v4527 = vmul.f32 %v4524, %v4524
        %v4528 = vsel %vm1804, %v4525, 0.0
        %4529 = vadd.xlane.f32.xlu0 %v4528
        %v4530 = vpop.xlane.xlu0 %4529
        %v4531 = vsel %vm1804, %v4526, 0.0
        %4532 = vadd.xlane.f32.xlu0 %v4531
        %v4533 = vpop.xlane.xlu0 %4532
        %v4534 = vsel %vm4271, %v4527, 0.0
        %4535 = vadd.xlane.f32.xlu0 %v4534
        %v4536 = vpop.xlane.xlu0 %4535
        %v4537 = vmul.f32 %v4530, %v4275
        %v4538 = vmul.f32 %v4533, %v4275
        %v4539 = vmul.f32 %v4536, %v4275
        %v4540 = vadd.f32 %v4537, 1e-12
        %v4541 = vadd.f32 %v4538, 1e-12
        %v4542 = vadd.f32 %v4539, 1e-12
        %v4543 = vrsqrt.pop %v4540
        %v4544 = vrsqrt.pop %v4541
        %v4545 = vrsqrt.pop %v4542
        %v4546 = vmul.f32 %v4522, %v4543
        %v4547 = vmul.f32 %v4523, %v4544
        %v4548 = vmul.f32 %v4524, %v4545
        %v4549 = vlaneseq
        %v4550 = vshrl.u32 %v4549, 7
        %v4551 = vsub.s32 6, %v4550
        %v4552 = vrot.slane %v1778, %v4551
        %v4553 = vmul.f32 %v4546, %v4552
        %v4554 = vmul.f32 %v4547, %v4552
        %v4555 = vmul.f32 %v4548, %v4552
        %v4556 = vlaneseq
        %v4557 = vshrl.u32 %v4556, 7
        %v4558 = vsub.s32 7, %v4557
        %v4559 = vrot.slane %v1778, %v4558
        %v4560 = vadd.f32 %v4553, %v4559
        %v4561 = vadd.f32 %v4554, %v4559
        %v4562 = vadd.f32 %v4555, %v4559
        %4563 = vst.msk [vmem:[#allocation2] sm:$0xff] %vm1804, %v4560
        %4564 = vst.msk [vmem:[#allocation2 + $0x8] sm:$0xff] %vm1804, %v4561
        %4565 = vst.msk [vmem:[#allocation2 + $0x10] sm:$0x3] %vm4271, %v4562
        %p4566 = scmp.eq.s32.totalorder %s33, 1
        // Predicated region
        $region125: #{deepdraft_forward.2} parent=87 // pred_check
          %p4567 = pneg %p4566
        $region126: #{deepdraft_forward.2} parent=87 // pred_check_branch
          %4569 = sbr.rel (%p4567) target = $region128
        $region127: #{deepdraft_forward.2} parent=87 // pred_region
          %v4573 = vunpack.c.l.s4 1966171168
          %v4574 = vunpack.c.0.s8 %v4573
          %v4575 = vlaneseq
          %v4576 = vshrl.u32 %v4575, 7
          %v4577 = vsub.s32 %v4574, %v4576
          %v4578 = vrot.slane %v4560, %v4577
          %v4580 = vunpack.c.l.s4 1966171168
          %v4581 = vunpack.c.0.s8 %v4580
          %v4582 = vlaneseq
          %v4583 = vshrl.u32 %v4582, 7
          %v4584 = vsub.s32 %v4581, %v4583
          %v4585 = vrot.slane %v4578, %v4584
          %v4587 = vunpack.c.l.s4 1966171168
          %v4588 = vunpack.c.0.s8 %v4587
          %v4589 = vlaneseq
          %v4590 = vshrl.u32 %v4589, 7
          %v4591 = vsub.s32 %v4588, %v4590
          %v4592 = vrot.slane %v4561, %v4591
          %v4593 = vcombine.high %v4592, %v4592
          %v4595 = vunpack.c.l.s4 1966171168
          %v4596 = vunpack.c.0.s8 %v4595
          %v4597 = vlaneseq
          %v4598 = vshrl.u32 %v4597, 7
          %v4599 = vsub.s32 %v4596, %v4598
          %v4600 = vrot.slane %v4593, %v4599
          %v4601 = vcombine.low %v4585, %v4600
          %v4603 = vunpack.c.l.s4 1966171168
          %v4604 = vunpack.c.0.s8 %v4603
          %v4605 = vlaneseq
          %v4606 = vshrl.u32 %v4605, 7
          %v4607 = vsub.s32 %v4604, %v4606
          %v4608 = vrot.slane %v4601, %v4607
          %v4610 = vunpack.c.l.s4 1966171168
          %v4611 = vunpack.c.0.s8 %v4610
          %v4612 = vlaneseq
          %v4613 = vshrl.u32 %v4612, 7
          %v4614 = vsub.s32 %v4611, %v4613
          %v4615 = vrot.slane %v4608, %v4614
          %4617 = vst.msk [vmem:[%s17] sm:$0x3] %vm4271, %v4615
        $region128: #{deepdraft_forward.2} parent=87 // pred_fallthru
          _
        // Predicated region
        $region129: #{deepdraft_forward.2} parent=87 // pred_check
          %p4618 = pneg %p428
        $region130: #{deepdraft_forward.2} parent=87 // pred_check_branch
          %4620 = sbr.rel (%p4618) target = $region132
        $region131: #{deepdraft_forward.2} parent=87 // pred_region
          _
        $region132: #{deepdraft_forward.2} parent=87 // pred_fallthru
          _
        // Predicated region
        $region133: #{deepdraft_forward.2} parent=87 // pred_check
          %p4621 = pneg %p428
        $region134: #{deepdraft_forward.2} parent=87 // pred_check_branch
          %4623 = sbr.rel (%p4621) target = $region136
        $region135: #{deepdraft_forward.2} parent=87 // pred_region
          _
        $region136: #{deepdraft_forward.2} parent=87 // pred_fallthru
          _
      $region88: #{deepdraft_forward.2} parent=5 // pred_fallthru
        _
      %p4624 = scmp.le.s32.totalorder 2, %s28
      // Predicated region
      $region137: #{deepdraft_forward.2} parent=5 // pred_check
        %p4625 = pneg %p4624
      $region138: #{deepdraft_forward.2} parent=5 // pred_check_branch
        %4627 = sbr.rel (%p4625) target = $region140
      $region139: #{deepdraft_forward.2} parent=5 // pred_region
        %s4628 = ssub.s32 %s28, 2
      $region140: #{deepdraft_forward.2} parent=5 // pred_fallthru
        _
    $region6: #{deepdraft_forward.2} parent=1 // loop_footer
      %s32 = sadd.s32 1, %s28
    $region7: #{deepdraft_forward.2} parent=1 // loop_footer_branch
      %27 = sbr.rel target = $region3
    $region8: #{deepdraft_forward.2} parent=1 // loop_exit
      _
    %4629 = vsyncpa [#allocation5], 1
    %s4630 = scalar_lea.sflag [#allocation5], 1
    %4631 = vsyncpa %s4630, 1
    %4632 = vsyncpa [#allocation7], 1
    %4633 = vsyncpa [#allocation10], 1
    %4634 = vsyncpa [#allocation13], 1
    %4635 = vsyncpa [#allocation16], 1

</llo_original>
